<compile_context>
chip_gen: v6e
topology: v6e:2x2x1
jax: 0.10.0
libtpu: 0.0.40
codegen_flags: <defaults>
</compile_context>

<pallas_src>
import jax
import jax.numpy as jnp
from jax.experimental import pallas as pl
from jax.experimental.pallas import tpu as pltpu

IMG_DIM = 28 * 28        # 784, fixed by the .view(B, 1, 28, 28)


def generator_kernel(z_ref,
                     w1_ref, b1_ref,
                     w2_ref, b2_ref,
                     w3_ref, b3_ref,
                     w4_ref, b4_ref,
                     o_ref):
    """Fused 4-layer MLP: (Linear -> LeakyReLU) x3 (BN folded) -> Linear -> Tanh."""

    def lin_lrelu(x_bf16, w_ref, b_ref):
        # bf16 x bf16 on the MXU with f32 accumulation; bias + LeakyReLU on the
        # VPU in f32 (PyTorch default negative_slope = 0.01).
        h = jnp.dot(x_bf16, w_ref[...],
                    preferred_element_type=jnp.float32) + b_ref[...]
        h = jnp.where(h > 0, h, 0.01 * h)
        # BatchNorm1d (eval) already folded into the next Linear; Dropout(0.5)
        # is identity in eval.  Return bf16 so the inter-layer activation
        # footprint is halved and the next dot needs no extra cast pass.
        return h.astype(jnp.bfloat16)

    x = z_ref[...].astype(jnp.bfloat16)
    x = lin_lrelu(x, w1_ref, b1_ref)
    x = lin_lrelu(x, w2_ref, b2_ref)
    x = lin_lrelu(x, w3_ref, b3_ref)
    h = jnp.dot(x, w4_ref[...], preferred_element_type=jnp.float32) + b4_ref[...]
    # tanh kept in f32 (v5e has no bf16 EUP); cast only at the store.
    o_ref[...] = jnp.tanh(h).astype(o_ref.dtype)


def make_generator_params(hidden_dim, img_dim, key):
    """PyTorch-like init, then fold eval-mode BN into the next Linear and cast
    weights to bf16.  Returns (kernel_params, raw_f32_params, bn_params)."""
    dims = [hidden_dim, 256, 512, 1024, img_dim]
    eps = 1e-5
    keys = jax.random.split(key, 8)

    raw = {}
    for i in range(4):
        fan_in, fan_out = dims[i], dims[i + 1]
        bound = 1.0 / jnp.sqrt(jnp.float32(fan_in))
        # stored as (in, out) == W.T relative to PyTorch's (out, in)
        raw[f"w{i+1}"] = jax.random.uniform(
            keys[2 * i], (fan_in, fan_out), jnp.float32, -bound, bound)
        raw[f"b{i+1}"] = jax.random.uniform(
            keys[2 * i + 1], (1, fan_out), jnp.float32, -bound, bound)

    # Fresh BatchNorm1d in eval mode: gamma=1, beta=0, running_mean=0, var=1.
    bn = {}
    for i, n in enumerate([256, 512, 1024], start=1):
        bn[f"s{i}"] = jnp.full((1, n), 1.0 / jnp.sqrt(1.0 + eps), jnp.float32)
        bn[f"t{i}"] = jnp.zeros((1, n), jnp.float32)

    # Module order is Linear -> LeakyReLU -> BN -> Dropout, so BN_i folds into
    # Linear_{i+1}:  (x*s + t) @ W + b == x @ (s^T * W) + (t @ W + b)
    folded = {"w1": raw["w1"], "b1": raw["b1"]}
    for i in range(1, 4):
        W, b = raw[f"w{i+1}"], raw[f"b{i+1}"]
        s, t = bn[f"s{i}"], bn[f"t{i}"]
        folded[f"w{i+1}"] = W * s.reshape(-1, 1)
        folded[f"b{i+1}"] = b + t @ W

    params = {
        "w1": folded["w1"].astype(jnp.bfloat16), "b1": folded["b1"],
        "w2": folded["w2"].astype(jnp.bfloat16), "b2": folded["b2"],
        "w3": folded["w3"].astype(jnp.bfloat16), "b3": folded["b3"],
        "w4": folded["w4"].astype(jnp.bfloat16), "b4": folded["b4"],
    }
    return params, raw, bn


def _pick_batch_tile(B):
    # Largest tile that (a) divides B and (b) leaves >=2 grid blocks, so both
    # v7x TensorCores get work under dimension_semantics=("parallel",).
    # Capped at 512 rows: big enough to amortize the ~0.35 us per-grid-step
    # pipeline overhead on v5e/v6e, small enough (~12-15 MiB total VMEM) to be
    # comfortable under v7x's 64 MiB physical VMEM.
    for tb in (512, 256, 128, 64, 32, 16, 8):
        if B % tb == 0 and B // tb >= 2:
            return tb
    return B  # small/odd batches: single block == full array (legal BlockSpec)


def generator_forward(z, params, img_dim=IMG_DIM, out_dtype=jnp.float32):
    B, hidden = z.shape
    tb = _pick_batch_tile(B)
    grid = (B // tb,)

    # Constant-index weight/bias blocks: same block every grid step, so they
    # stay VMEM-resident.  Single-buffer them — double buffering a constant
    # block only burns VMEM.
    def const_spec(shape):
        return pl.BlockSpec(shape, lambda i: (0, 0),
                            pipeline_mode=pl.Buffered(1))

    in_specs = [pl.BlockSpec((tb, hidden), lambda i: (i, 0))] + [
        const_spec(params[k].shape)
        for k in ("w1", "b1", "w2", "b2", "w3", "b3", "w4", "b4")
    ]
    # Output block last dim == full array dim (784): legal, and writing the
    # true width directly removes the wrapper-side slice copy through HBM.
    out_specs = pl.BlockSpec((tb, img_dim), lambda i: (i, 0))

    flat = pl.pallas_call(
        generator_kernel,
        out_shape=jax.ShapeDtypeStruct((B, img_dim), out_dtype),
        grid_spec=pltpu.PrefetchScalarGridSpec(
            num_scalar_prefetch=0,
            grid=grid,
            in_specs=in_specs,
            out_specs=out_specs,
        ),
        compiler_params=pltpu.CompilerParams(
            dimension_semantics=("parallel",),
            vmem_limit_bytes=32 << 20,   # ~3 MiB bf16 weights + 512-row tiles
        ),
    )(z,
      params["w1"], params["b1"],
      params["w2"], params["b2"],
      params["w3"], params["b3"],
      params["w4"], params["b4"])

    # img.view(B, 1, 28, 28): free metadata reshape of the contiguous (B, 784).
    return flat.reshape(B, 1, 28, 28)


def generator_ref_folded(z, params, img_dim=IMG_DIM):
    """Pure-JAX reference using the same folded bf16 parameters as the kernel."""
    x = z.astype(jnp.bfloat16)
    for i in range(1, 4):
        h = jnp.dot(x, params[f"w{i}"],
                    preferred_element_type=jnp.float32) + params[f"b{i}"]
        x = jnp.where(h > 0, h, 0.01 * h).astype(jnp.bfloat16)
    h = jnp.dot(x, params["w4"],
                preferred_element_type=jnp.float32) + params["b4"]
    return jnp.tanh(h).reshape(z.shape[0], 1, 28, 28)


def generator_ref_module_f32(z, raw, bn):
    """Original PyTorch module semantics (eval mode), unfolded, pure f32."""
    x = z
    for i in range(1, 4):
        h = x @ raw[f"w{i}"] + raw[f"b{i}"]
        h = jnp.where(h > 0, h, 0.01 * h)          # LeakyReLU(0.01)
        x = h * bn[f"s{i}"] + bn[f"t{i}"]          # BN eval; Dropout eval = identity
    h = x @ raw["w4"] + raw["b4"]
    return jnp.tanh(h).reshape(z.shape[0], 1, 28, 28)


if __name__ == "__main__":
    hidden_dim = 32
    img_dim = IMG_DIM        # 784, required by .view(B, 1, 28, 28)
    batch = 16               # small, but exercises the >=2-block grid path

    key = jax.random.PRNGKey(0)
    k_param, k_z = jax.random.split(key)
    params, raw, bn = make_generator_params(hidden_dim, img_dim, k_param)
    z = jax.random.normal(k_z, (batch, hidden_dim), jnp.float32)

    img = generator_forward(z, params, img_dim=img_dim)
    img = jax.block_until_ready(img)
    assert img.shape == (batch, 1, 28, 28), img.shape

    # Exact-math check vs. the same folded bf16 parameters.
    ref_b = generator_ref_folded(z, params, img_dim)
    err_b = float(jnp.max(jnp.abs(img - ref_b)))
    assert jnp.allclose(img, ref_b, atol=1e-3, rtol=1e-3), err_b

    # Semantic check vs. the original (unfolded, f32) module math.
    ref_f = generator_ref_module_f32(z, raw, bn)
    err_f = float(jnp.max(jnp.abs(img - ref_f)))
    assert jnp.allclose(img, ref_f, atol=5e-2, rtol=5e-2), err_f

    print("KERNEL_OK")
</pallas_src>

<mosaic_0001>
module attributes {stable_mosaic.version = 11 : i64} {
  func.func @generator_kernel(%arg0: i32, %arg1: memref<8x32xf32, #tpu.memory_space<vmem>>, %arg2: memref<32x256xbf16, #tpu.memory_space<vmem>>, %arg3: memref<1x256xf32, #tpu.memory_space<vmem>>, %arg4: memref<256x512xbf16, #tpu.memory_space<vmem>>, %arg5: memref<1x512xf32, #tpu.memory_space<vmem>>, %arg6: memref<512x1024xbf16, #tpu.memory_space<vmem>>, %arg7: memref<1x1024xf32, #tpu.memory_space<vmem>>, %arg8: memref<1024x784xbf16, #tpu.memory_space<vmem>>, %arg9: memref<1x784xf32, #tpu.memory_space<vmem>>, %arg10: memref<8x784xf32, #tpu.memory_space<vmem>>) attributes {dimension_semantics = [#tpu.dimension_semantics<parallel>], iteration_bounds = array<i64: 2>, scalar_prefetch = 0 : i64, scratch_operands = 0 : i64, tpu.core_type = #tpu.core_type<tc>, window_params = [{transform_indices = @transform_0, window_bounds = array<i64: 8, 32>}, {pipeline_mode = #tpu.pipeline_mode<synchronous>, transform_indices = @transform_1, window_bounds = array<i64: 32, 256>}, {pipeline_mode = #tpu.pipeline_mode<synchronous>, transform_indices = @transform_2, window_bounds = array<i64: 1, 256>}, {pipeline_mode = #tpu.pipeline_mode<synchronous>, transform_indices = @transform_3, window_bounds = array<i64: 256, 512>}, {pipeline_mode = #tpu.pipeline_mode<synchronous>, transform_indices = @transform_4, window_bounds = array<i64: 1, 512>}, {pipeline_mode = #tpu.pipeline_mode<synchronous>, transform_indices = @transform_5, window_bounds = array<i64: 512, 1024>}, {pipeline_mode = #tpu.pipeline_mode<synchronous>, transform_indices = @transform_6, window_bounds = array<i64: 1, 1024>}, {pipeline_mode = #tpu.pipeline_mode<synchronous>, transform_indices = @transform_7, window_bounds = array<i64: 1024, 784>}, {pipeline_mode = #tpu.pipeline_mode<synchronous>, transform_indices = @transform_8, window_bounds = array<i64: 1, 784>}, {transform_indices = @transform_9, window_bounds = array<i64: 8, 784>}]} {
    %c0 = arith.constant 0 : index
    %c0_0 = arith.constant 0 : index
    %0 = vector.load %arg1[%c0, %c0_0] : memref<8x32xf32, #tpu.memory_space<vmem>>, vector<8x32xf32>
    %1 = arith.truncf %0 : vector<8x32xf32> to vector<8x32xbf16>
    %c0_1 = arith.constant 0 : index
    %c0_2 = arith.constant 0 : index
    %2 = vector.load %arg2[%c0_1, %c0_2] : memref<32x256xbf16, #tpu.memory_space<vmem>>, vector<32x256xbf16>
    %cst = arith.constant dense<0.000000e+00> : vector<8x256xf32>
    %3 = tpu.matmul %1, %2, %cst {dimension_numbers = #tpu.dot_dimension_numbers<[1], [0], [0], [1], [0, 0, 1, 1], [], []>} : vector<8x32xbf16>, vector<32x256xbf16>, vector<8x256xf32> -> vector<8x256xf32>
    %c0_3 = arith.constant 0 : index
    %c0_4 = arith.constant 0 : index
    %4 = vector.load %arg3[%c0_3, %c0_4] : memref<1x256xf32, #tpu.memory_space<vmem>>, vector<1x256xf32>
    %5 = vector.broadcast %4 : vector<1x256xf32> to vector<8x256xf32>
    %6 = arith.addf %3, %5 : vector<8x256xf32>
    %cst_5 = arith.constant 0.000000e+00 : f32
    %7 = vector.broadcast %cst_5 : f32 to vector<8x256xf32>
    %8 = arith.cmpf ogt, %6, %7 : vector<8x256xf32>
    %cst_6 = arith.constant 0.00999999977 : f32
    %9 = vector.broadcast %cst_6 : f32 to vector<8x256xf32>
    %10 = arith.mulf %9, %6 : vector<8x256xf32>
    %11 = arith.select %8, %6, %10 : vector<8x256xi1>, vector<8x256xf32>
    %12 = arith.truncf %11 : vector<8x256xf32> to vector<8x256xbf16>
    %c0_7 = arith.constant 0 : index
    %c0_8 = arith.constant 0 : index
    %13 = vector.load %arg4[%c0_7, %c0_8] : memref<256x512xbf16, #tpu.memory_space<vmem>>, vector<256x512xbf16>
    %cst_9 = arith.constant dense<0.000000e+00> : vector<8x512xf32>
    %14 = tpu.matmul %12, %13, %cst_9 {dimension_numbers = #tpu.dot_dimension_numbers<[1], [0], [0], [1], [0, 0, 1, 1], [], []>} : vector<8x256xbf16>, vector<256x512xbf16>, vector<8x512xf32> -> vector<8x512xf32>
    %c0_10 = arith.constant 0 : index
    %c0_11 = arith.constant 0 : index
    %15 = vector.load %arg5[%c0_10, %c0_11] : memref<1x512xf32, #tpu.memory_space<vmem>>, vector<1x512xf32>
    %16 = vector.broadcast %15 : vector<1x512xf32> to vector<8x512xf32>
    %17 = arith.addf %14, %16 : vector<8x512xf32>
    %cst_12 = arith.constant 0.000000e+00 : f32
    %18 = vector.broadcast %cst_12 : f32 to vector<8x512xf32>
    %19 = arith.cmpf ogt, %17, %18 : vector<8x512xf32>
    %cst_13 = arith.constant 0.00999999977 : f32
    %20 = vector.broadcast %cst_13 : f32 to vector<8x512xf32>
    %21 = arith.mulf %20, %17 : vector<8x512xf32>
    %22 = arith.select %19, %17, %21 : vector<8x512xi1>, vector<8x512xf32>
    %23 = arith.truncf %22 : vector<8x512xf32> to vector<8x512xbf16>
    %c0_14 = arith.constant 0 : index
    %c0_15 = arith.constant 0 : index
    %24 = vector.load %arg6[%c0_14, %c0_15] : memref<512x1024xbf16, #tpu.memory_space<vmem>>, vector<512x1024xbf16>
    %cst_16 = arith.constant dense<0.000000e+00> : vector<8x1024xf32>
    %25 = tpu.matmul %23, %24, %cst_16 {dimension_numbers = #tpu.dot_dimension_numbers<[1], [0], [0], [1], [0, 0, 1, 1], [], []>} : vector<8x512xbf16>, vector<512x1024xbf16>, vector<8x1024xf32> -> vector<8x1024xf32>
    %c0_17 = arith.constant 0 : index
    %c0_18 = arith.constant 0 : index
    %26 = vector.load %arg7[%c0_17, %c0_18] : memref<1x1024xf32, #tpu.memory_space<vmem>>, vector<1x1024xf32>
    %27 = vector.broadcast %26 : vector<1x1024xf32> to vector<8x1024xf32>
    %28 = arith.addf %25, %27 : vector<8x1024xf32>
    %cst_19 = arith.constant 0.000000e+00 : f32
    %29 = vector.broadcast %cst_19 : f32 to vector<8x1024xf32>
    %30 = arith.cmpf ogt, %28, %29 : vector<8x1024xf32>
    %cst_20 = arith.constant 0.00999999977 : f32
    %31 = vector.broadcast %cst_20 : f32 to vector<8x1024xf32>
    %32 = arith.mulf %31, %28 : vector<8x1024xf32>
    %33 = arith.select %30, %28, %32 : vector<8x1024xi1>, vector<8x1024xf32>
    %34 = arith.truncf %33 : vector<8x1024xf32> to vector<8x1024xbf16>
    %c0_21 = arith.constant 0 : index
    %c0_22 = arith.constant 0 : index
    %35 = vector.load %arg8[%c0_21, %c0_22] : memref<1024x784xbf16, #tpu.memory_space<vmem>>, vector<1024x784xbf16>
    %cst_23 = arith.constant dense<0.000000e+00> : vector<8x784xf32>
    %36 = tpu.matmul %34, %35, %cst_23 {dimension_numbers = #tpu.dot_dimension_numbers<[1], [0], [0], [1], [0, 0, 1, 1], [], []>} : vector<8x1024xbf16>, vector<1024x784xbf16>, vector<8x784xf32> -> vector<8x784xf32>
    %c0_24 = arith.constant 0 : index
    %c0_25 = arith.constant 0 : index
    %37 = vector.load %arg9[%c0_24, %c0_25] : memref<1x784xf32, #tpu.memory_space<vmem>>, vector<1x784xf32>
    %38 = vector.broadcast %37 : vector<1x784xf32> to vector<8x784xf32>
    %39 = arith.addf %36, %38 : vector<8x784xf32>
    %40 = math.tanh %39 : vector<8x784xf32>
    %c0_26 = arith.constant 0 : index
    %c0_27 = arith.constant 0 : index
    %41 = vector.load %arg10[%c0_26, %c0_27] : memref<8x784xf32, #tpu.memory_space<vmem>>, vector<8x784xf32>
    tpu.vector_store %arg10[%c0_26, %c0_27], %40 {strides = array<i32>} : memref<8x784xf32, #tpu.memory_space<vmem>>, vector<8x784xf32>,
    return
  }
  func.func @transform_0(%arg0: i32) -> (i32, i32) {
    %c0_i32 = arith.constant 0 : i32
    %c0_i32_0 = arith.constant 0 : i32
    return %arg0, %c0_i32 : i32, i32
  }
  func.func @transform_1(%arg0: i32) -> (i32, i32) {
    %c0_i32 = arith.constant 0 : i32
    %c0_i32_0 = arith.constant 0 : i32
    %c0_i32_1 = arith.constant 0 : i32
    return %c0_i32, %c0_i32_0 : i32, i32
  }
  func.func @transform_2(%arg0: i32) -> (i32, i32) {
    %c0_i32 = arith.constant 0 : i32
    %c0_i32_0 = arith.constant 0 : i32
    %c0_i32_1 = arith.constant 0 : i32
    return %c0_i32, %c0_i32_0 : i32, i32
  }
  func.func @transform_3(%arg0: i32) -> (i32, i32) {
    %c0_i32 = arith.constant 0 : i32
    %c0_i32_0 = arith.constant 0 : i32
    %c0_i32_1 = arith.constant 0 : i32
    return %c0_i32, %c0_i32_0 : i32, i32
  }
  func.func @transform_4(%arg0: i32) -> (i32, i32) {
    %c0_i32 = arith.constant 0 : i32
    %c0_i32_0 = arith.constant 0 : i32
    %c0_i32_1 = arith.constant 0 : i32
    return %c0_i32, %c0_i32_0 : i32, i32
  }
  func.func @transform_5(%arg0: i32) -> (i32, i32) {
    %c0_i32 = arith.constant 0 : i32
    %c0_i32_0 = arith.constant 0 : i32
    %c0_i32_1 = arith.constant 0 : i32
    return %c0_i32, %c0_i32_0 : i32, i32
  }
  func.func @transform_6(%arg0: i32) -> (i32, i32) {
    %c0_i32 = arith.constant 0 : i32
    %c0_i32_0 = arith.constant 0 : i32
    %c0_i32_1 = arith.constant 0 : i32
    return %c0_i32, %c0_i32_0 : i32, i32
  }
  func.func @transform_7(%arg0: i32) -> (i32, i32) {
    %c0_i32 = arith.constant 0 : i32
    %c0_i32_0 = arith.constant 0 : i32
    %c0_i32_1 = arith.constant 0 : i32
    return %c0_i32, %c0_i32_0 : i32, i32
  }
  func.func @transform_8(%arg0: i32) -> (i32, i32) {
    %c0_i32 = arith.constant 0 : i32
    %c0_i32_0 = arith.constant 0 : i32
    %c0_i32_1 = arith.constant 0 : i32
    return %c0_i32, %c0_i32_0 : i32, i32
  }
  func.func @transform_9(%arg0: i32) -> (i32, i32) {
    %c0_i32 = arith.constant 0 : i32
    %c0_i32_0 = arith.constant 0 : i32
    return %arg0, %c0_i32 : i32, i32
  }
}

</mosaic_0001>

<llo_original>
// kernel: tpu_custom_call.1
$region0: #{tpu_custom_call.1}
  #allocation0 [shape = 'u32[]', space=smem, size = 0x4, offset = 0x4, fixed_abs, tag = 'smem constant byte address 0x4 - core index']
  #allocation1 [shape = 'u32[144,128]{1,0:T(1,128)}', space=vmem, size = 0x12000, scoped, tag = 'internal scratch']
  %s0 = inlined_call_operand.vmem [shape: f32[16,32], index: 0, kind: input, shape index: {}]
  %s1 = inlined_call_operand.vmem [shape: bf16[32,256], index: 1, kind: input, shape index: {}]
  %s2 = inlined_call_operand.vmem [shape: f32[1,256], index: 2, kind: input, shape index: {}]
  %s3 = inlined_call_operand.vmem [shape: bf16[256,512], index: 3, kind: input, shape index: {}]
  %s4 = inlined_call_operand.vmem [shape: f32[1,512], index: 4, kind: input, shape index: {}]
  %s5 = inlined_call_operand.vmem [shape: bf16[512,1024], index: 5, kind: input, shape index: {}]
  %s6 = inlined_call_operand.vmem [shape: f32[1,1024], index: 6, kind: input, shape index: {}]
  %s7 = inlined_call_operand.vmem [shape: bf16[1024,784], index: 7, kind: input, shape index: {}]
  %s8 = inlined_call_operand.vmem [shape: f32[1,784], index: 8, kind: input, shape index: {}]
  %s9 = inlined_call_operand.hbm [shape: f32[16,784], index: 9, kind: output, shape index: {}]
  %s10 = sld [smem:[#allocation0]]
  $region69: #{tpu_custom_call.1} parent=0
    _
  %s12 = ssub.s32 1, %s10
  %s13 = scalar_select 0, %s12, %s10
  $region1: #{tpu_custom_call.1} parent=0
    #allocation2 [shape = 'u8[57344]{0}', space=vmem, size = 0xe000, scoped, tag = 'output window, operand 0']
    #allocation3 [shape = 's32[2]{0}', space=sflag, size = 0x8, scoped, tag = 'scoped memory for tpu_custom_call.1']
    %14 = vsyncpa [#allocation3], 0
    %s15 = scalar_lea.sflag [#allocation3], 1
    %16 = vsyncpa %s15, 0
    loop: start=0, step=1, limit=4
    $region2: #{tpu_custom_call.1} parent=1 // loop_pre_header
      _
    $region3: #{tpu_custom_call.1} parent=1 // loop_header
      %s18 = sphi 0, %s22
      %p19 = scmp.ge.s32.totalorder %s18, 4
      %s28 = sphi 0, %s30
      %s31 = sphi 0, %s28
      %s32 = sphi 0, %s31
      %s48 = sphi 0, %s32
      %s52 = sphi 0, %s52
      %s54 = sphi 0, %s52
      %s55 = sphi 0, %s54
      %s69 = sphi 0, %s55
      %s73 = sphi 0, %s73
      %s75 = sphi 0, %s73
      %s76 = sphi 0, %s75
      %s90 = sphi 0, %s76
      %s94 = sphi 0, %s94
      %s96 = sphi 0, %s94
      %s97 = sphi 0, %s96
      %s111 = sphi 0, %s97
      %s115 = sphi 0, %s115
      %s117 = sphi 0, %s115
      %s118 = sphi 0, %s117
      %s132 = sphi 0, %s118
      %s136 = sphi 0, %s136
      %s138 = sphi 0, %s136
      %s139 = sphi 0, %s138
      %s153 = sphi 0, %s139
      %s157 = sphi 0, %s157
      %s159 = sphi 0, %s157
      %s160 = sphi 0, %s159
      %s174 = sphi 0, %s160
      %s178 = sphi 0, %s178
      %s180 = sphi 0, %s178
      %s181 = sphi 0, %s180
      %s195 = sphi 0, %s181
      %s199 = sphi 0, %s199
      %s201 = sphi 0, %s199
      %s202 = sphi 0, %s201
      %s216 = sphi 0, %s202
      %s222 = sphi 0, %s224
      %s225 = sphi 0, %s222
      %s226 = sphi 0, %s225
      %s242 = sphi 0, %s226
    $region4: #{tpu_custom_call.1} parent=1 // loop_header_branch
      %21 = sbr.rel (%p19) target = $region8
    $region5: #{tpu_custom_call.1} parent=1 // loop_body
      %s23 = ssub.s32 %s18, 1
      %s24 = ssub.s32 %s18, 2
      %s25 = sadd.s32 %s18, 1
      %s26 = ssub.s32 %s18, %s25
      %p27 = scmp.eq.s32.totalorder %s26, 0
      %s29 = sadd.s32 %s28, 1
      %s30 = scalar_select %p27, %s28, %s29
      %p33 = pneg %p27
      %p34 = scmp.eq.s32.totalorder %s18, 1
      %p35 = por %p33, %p34
      %p36 = scmp.ne.s32.totalorder %s28, %s31
      %p37 = scmp.eq.s32.totalorder %s18, 0
      %p38 = por %p36, %p37
      %p39 = scmp.ne.s32.totalorder %s28, %s31
      %p40 = scmp.eq.s32.totalorder %s23, 1
      %p41 = por %p39, %p40
      %p42 = scmp.ne.s32.totalorder %s31, %s32
      %p43 = scmp.eq.s32.totalorder %s23, 0
      %p44 = por %p42, %p43
      %p45 = scmp.ne.s32.totalorder %s31, %s32
      %p46 = scmp.eq.s32.totalorder %s24, 1
      %p47 = por %p45, %p46
      %p49 = scmp.ne.s32.totalorder %s32, %s48
      %p50 = scmp.eq.s32.totalorder %s24, 0
      %p51 = por %p49, %p50
      %s53 = sadd.s32 %s52, 1
      %p56 = scmp.eq.s32.totalorder %s18, 1
      %p57 = scmp.ne.s32.totalorder %s52, %s54
      %p58 = scmp.eq.s32.totalorder %s18, 0
      %p59 = por %p57, %p58
      %p60 = scmp.ne.s32.totalorder %s52, %s54
      %p61 = scmp.eq.s32.totalorder %s23, 1
      %p62 = por %p60, %p61
      %p63 = scmp.ne.s32.totalorder %s54, %s55
      %p64 = scmp.eq.s32.totalorder %s23, 0
      %p65 = por %p63, %p64
      %p66 = scmp.ne.s32.totalorder %s54, %s55
      %p67 = scmp.eq.s32.totalorder %s24, 1
      %p68 = por %p66, %p67
      %p70 = scmp.ne.s32.totalorder %s55, %s69
      %p71 = scmp.eq.s32.totalorder %s24, 0
      %p72 = por %p70, %p71
      %s74 = sadd.s32 %s73, 1
      %p77 = scmp.eq.s32.totalorder %s18, 1
      %p78 = scmp.ne.s32.totalorder %s73, %s75
      %p79 = scmp.eq.s32.totalorder %s18, 0
      %p80 = por %p78, %p79
      %p81 = scmp.ne.s32.totalorder %s73, %s75
      %p82 = scmp.eq.s32.totalorder %s23, 1
      %p83 = por %p81, %p82
      %p84 = scmp.ne.s32.totalorder %s75, %s76
      %p85 = scmp.eq.s32.totalorder %s23, 0
      %p86 = por %p84, %p85
      %p87 = scmp.ne.s32.totalorder %s75, %s76
      %p88 = scmp.eq.s32.totalorder %s24, 1
      %p89 = por %p87, %p88
      %p91 = scmp.ne.s32.totalorder %s76, %s90
      %p92 = scmp.eq.s32.totalorder %s24, 0
      %p93 = por %p91, %p92
      %s95 = sadd.s32 %s94, 1
      %p98 = scmp.eq.s32.totalorder %s18, 1
      %p99 = scmp.ne.s32.totalorder %s94, %s96
      %p100 = scmp.eq.s32.totalorder %s18, 0
      %p101 = por %p99, %p100
      %p102 = scmp.ne.s32.totalorder %s94, %s96
      %p103 = scmp.eq.s32.totalorder %s23, 1
      %p104 = por %p102, %p103
      %p105 = scmp.ne.s32.totalorder %s96, %s97
      %p106 = scmp.eq.s32.totalorder %s23, 0
      %p107 = por %p105, %p106
      %p108 = scmp.ne.s32.totalorder %s96, %s97
      %p109 = scmp.eq.s32.totalorder %s24, 1
      %p110 = por %p108, %p109
      %p112 = scmp.ne.s32.totalorder %s97, %s111
      %p113 = scmp.eq.s32.totalorder %s24, 0
      %p114 = por %p112, %p113
      %s116 = sadd.s32 %s115, 1
      %p119 = scmp.eq.s32.totalorder %s18, 1
      %p120 = scmp.ne.s32.totalorder %s115, %s117
      %p121 = scmp.eq.s32.totalorder %s18, 0
      %p122 = por %p120, %p121
      %p123 = scmp.ne.s32.totalorder %s115, %s117
      %p124 = scmp.eq.s32.totalorder %s23, 1
      %p125 = por %p123, %p124
      %p126 = scmp.ne.s32.totalorder %s117, %s118
      %p127 = scmp.eq.s32.totalorder %s23, 0
      %p128 = por %p126, %p127
      %p129 = scmp.ne.s32.totalorder %s117, %s118
      %p130 = scmp.eq.s32.totalorder %s24, 1
      %p131 = por %p129, %p130
      %p133 = scmp.ne.s32.totalorder %s118, %s132
      %p134 = scmp.eq.s32.totalorder %s24, 0
      %p135 = por %p133, %p134
      %s137 = sadd.s32 %s136, 1
      %p140 = scmp.eq.s32.totalorder %s18, 1
      %p141 = scmp.ne.s32.totalorder %s136, %s138
      %p142 = scmp.eq.s32.totalorder %s18, 0
      %p143 = por %p141, %p142
      %p144 = scmp.ne.s32.totalorder %s136, %s138
      %p145 = scmp.eq.s32.totalorder %s23, 1
      %p146 = por %p144, %p145
      %p147 = scmp.ne.s32.totalorder %s138, %s139
      %p148 = scmp.eq.s32.totalorder %s23, 0
      %p149 = por %p147, %p148
      %p150 = scmp.ne.s32.totalorder %s138, %s139
      %p151 = scmp.eq.s32.totalorder %s24, 1
      %p152 = por %p150, %p151
      %p154 = scmp.ne.s32.totalorder %s139, %s153
      %p155 = scmp.eq.s32.totalorder %s24, 0
      %p156 = por %p154, %p155
      %s158 = sadd.s32 %s157, 1
      %p161 = scmp.eq.s32.totalorder %s18, 1
      %p162 = scmp.ne.s32.totalorder %s157, %s159
      %p163 = scmp.eq.s32.totalorder %s18, 0
      %p164 = por %p162, %p163
      %p165 = scmp.ne.s32.totalorder %s157, %s159
      %p166 = scmp.eq.s32.totalorder %s23, 1
      %p167 = por %p165, %p166
      %p168 = scmp.ne.s32.totalorder %s159, %s160
      %p169 = scmp.eq.s32.totalorder %s23, 0
      %p170 = por %p168, %p169
      %p171 = scmp.ne.s32.totalorder %s159, %s160
      %p172 = scmp.eq.s32.totalorder %s24, 1
      %p173 = por %p171, %p172
      %p175 = scmp.ne.s32.totalorder %s160, %s174
      %p176 = scmp.eq.s32.totalorder %s24, 0
      %p177 = por %p175, %p176
      %s179 = sadd.s32 %s178, 1
      %p182 = scmp.eq.s32.totalorder %s18, 1
      %p183 = scmp.ne.s32.totalorder %s178, %s180
      %p184 = scmp.eq.s32.totalorder %s18, 0
      %p185 = por %p183, %p184
      %p186 = scmp.ne.s32.totalorder %s178, %s180
      %p187 = scmp.eq.s32.totalorder %s23, 1
      %p188 = por %p186, %p187
      %p189 = scmp.ne.s32.totalorder %s180, %s181
      %p190 = scmp.eq.s32.totalorder %s23, 0
      %p191 = por %p189, %p190
      %p192 = scmp.ne.s32.totalorder %s180, %s181
      %p193 = scmp.eq.s32.totalorder %s24, 1
      %p194 = por %p192, %p193
      %p196 = scmp.ne.s32.totalorder %s181, %s195
      %p197 = scmp.eq.s32.totalorder %s24, 0
      %p198 = por %p196, %p197
      %s200 = sadd.s32 %s199, 1
      %p203 = scmp.eq.s32.totalorder %s18, 1
      %p204 = scmp.ne.s32.totalorder %s199, %s201
      %p205 = scmp.eq.s32.totalorder %s18, 0
      %p206 = por %p204, %p205
      %p207 = scmp.ne.s32.totalorder %s199, %s201
      %p208 = scmp.eq.s32.totalorder %s23, 1
      %p209 = por %p207, %p208
      %p210 = scmp.ne.s32.totalorder %s201, %s202
      %p211 = scmp.eq.s32.totalorder %s23, 0
      %p212 = por %p210, %p211
      %p213 = scmp.ne.s32.totalorder %s201, %s202
      %p214 = scmp.eq.s32.totalorder %s24, 1
      %p215 = por %p213, %p214
      %p217 = scmp.ne.s32.totalorder %s202, %s216
      %p218 = scmp.eq.s32.totalorder %s24, 0
      %p219 = por %p217, %p218
      %s220 = ssub.s32 %s18, %s25
      %p221 = scmp.eq.s32.totalorder %s220, 0
      %s223 = sadd.s32 %s222, 1
      %s224 = scalar_select %p221, %s222, %s223
      %p227 = pneg %p221
      %p228 = scmp.eq.s32.totalorder %s18, 1
      %p229 = por %p227, %p228
      %p230 = scmp.ne.s32.totalorder %s222, %s225
      %p231 = scmp.eq.s32.totalorder %s18, 0
      %p232 = por %p230, %p231
      %p233 = scmp.ne.s32.totalorder %s222, %s225
      %p234 = scmp.eq.s32.totalorder %s23, 1
      %p235 = por %p233, %p234
      %p236 = scmp.ne.s32.totalorder %s225, %s226
      %p237 = scmp.eq.s32.totalorder %s23, 0
      %p238 = por %p236, %p237
      %p239 = scmp.ne.s32.totalorder %s225, %s226
      %p240 = scmp.eq.s32.totalorder %s24, 1
      %p241 = por %p239, %p240
      %p243 = scmp.ne.s32.totalorder %s226, %s242
      %p244 = scmp.eq.s32.totalorder %s24, 0
      %p245 = por %p243, %p244
      %p246 = scmp.le.s32.totalorder 1, %s18
      %p247 = scmp.lt.s32.totalorder %s18, 3
      %p248 = pnand %p246, %p247
      %p249 = pneg %p248
      // Predicated region
      $region9: #{tpu_custom_call.1} parent=5 // pred_check
        _
      $region10: #{tpu_custom_call.1} parent=5 // pred_check_branch
        %251 = sbr.rel (%p248) target = $region12
      $region11: #{tpu_custom_call.1} parent=5 // pred_region
        %s252 = ssub.s32 %s18, 1
        // Predicated region
        $region13: #{tpu_custom_call.1} parent=11 // pred_check
          %p253 = pneg %p65
        $region14: #{tpu_custom_call.1} parent=11 // pred_check_branch
          %255 = sbr.rel (%p253) target = $region16
        $region15: #{tpu_custom_call.1} parent=11 // pred_region
          _
        $region16: #{tpu_custom_call.1} parent=11 // pred_fallthru
          _
        // Predicated region
        $region17: #{tpu_custom_call.1} parent=11 // pred_check
          %p256 = pneg %p86
        $region18: #{tpu_custom_call.1} parent=11 // pred_check_branch
          %258 = sbr.rel (%p256) target = $region20
        $region19: #{tpu_custom_call.1} parent=11 // pred_region
          _
        $region20: #{tpu_custom_call.1} parent=11 // pred_fallthru
          _
        // Predicated region
        $region21: #{tpu_custom_call.1} parent=11 // pred_check
          %p259 = pneg %p107
        $region22: #{tpu_custom_call.1} parent=11 // pred_check_branch
          %261 = sbr.rel (%p259) target = $region24
        $region23: #{tpu_custom_call.1} parent=11 // pred_region
          _
        $region24: #{tpu_custom_call.1} parent=11 // pred_fallthru
          _
        // Predicated region
        $region25: #{tpu_custom_call.1} parent=11 // pred_check
          %p262 = pneg %p128
        $region26: #{tpu_custom_call.1} parent=11 // pred_check_branch
          %264 = sbr.rel (%p262) target = $region28
        $region27: #{tpu_custom_call.1} parent=11 // pred_region
          _
        $region28: #{tpu_custom_call.1} parent=11 // pred_fallthru
          _
        // Predicated region
        $region29: #{tpu_custom_call.1} parent=11 // pred_check
          %p265 = pneg %p149
        $region30: #{tpu_custom_call.1} parent=11 // pred_check_branch
          %267 = sbr.rel (%p265) target = $region32
        $region31: #{tpu_custom_call.1} parent=11 // pred_region
          _
        $region32: #{tpu_custom_call.1} parent=11 // pred_fallthru
          _
        // Predicated region
        $region33: #{tpu_custom_call.1} parent=11 // pred_check
          %p268 = pneg %p170
        $region34: #{tpu_custom_call.1} parent=11 // pred_check_branch
          %270 = sbr.rel (%p268) target = $region36
        $region35: #{tpu_custom_call.1} parent=11 // pred_region
          _
        $region36: #{tpu_custom_call.1} parent=11 // pred_fallthru
          _
        // Predicated region
        $region37: #{tpu_custom_call.1} parent=11 // pred_check
          %p271 = pneg %p191
        $region38: #{tpu_custom_call.1} parent=11 // pred_check_branch
          %273 = sbr.rel (%p271) target = $region40
        $region39: #{tpu_custom_call.1} parent=11 // pred_region
          _
        $region40: #{tpu_custom_call.1} parent=11 // pred_fallthru
          _
        // Predicated region
        $region41: #{tpu_custom_call.1} parent=11 // pred_check
          %p274 = pneg %p212
        $region42: #{tpu_custom_call.1} parent=11 // pred_check_branch
          %276 = sbr.rel (%p274) target = $region44
        $region43: #{tpu_custom_call.1} parent=11 // pred_region
          _
        $region44: #{tpu_custom_call.1} parent=11 // pred_fallthru
          _
      $region12: #{tpu_custom_call.1} parent=5 // pred_fallthru
        _
      %p277 = scmp.lt.s32.totalorder %s18, 2
      // Predicated region
      $region45: #{tpu_custom_call.1} parent=5 // pred_check
        %p278 = pneg %p277
      $region46: #{tpu_custom_call.1} parent=5 // pred_check_branch
        %280 = sbr.rel (%p278) target = $region48
      $region47: #{tpu_custom_call.1} parent=5 // pred_region
        // Predicated region
        $region49: #{tpu_custom_call.1} parent=47 // pred_check
          %p281 = pneg %p38
        $region50: #{tpu_custom_call.1} parent=47 // pred_check_branch
          %283 = sbr.rel (%p281) target = $region52
        $region51: #{tpu_custom_call.1} parent=47 // pred_region
          %p284 = scmp.lt.s32.totalorder %s18, 1
          %s285 = scalar_select %p284, %s18, 1
          %s286 = smul.addr %s285, 8
          %s287 = scalar_lea.vmem %s0, %s286
        $region52: #{tpu_custom_call.1} parent=47 // pred_fallthru
          _
      $region48: #{tpu_custom_call.1} parent=5 // pred_fallthru
        _
      %p288 = scmp.le.s32.totalorder 1, %s18
      %p289 = scmp.lt.s32.totalorder %s18, 3
      %p290 = pnand %p288, %p289
      %p291 = pneg %p290
      // Predicated region
      $region53: #{tpu_custom_call.1} parent=5 // pred_check
        _
      $region54: #{tpu_custom_call.1} parent=5 // pred_check_branch
        %293 = sbr.rel (%p290) target = $region56
      $region55: #{tpu_custom_call.1} parent=5 // pred_region
        %s294 = ssub.s32 %s18, 1
        %p295 = scmp.lt.s32.totalorder %s23, 1
        %s296 = scalar_select %p295, %s23, 1
        %s297 = smul.addr %s296, 8
        %s298 = scalar_lea.vmem %s0, %s297
        %p299 = pneg %p44
        %p300 = pneg %p41
        %p301 = pneg %p65
        %p302 = pneg %p62
        %p303 = pneg %p86
        %p304 = pneg %p83
        %p305 = pneg %p107
        %p306 = pneg %p104
        %p307 = pneg %p128
        %p308 = pneg %p125
        %p309 = pneg %p149
        %p310 = pneg %p146
        %p311 = pneg %p170
        %p312 = pneg %p167
        %p313 = pneg %p191
        %p314 = pneg %p188
        %p315 = pneg %p212
        %p316 = pneg %p209
        %p317 = pneg %p238
        %p318 = pneg %p235
        %s319 = sand.u32 %s225, 1
        %s320 = scalar_lea.sflag [#allocation3], %s319
        %s321 = sand.u32 %s225, 1
        %s322 = smul.addr %s321, 56
        %s323 = scalar_lea.vmem [#allocation2], %s322
        %p324 = scmp.lt.s32.totalorder %s23, 1
        %s325 = scalar_select %p324, %s23, 1
        %s326 = smul.addr %s325, 8
        %s327 = scalar_lea.vmem %s0, %s326
        %v329 = vld [vmem:[%s327] sm:$0xff]
        %v330 = vpack.c.bf16 %v329, %v329
        %v331 = vld [vmem:[%s1] sm:$0xff]
        %v332 = vld [vmem:[%s1 + $0x8] sm:$0xff]
        %v333 = vld [vmem:[%s1 + $0x10] sm:$0xff]
        %v334 = vld [vmem:[%s1 + $0x18] sm:$0xff]
        %v335 = vld [vmem:[%s2] sm:$0x3]
        %v337 = vlaneseq
        %v338 = vshrl.u32 %v337, 7
        %v339 = vsub.s32 0, %v338
        %v340 = vrot.slane %v335, %v339
        %v341 = vlaneseq
        %v342 = vshrl.u32 %v341, 7
        %v343 = vsub.s32 1, %v342
        %v344 = vrot.slane %v335, %v343
        %v351 = vunpack.c.l.b16 %v331
        %v352 = vunpack.c.h.b16 %v331
        %v353 = vunpack.c.l.b16 %v332
        %v354 = vunpack.c.h.b16 %v332
        %v355 = vunpack.c.l.b16 %v333
        %v356 = vunpack.c.h.b16 %v333
        %v357 = vunpack.c.l.b16 %v334
        %v358 = vunpack.c.h.b16 %v334
        %v359 = vpack.c.b16 %v353, %v351
        %v360 = vpack.c.b16 %v354, %v352
        %v361 = vpack.c.b16 %v357, %v355
        %v362 = vpack.c.b16 %v358, %v356
        %vm367 = vcmask 261120
        %v369 = vsel %vm367, %v330, 0
        %371 = vmatprep.subr.bf16.mxu0 0
        %372 = vmatpush1.bf16.msra.mxu0 0
        %373 = vmatprep.subr.bf16.mxu0 0
        %374 = vmatpush1.bf16.msra.mxu0 0
        %375 = vmatprep.subr.bf16.mxu0 0
        %376 = vmatpush1.bf16.msra.mxu0 0
        %377 = vmatprep.subr.bf16.mxu0 0
        %378 = vmatpush1.bf16.msra.mxu0 0
        %379 = vmatprep.subr.bf16.mxu0 0
        %380 = vmatpush1.bf16.msra.mxu0 0
        %381 = vmatprep.subr.bf16.mxu0 0
        %382 = vmatpush1.bf16.msra.mxu0 0
        %383 = vmatprep.subr.bf16.mxu0 %v362
        %384 = vmatpush1.bf16.msra.mxu0 %v361
        %385 = vmatprep.subr.bf16.mxu0 %v360
        %386 = vmatpush1.bf16.msra.mxu0 %v359
        %387 = vmatprep.subr.bf16.mxu0 0
        %388 = vmatpush2.bf16.msra.mxu0 0
        %389 = vmatprep.subr.bf16.mxu0 0
        %390 = vmatpush2.bf16.msra.mxu0 0
        %391 = vmatprep.subr.bf16.mxu0 0
        %392 = vmatpush2.bf16.msra.mxu0 0
        %393 = vmatprep.subr.bf16.mxu0 0
        %394 = vmatpush2.bf16.msra.mxu0 0
        %395 = vmatprep.subr.bf16.mxu0 0
        %396 = vmatpush2.bf16.msra.mxu0 0
        %397 = vmatprep.subr.bf16.mxu0 0
        %398 = vmatpush2.bf16.msra.mxu0 0
        %399 = vmatprep.subr.bf16.mxu0 0
        %400 = vmatpush2.bf16.msra.mxu0 0
        %401 = vmatprep.subr.bf16.mxu0 0
        %402 = vmatpush2.bf16.msra.mxu0 0
        %403 = vmatprep.mubr.bf16.mxu0 0
        %404 = vmatmul.mubr.bf16.gmra.mxu0 %v369
        %v405 = vpop.f32.mrf.mxu0
        %v406 = vadd.f32 %v340, %v405
        %v407 = vpop.f32.mrf.mxu0
        %v408 = vadd.f32 %v344, %v407
        %v409 = vpop.f32.mrf.mxu0
        %v410 = vpop.f32.mrf.mxu0
        %411 = vdwg.mxu0
        %vm412 = vcmp.gt.f32.partialorder %v406, 0.0
        %vm413 = vcmp.gt.f32.partialorder %v408, 0.0
        %v414 = vmul.f32 %v406, 0.01
        %v415 = vmul.f32 %v408, 0.01
        %v416 = vsel %vm412, %v406, %v414
        %v417 = vsel %vm413, %v408, %v415
        %v418 = vpack.c.bf16 %v416, %v416
        %v419 = vpack.c.bf16 %v417, %v417
        %v420 = vld [vmem:[%s3] sm:$0xff]
        %v421 = vld [vmem:[%s3 + $0x8] sm:$0xff]
        %v422 = vld [vmem:[%s3 + $0x10] sm:$0xff]
        %v423 = vld [vmem:[%s3 + $0x18] sm:$0xff]
        %v424 = vld [vmem:[%s3 + $0x20] sm:$0xff]
        %v425 = vld [vmem:[%s3 + $0x28] sm:$0xff]
        %v426 = vld [vmem:[%s3 + $0x30] sm:$0xff]
        %v427 = vld [vmem:[%s3 + $0x38] sm:$0xff]
        %v428 = vld [vmem:[%s3 + $0x40] sm:$0xff]
        %v429 = vld [vmem:[%s3 + $0x48] sm:$0xff]
        %v430 = vld [vmem:[%s3 + $0x50] sm:$0xff]
        %v431 = vld [vmem:[%s3 + $0x58] sm:$0xff]
        %v432 = vld [vmem:[%s3 + $0x60] sm:$0xff]
        %v433 = vld [vmem:[%s3 + $0x68] sm:$0xff]
        %v434 = vld [vmem:[%s3 + $0x70] sm:$0xff]
        %v435 = vld [vmem:[%s3 + $0x78] sm:$0xff]
        %v436 = vld [vmem:[%s3 + $0x80] sm:$0xff]
        %v437 = vld [vmem:[%s3 + $0x88] sm:$0xff]
        %v438 = vld [vmem:[%s3 + $0x90] sm:$0xff]
        %v439 = vld [vmem:[%s3 + $0x98] sm:$0xff]
        %v440 = vld [vmem:[%s3 + $0xa0] sm:$0xff]
        %v441 = vld [vmem:[%s3 + $0xa8] sm:$0xff]
        %v442 = vld [vmem:[%s3 + $0xb0] sm:$0xff]
        %v443 = vld [vmem:[%s3 + $0xb8] sm:$0xff]
        %v444 = vld [vmem:[%s3 + $0xc0] sm:$0xff]
        %v445 = vld [vmem:[%s3 + $0xc8] sm:$0xff]
        %v446 = vld [vmem:[%s3 + $0xd0] sm:$0xff]
        %v447 = vld [vmem:[%s3 + $0xd8] sm:$0xff]
        %v448 = vld [vmem:[%s3 + $0xe0] sm:$0xff]
        %v449 = vld [vmem:[%s3 + $0xe8] sm:$0xff]
        %v450 = vld [vmem:[%s3 + $0xf0] sm:$0xff]
        %v451 = vld [vmem:[%s3 + $0xf8] sm:$0xff]
        %v452 = vld [vmem:[%s3 + $0x100] sm:$0xff]
        %v453 = vld [vmem:[%s3 + $0x108] sm:$0xff]
        %v454 = vld [vmem:[%s3 + $0x110] sm:$0xff]
        %v455 = vld [vmem:[%s3 + $0x118] sm:$0xff]
        %v456 = vld [vmem:[%s3 + $0x120] sm:$0xff]
        %v457 = vld [vmem:[%s3 + $0x128] sm:$0xff]
        %v458 = vld [vmem:[%s3 + $0x130] sm:$0xff]
        %v459 = vld [vmem:[%s3 + $0x138] sm:$0xff]
        %v460 = vld [vmem:[%s3 + $0x140] sm:$0xff]
        %v461 = vld [vmem:[%s3 + $0x148] sm:$0xff]
        %v462 = vld [vmem:[%s3 + $0x150] sm:$0xff]
        %v463 = vld [vmem:[%s3 + $0x158] sm:$0xff]
        %v464 = vld [vmem:[%s3 + $0x160] sm:$0xff]
        %v465 = vld [vmem:[%s3 + $0x168] sm:$0xff]
        %v466 = vld [vmem:[%s3 + $0x170] sm:$0xff]
        %v467 = vld [vmem:[%s3 + $0x178] sm:$0xff]
        %v468 = vld [vmem:[%s3 + $0x180] sm:$0xff]
        %v469 = vld [vmem:[%s3 + $0x188] sm:$0xff]
        %v470 = vld [vmem:[%s3 + $0x190] sm:$0xff]
        %v471 = vld [vmem:[%s3 + $0x198] sm:$0xff]
        %v472 = vld [vmem:[%s3 + $0x1a0] sm:$0xff]
        %v473 = vld [vmem:[%s3 + $0x1a8] sm:$0xff]
        %v474 = vld [vmem:[%s3 + $0x1b0] sm:$0xff]
        %v475 = vld [vmem:[%s3 + $0x1b8] sm:$0xff]
        %v476 = vld [vmem:[%s3 + $0x1c0] sm:$0xff]
        %v477 = vld [vmem:[%s3 + $0x1c8] sm:$0xff]
        %v478 = vld [vmem:[%s3 + $0x1d0] sm:$0xff]
        %v479 = vld [vmem:[%s3 + $0x1d8] sm:$0xff]
        %v480 = vld [vmem:[%s3 + $0x1e0] sm:$0xff]
        %v481 = vld [vmem:[%s3 + $0x1e8] sm:$0xff]
        %v482 = vld [vmem:[%s3 + $0x1f0] sm:$0xff]
        %v483 = vld [vmem:[%s3 + $0x1f8] sm:$0xff]
        %v484 = vld [vmem:[%s4] sm:$0xf]
        %v486 = vlaneseq
        %v487 = vshrl.u32 %v486, 7
        %v488 = vsub.s32 0, %v487
        %v489 = vrot.slane %v484, %v488
        %v490 = vlaneseq
        %v491 = vshrl.u32 %v490, 7
        %v492 = vsub.s32 1, %v491
        %v493 = vrot.slane %v484, %v492
        %v494 = vlaneseq
        %v495 = vshrl.u32 %v494, 7
        %v496 = vsub.s32 2, %v495
        %v497 = vrot.slane %v484, %v496
        %v498 = vlaneseq
        %v499 = vshrl.u32 %v498, 7
        %v500 = vsub.s32 3, %v499
        %v501 = vrot.slane %v484, %v500
        %v570 = vunpack.c.l.b16 %v420
        %v571 = vunpack.c.h.b16 %v420
        %v572 = vunpack.c.l.b16 %v421
        %v573 = vunpack.c.h.b16 %v421
        %v574 = vunpack.c.l.b16 %v422
        %v575 = vunpack.c.h.b16 %v422
        %v576 = vunpack.c.l.b16 %v423
        %v577 = vunpack.c.h.b16 %v423
        %v578 = vunpack.c.l.b16 %v424
        %v579 = vunpack.c.h.b16 %v424
        %v580 = vunpack.c.l.b16 %v425
        %v581 = vunpack.c.h.b16 %v425
        %v582 = vunpack.c.l.b16 %v426
        %v583 = vunpack.c.h.b16 %v426
        %v584 = vunpack.c.l.b16 %v427
        %v585 = vunpack.c.h.b16 %v427
        %v586 = vunpack.c.l.b16 %v428
        %v587 = vunpack.c.h.b16 %v428
        %v588 = vunpack.c.l.b16 %v429
        %v589 = vunpack.c.h.b16 %v429
        %v590 = vunpack.c.l.b16 %v430
        %v591 = vunpack.c.h.b16 %v430
        %v592 = vunpack.c.l.b16 %v431
        %v593 = vunpack.c.h.b16 %v431
        %v594 = vunpack.c.l.b16 %v432
        %v595 = vunpack.c.h.b16 %v432
        %v596 = vunpack.c.l.b16 %v433
        %v597 = vunpack.c.h.b16 %v433
        %v598 = vunpack.c.l.b16 %v434
        %v599 = vunpack.c.h.b16 %v434
        %v600 = vunpack.c.l.b16 %v435
        %v601 = vunpack.c.h.b16 %v435
        %v602 = vunpack.c.l.b16 %v436
        %v603 = vunpack.c.h.b16 %v436
        %v604 = vunpack.c.l.b16 %v437
        %v605 = vunpack.c.h.b16 %v437
        %v606 = vunpack.c.l.b16 %v438
        %v607 = vunpack.c.h.b16 %v438
        %v608 = vunpack.c.l.b16 %v439
        %v609 = vunpack.c.h.b16 %v439
        %v610 = vunpack.c.l.b16 %v440
        %v611 = vunpack.c.h.b16 %v440
        %v612 = vunpack.c.l.b16 %v441
        %v613 = vunpack.c.h.b16 %v441
        %v614 = vunpack.c.l.b16 %v442
        %v615 = vunpack.c.h.b16 %v442
        %v616 = vunpack.c.l.b16 %v443
        %v617 = vunpack.c.h.b16 %v443
        %v618 = vunpack.c.l.b16 %v444
        %v619 = vunpack.c.h.b16 %v444
        %v620 = vunpack.c.l.b16 %v445
        %v621 = vunpack.c.h.b16 %v445
        %v622 = vunpack.c.l.b16 %v446
        %v623 = vunpack.c.h.b16 %v446
        %v624 = vunpack.c.l.b16 %v447
        %v625 = vunpack.c.h.b16 %v447
        %v626 = vunpack.c.l.b16 %v448
        %v627 = vunpack.c.h.b16 %v448
        %v628 = vunpack.c.l.b16 %v449
        %v629 = vunpack.c.h.b16 %v449
        %v630 = vunpack.c.l.b16 %v450
        %v631 = vunpack.c.h.b16 %v450
        %v632 = vunpack.c.l.b16 %v451
        %v633 = vunpack.c.h.b16 %v451
        %v634 = vunpack.c.l.b16 %v452
        %v635 = vunpack.c.h.b16 %v452
        %v636 = vunpack.c.l.b16 %v453
        %v637 = vunpack.c.h.b16 %v453
        %v638 = vunpack.c.l.b16 %v454
        %v639 = vunpack.c.h.b16 %v454
        %v640 = vunpack.c.l.b16 %v455
        %v641 = vunpack.c.h.b16 %v455
        %v642 = vunpack.c.l.b16 %v456
        %v643 = vunpack.c.h.b16 %v456
        %v644 = vunpack.c.l.b16 %v457
        %v645 = vunpack.c.h.b16 %v457
        %v646 = vunpack.c.l.b16 %v458
        %v647 = vunpack.c.h.b16 %v458
        %v648 = vunpack.c.l.b16 %v459
        %v649 = vunpack.c.h.b16 %v459
        %v650 = vunpack.c.l.b16 %v460
        %v651 = vunpack.c.h.b16 %v460
        %v652 = vunpack.c.l.b16 %v461
        %v653 = vunpack.c.h.b16 %v461
        %v654 = vunpack.c.l.b16 %v462
        %v655 = vunpack.c.h.b16 %v462
        %v656 = vunpack.c.l.b16 %v463
        %v657 = vunpack.c.h.b16 %v463
        %v658 = vunpack.c.l.b16 %v464
        %v659 = vunpack.c.h.b16 %v464
        %v660 = vunpack.c.l.b16 %v465
        %v661 = vunpack.c.h.b16 %v465
        %v662 = vunpack.c.l.b16 %v466
        %v663 = vunpack.c.h.b16 %v466
        %v664 = vunpack.c.l.b16 %v467
        %v665 = vunpack.c.h.b16 %v467
        %v666 = vunpack.c.l.b16 %v468
        %v667 = vunpack.c.h.b16 %v468
        %v668 = vunpack.c.l.b16 %v469
        %v669 = vunpack.c.h.b16 %v469
        %v670 = vunpack.c.l.b16 %v470
        %v671 = vunpack.c.h.b16 %v470
        %v672 = vunpack.c.l.b16 %v471
        %v673 = vunpack.c.h.b16 %v471
        %v674 = vunpack.c.l.b16 %v472
        %v675 = vunpack.c.h.b16 %v472
        %v676 = vunpack.c.l.b16 %v473
        %v677 = vunpack.c.h.b16 %v473
        %v678 = vunpack.c.l.b16 %v474
        %v679 = vunpack.c.h.b16 %v474
        %v680 = vunpack.c.l.b16 %v475
        %v681 = vunpack.c.h.b16 %v475
        %v682 = vunpack.c.l.b16 %v476
        %v683 = vunpack.c.h.b16 %v476
        %v684 = vunpack.c.l.b16 %v477
        %v685 = vunpack.c.h.b16 %v477
        %v686 = vunpack.c.l.b16 %v478
        %v687 = vunpack.c.h.b16 %v478
        %v688 = vunpack.c.l.b16 %v479
        %v689 = vunpack.c.h.b16 %v479
        %v690 = vunpack.c.l.b16 %v480
        %v691 = vunpack.c.h.b16 %v480
        %v692 = vunpack.c.l.b16 %v481
        %v693 = vunpack.c.h.b16 %v481
        %v694 = vunpack.c.l.b16 %v482
        %v695 = vunpack.c.h.b16 %v482
        %v696 = vunpack.c.l.b16 %v483
        %v697 = vunpack.c.h.b16 %v483
        %v698 = vpack.c.b16 %v574, %v570
        %v699 = vpack.c.b16 %v575, %v571
        %v700 = vpack.c.b16 %v576, %v572
        %v701 = vpack.c.b16 %v577, %v573
        %v702 = vpack.c.b16 %v582, %v578
        %v703 = vpack.c.b16 %v583, %v579
        %v704 = vpack.c.b16 %v584, %v580
        %v705 = vpack.c.b16 %v585, %v581
        %v706 = vpack.c.b16 %v590, %v586
        %v707 = vpack.c.b16 %v591, %v587
        %v708 = vpack.c.b16 %v592, %v588
        %v709 = vpack.c.b16 %v593, %v589
        %v710 = vpack.c.b16 %v598, %v594
        %v711 = vpack.c.b16 %v599, %v595
        %v712 = vpack.c.b16 %v600, %v596
        %v713 = vpack.c.b16 %v601, %v597
        %v714 = vpack.c.b16 %v606, %v602
        %v715 = vpack.c.b16 %v607, %v603
        %v716 = vpack.c.b16 %v608, %v604
        %v717 = vpack.c.b16 %v609, %v605
        %v718 = vpack.c.b16 %v614, %v610
        %v719 = vpack.c.b16 %v615, %v611
        %v720 = vpack.c.b16 %v616, %v612
        %v721 = vpack.c.b16 %v617, %v613
        %v722 = vpack.c.b16 %v622, %v618
        %v723 = vpack.c.b16 %v623, %v619
        %v724 = vpack.c.b16 %v624, %v620
        %v725 = vpack.c.b16 %v625, %v621
        %v726 = vpack.c.b16 %v630, %v626
        %v727 = vpack.c.b16 %v631, %v627
        %v728 = vpack.c.b16 %v632, %v628
        %v729 = vpack.c.b16 %v633, %v629
        %v730 = vpack.c.b16 %v638, %v634
        %v731 = vpack.c.b16 %v639, %v635
        %v732 = vpack.c.b16 %v640, %v636
        %v733 = vpack.c.b16 %v641, %v637
        %v734 = vpack.c.b16 %v646, %v642
        %v735 = vpack.c.b16 %v647, %v643
        %v736 = vpack.c.b16 %v648, %v644
        %v737 = vpack.c.b16 %v649, %v645
        %v738 = vpack.c.b16 %v654, %v650
        %v739 = vpack.c.b16 %v655, %v651
        %v740 = vpack.c.b16 %v656, %v652
        %v741 = vpack.c.b16 %v657, %v653
        %v742 = vpack.c.b16 %v662, %v658
        %v743 = vpack.c.b16 %v663, %v659
        %v744 = vpack.c.b16 %v664, %v660
        %v745 = vpack.c.b16 %v665, %v661
        %v746 = vpack.c.b16 %v670, %v666
        %v747 = vpack.c.b16 %v671, %v667
        %v748 = vpack.c.b16 %v672, %v668
        %v749 = vpack.c.b16 %v673, %v669
        %v750 = vpack.c.b16 %v678, %v674
        %v751 = vpack.c.b16 %v679, %v675
        %v752 = vpack.c.b16 %v680, %v676
        %v753 = vpack.c.b16 %v681, %v677
        %v754 = vpack.c.b16 %v686, %v682
        %v755 = vpack.c.b16 %v687, %v683
        %v756 = vpack.c.b16 %v688, %v684
        %v757 = vpack.c.b16 %v689, %v685
        %v758 = vpack.c.b16 %v694, %v690
        %v759 = vpack.c.b16 %v695, %v691
        %v760 = vpack.c.b16 %v696, %v692
        %v761 = vpack.c.b16 %v697, %v693
        %826 = vmatprep.subr.bf16.mxu0 %v727
        %827 = vmatpush1.bf16.msra.mxu0 %v726
        %828 = vmatprep.subr.bf16.mxu0 %v723
        %829 = vmatpush1.bf16.msra.mxu0 %v722
        %830 = vmatprep.subr.bf16.mxu0 %v719
        %831 = vmatpush1.bf16.msra.mxu0 %v718
        %832 = vmatprep.subr.bf16.mxu0 %v715
        %833 = vmatpush1.bf16.msra.mxu0 %v714
        %834 = vmatprep.subr.bf16.mxu0 %v711
        %835 = vmatpush1.bf16.msra.mxu0 %v710
        %836 = vmatprep.subr.bf16.mxu0 %v707
        %837 = vmatpush1.bf16.msra.mxu0 %v706
        %838 = vmatprep.subr.bf16.mxu0 %v703
        %839 = vmatpush1.bf16.msra.mxu0 %v702
        %840 = vmatprep.subr.bf16.mxu0 %v699
        %841 = vmatpush1.bf16.msra.mxu0 %v698
        %842 = vmatprep.subr.bf16.mxu0 %v759
        %843 = vmatpush2.bf16.msra.mxu0 %v758
        %844 = vmatprep.subr.bf16.mxu0 %v755
        %845 = vmatpush2.bf16.msra.mxu0 %v754
        %846 = vmatprep.subr.bf16.mxu0 %v751
        %847 = vmatpush2.bf16.msra.mxu0 %v750
        %848 = vmatprep.subr.bf16.mxu0 %v747
        %849 = vmatpush2.bf16.msra.mxu0 %v746
        %850 = vmatprep.subr.bf16.mxu0 %v743
        %851 = vmatpush2.bf16.msra.mxu0 %v742
        %852 = vmatprep.subr.bf16.mxu0 %v739
        %853 = vmatpush2.bf16.msra.mxu0 %v738
        %854 = vmatprep.subr.bf16.mxu0 %v735
        %855 = vmatpush2.bf16.msra.mxu0 %v734
        %856 = vmatprep.subr.bf16.mxu0 %v731
        %857 = vmatpush2.bf16.msra.mxu0 %v730
        %858 = vmatprep.mubr.bf16.mxu0 %v419
        %859 = vmatmul.mubr.bf16.gmra.mxu0 %v418
        %v860 = vpop.f32.mrf.mxu0
        %v861 = vadd.f32 %v489, %v860
        %v862 = vpop.f32.mrf.mxu0
        %v863 = vadd.f32 %v493, %v862
        %v864 = vpop.f32.mrf.mxu0
        %v865 = vpop.f32.mrf.mxu0
        %866 = vdwg.mxu0
        %867 = vmatprep.subr.bf16.mxu0 %v729
        %868 = vmatpush1.bf16.msra.mxu0 %v728
        %869 = vmatprep.subr.bf16.mxu0 %v725
        %870 = vmatpush1.bf16.msra.mxu0 %v724
        %871 = vmatprep.subr.bf16.mxu0 %v721
        %872 = vmatpush1.bf16.msra.mxu0 %v720
        %873 = vmatprep.subr.bf16.mxu0 %v717
        %874 = vmatpush1.bf16.msra.mxu0 %v716
        %875 = vmatprep.subr.bf16.mxu0 %v713
        %876 = vmatpush1.bf16.msra.mxu0 %v712
        %877 = vmatprep.subr.bf16.mxu0 %v709
        %878 = vmatpush1.bf16.msra.mxu0 %v708
        %879 = vmatprep.subr.bf16.mxu0 %v705
        %880 = vmatpush1.bf16.msra.mxu0 %v704
        %881 = vmatprep.subr.bf16.mxu0 %v701
        %882 = vmatpush1.bf16.msra.mxu0 %v700
        %883 = vmatprep.subr.bf16.mxu0 %v761
        %884 = vmatpush2.bf16.msra.mxu0 %v760
        %885 = vmatprep.subr.bf16.mxu0 %v757
        %886 = vmatpush2.bf16.msra.mxu0 %v756
        %887 = vmatprep.subr.bf16.mxu0 %v753
        %888 = vmatpush2.bf16.msra.mxu0 %v752
        %889 = vmatprep.subr.bf16.mxu0 %v749
        %890 = vmatpush2.bf16.msra.mxu0 %v748
        %891 = vmatprep.subr.bf16.mxu0 %v745
        %892 = vmatpush2.bf16.msra.mxu0 %v744
        %893 = vmatprep.subr.bf16.mxu0 %v741
        %894 = vmatpush2.bf16.msra.mxu0 %v740
        %895 = vmatprep.subr.bf16.mxu0 %v737
        %896 = vmatpush2.bf16.msra.mxu0 %v736
        %897 = vmatprep.subr.bf16.mxu0 %v733
        %898 = vmatpush2.bf16.msra.mxu0 %v732
        %899 = vmatprep.mubr.bf16.mxu0 %v419
        %900 = vmatmul.mubr.bf16.gmra.mxu0 %v418
        %v901 = vpop.f32.mrf.mxu0
        %v902 = vadd.f32 %v497, %v901
        %v903 = vpop.f32.mrf.mxu0
        %v904 = vadd.f32 %v501, %v903
        %v905 = vpop.f32.mrf.mxu0
        %v906 = vpop.f32.mrf.mxu0
        %907 = vdwg.mxu0
        %vm908 = vcmp.gt.f32.partialorder %v861, 0.0
        %vm909 = vcmp.gt.f32.partialorder %v863, 0.0
        %vm910 = vcmp.gt.f32.partialorder %v902, 0.0
        %vm911 = vcmp.gt.f32.partialorder %v904, 0.0
        %v912 = vmul.f32 %v861, 0.01
        %v913 = vmul.f32 %v863, 0.01
        %v914 = vmul.f32 %v902, 0.01
        %v915 = vmul.f32 %v904, 0.01
        %v916 = vsel %vm908, %v861, %v912
        %v917 = vsel %vm909, %v863, %v913
        %v918 = vsel %vm910, %v902, %v914
        %v919 = vsel %vm911, %v904, %v915
        %v920 = vpack.c.bf16 %v916, %v916
        %v921 = vpack.c.bf16 %v917, %v917
        %v922 = vpack.c.bf16 %v918, %v918
        %v923 = vpack.c.bf16 %v919, %v919
        %v924 = vld [vmem:[%s5] sm:$0xff]
        %v925 = vld [vmem:[%s5 + $0x8] sm:$0xff]
        %v926 = vld [vmem:[%s5 + $0x10] sm:$0xff]
        %v927 = vld [vmem:[%s5 + $0x18] sm:$0xff]
        %v928 = vld [vmem:[%s5 + $0x20] sm:$0xff]
        %v929 = vld [vmem:[%s5 + $0x28] sm:$0xff]
        %v930 = vld [vmem:[%s5 + $0x30] sm:$0xff]
        %v931 = vld [vmem:[%s5 + $0x38] sm:$0xff]
        %v932 = vld [vmem:[%s5 + $0x40] sm:$0xff]
        %v933 = vld [vmem:[%s5 + $0x48] sm:$0xff]
        %v934 = vld [vmem:[%s5 + $0x50] sm:$0xff]
        %v935 = vld [vmem:[%s5 + $0x58] sm:$0xff]
        %v936 = vld [vmem:[%s5 + $0x60] sm:$0xff]
        %v937 = vld [vmem:[%s5 + $0x68] sm:$0xff]
        %v938 = vld [vmem:[%s5 + $0x70] sm:$0xff]
        %v939 = vld [vmem:[%s5 + $0x78] sm:$0xff]
        %v940 = vld [vmem:[%s5 + $0x80] sm:$0xff]
        %v941 = vld [vmem:[%s5 + $0x88] sm:$0xff]
        %v942 = vld [vmem:[%s5 + $0x90] sm:$0xff]
        %v943 = vld [vmem:[%s5 + $0x98] sm:$0xff]
        %v944 = vld [vmem:[%s5 + $0xa0] sm:$0xff]
        %v945 = vld [vmem:[%s5 + $0xa8] sm:$0xff]
        %v946 = vld [vmem:[%s5 + $0xb0] sm:$0xff]
        %v947 = vld [vmem:[%s5 + $0xb8] sm:$0xff]
        %v948 = vld [vmem:[%s5 + $0xc0] sm:$0xff]
        %v949 = vld [vmem:[%s5 + $0xc8] sm:$0xff]
        %v950 = vld [vmem:[%s5 + $0xd0] sm:$0xff]
        %v951 = vld [vmem:[%s5 + $0xd8] sm:$0xff]
        %v952 = vld [vmem:[%s5 + $0xe0] sm:$0xff]
        %v953 = vld [vmem:[%s5 + $0xe8] sm:$0xff]
        %v954 = vld [vmem:[%s5 + $0xf0] sm:$0xff]
        %v955 = vld [vmem:[%s5 + $0xf8] sm:$0xff]
        %v956 = vld [vmem:[%s5 + $0x100] sm:$0xff]
        %v957 = vld [vmem:[%s5 + $0x108] sm:$0xff]
        %v958 = vld [vmem:[%s5 + $0x110] sm:$0xff]
        %v959 = vld [vmem:[%s5 + $0x118] sm:$0xff]
        %v960 = vld [vmem:[%s5 + $0x120] sm:$0xff]
        %v961 = vld [vmem:[%s5 + $0x128] sm:$0xff]
        %v962 = vld [vmem:[%s5 + $0x130] sm:$0xff]
        %v963 = vld [vmem:[%s5 + $0x138] sm:$0xff]
        %v964 = vld [vmem:[%s5 + $0x140] sm:$0xff]
        %v965 = vld [vmem:[%s5 + $0x148] sm:$0xff]
        %v966 = vld [vmem:[%s5 + $0x150] sm:$0xff]
        %v967 = vld [vmem:[%s5 + $0x158] sm:$0xff]
        %v968 = vld [vmem:[%s5 + $0x160] sm:$0xff]
        %v969 = vld [vmem:[%s5 + $0x168] sm:$0xff]
        %v970 = vld [vmem:[%s5 + $0x170] sm:$0xff]
        %v971 = vld [vmem:[%s5 + $0x178] sm:$0xff]
        %v972 = vld [vmem:[%s5 + $0x180] sm:$0xff]
        %v973 = vld [vmem:[%s5 + $0x188] sm:$0xff]
        %v974 = vld [vmem:[%s5 + $0x190] sm:$0xff]
        %v975 = vld [vmem:[%s5 + $0x198] sm:$0xff]
        %v976 = vld [vmem:[%s5 + $0x1a0] sm:$0xff]
        %v977 = vld [vmem:[%s5 + $0x1a8] sm:$0xff]
        %v978 = vld [vmem:[%s5 + $0x1b0] sm:$0xff]
        %v979 = vld [vmem:[%s5 + $0x1b8] sm:$0xff]
        %v980 = vld [vmem:[%s5 + $0x1c0] sm:$0xff]
        %v981 = vld [vmem:[%s5 + $0x1c8] sm:$0xff]
        %v982 = vld [vmem:[%s5 + $0x1d0] sm:$0xff]
        %v983 = vld [vmem:[%s5 + $0x1d8] sm:$0xff]
        %v984 = vld [vmem:[%s5 + $0x1e0] sm:$0xff]
        %v985 = vld [vmem:[%s5 + $0x1e8] sm:$0xff]
        %v986 = vld [vmem:[%s5 + $0x1f0] sm:$0xff]
        %v987 = vld [vmem:[%s5 + $0x1f8] sm:$0xff]
        %v988 = vld [vmem:[%s5 + $0x200] sm:$0xff]
        %v989 = vld [vmem:[%s5 + $0x208] sm:$0xff]
        %v990 = vld [vmem:[%s5 + $0x210] sm:$0xff]
        %v991 = vld [vmem:[%s5 + $0x218] sm:$0xff]
        %v992 = vld [vmem:[%s5 + $0x220] sm:$0xff]
        %v993 = vld [vmem:[%s5 + $0x228] sm:$0xff]
        %v994 = vld [vmem:[%s5 + $0x230] sm:$0xff]
        %v995 = vld [vmem:[%s5 + $0x238] sm:$0xff]
        %v996 = vld [vmem:[%s5 + $0x240] sm:$0xff]
        %v997 = vld [vmem:[%s5 + $0x248] sm:$0xff]
        %v998 = vld [vmem:[%s5 + $0x250] sm:$0xff]
        %v999 = vld [vmem:[%s5 + $0x258] sm:$0xff]
        %v1000 = vld [vmem:[%s5 + $0x260] sm:$0xff]
        %v1001 = vld [vmem:[%s5 + $0x268] sm:$0xff]
        %v1002 = vld [vmem:[%s5 + $0x270] sm:$0xff]
        %v1003 = vld [vmem:[%s5 + $0x278] sm:$0xff]
        %v1004 = vld [vmem:[%s5 + $0x280] sm:$0xff]
        %v1005 = vld [vmem:[%s5 + $0x288] sm:$0xff]
        %v1006 = vld [vmem:[%s5 + $0x290] sm:$0xff]
        %v1007 = vld [vmem:[%s5 + $0x298] sm:$0xff]
        %v1008 = vld [vmem:[%s5 + $0x2a0] sm:$0xff]
        %v1009 = vld [vmem:[%s5 + $0x2a8] sm:$0xff]
        %v1010 = vld [vmem:[%s5 + $0x2b0] sm:$0xff]
        %v1011 = vld [vmem:[%s5 + $0x2b8] sm:$0xff]
        %v1012 = vld [vmem:[%s5 + $0x2c0] sm:$0xff]
        %v1013 = vld [vmem:[%s5 + $0x2c8] sm:$0xff]
        %v1014 = vld [vmem:[%s5 + $0x2d0] sm:$0xff]
        %v1015 = vld [vmem:[%s5 + $0x2d8] sm:$0xff]
        %v1016 = vld [vmem:[%s5 + $0x2e0] sm:$0xff]
        %v1017 = vld [vmem:[%s5 + $0x2e8] sm:$0xff]
        %v1018 = vld [vmem:[%s5 + $0x2f0] sm:$0xff]
        %v1019 = vld [vmem:[%s5 + $0x2f8] sm:$0xff]
        %v1020 = vld [vmem:[%s5 + $0x300] sm:$0xff]
        %v1021 = vld [vmem:[%s5 + $0x308] sm:$0xff]
        %v1022 = vld [vmem:[%s5 + $0x310] sm:$0xff]
        %v1023 = vld [vmem:[%s5 + $0x318] sm:$0xff]
        %v1024 = vld [vmem:[%s5 + $0x320] sm:$0xff]
        %v1025 = vld [vmem:[%s5 + $0x328] sm:$0xff]
        %v1026 = vld [vmem:[%s5 + $0x330] sm:$0xff]
        %v1027 = vld [vmem:[%s5 + $0x338] sm:$0xff]
        %v1028 = vld [vmem:[%s5 + $0x340] sm:$0xff]
        %v1029 = vld [vmem:[%s5 + $0x348] sm:$0xff]
        %v1030 = vld [vmem:[%s5 + $0x350] sm:$0xff]
        %v1031 = vld [vmem:[%s5 + $0x358] sm:$0xff]
        %v1032 = vld [vmem:[%s5 + $0x360] sm:$0xff]
        %v1033 = vld [vmem:[%s5 + $0x368] sm:$0xff]
        %v1034 = vld [vmem:[%s5 + $0x370] sm:$0xff]
        %v1035 = vld [vmem:[%s5 + $0x378] sm:$0xff]
        %v1036 = vld [vmem:[%s5 + $0x380] sm:$0xff]
        %v1037 = vld [vmem:[%s5 + $0x388] sm:$0xff]
        %v1038 = vld [vmem:[%s5 + $0x390] sm:$0xff]
        %v1039 = vld [vmem:[%s5 + $0x398] sm:$0xff]
        %v1040 = vld [vmem:[%s5 + $0x3a0] sm:$0xff]
        %v1041 = vld [vmem:[%s5 + $0x3a8] sm:$0xff]
        %v1042 = vld [vmem:[%s5 + $0x3b0] sm:$0xff]
        %v1043 = vld [vmem:[%s5 + $0x3b8] sm:$0xff]
        %v1044 = vld [vmem:[%s5 + $0x3c0] sm:$0xff]
        %v1045 = vld [vmem:[%s5 + $0x3c8] sm:$0xff]
        %v1046 = vld [vmem:[%s5 + $0x3d0] sm:$0xff]
        %v1047 = vld [vmem:[%s5 + $0x3d8] sm:$0xff]
        %v1048 = vld [vmem:[%s5 + $0x3e0] sm:$0xff]
        %v1049 = vld [vmem:[%s5 + $0x3e8] sm:$0xff]
        %v1050 = vld [vmem:[%s5 + $0x3f0] sm:$0xff]
        %v1051 = vld [vmem:[%s5 + $0x3f8] sm:$0xff]
        %v1052 = vld [vmem:[%s5 + $0x400] sm:$0xff]
        %v1053 = vld [vmem:[%s5 + $0x408] sm:$0xff]
        %v1054 = vld [vmem:[%s5 + $0x410] sm:$0xff]
        %v1055 = vld [vmem:[%s5 + $0x418] sm:$0xff]
        %v1056 = vld [vmem:[%s5 + $0x420] sm:$0xff]
        %v1057 = vld [vmem:[%s5 + $0x428] sm:$0xff]
        %v1058 = vld [vmem:[%s5 + $0x430] sm:$0xff]
        %v1059 = vld [vmem:[%s5 + $0x438] sm:$0xff]
        %v1060 = vld [vmem:[%s5 + $0x440] sm:$0xff]
        %v1061 = vld [vmem:[%s5 + $0x448] sm:$0xff]
        %v1062 = vld [vmem:[%s5 + $0x450] sm:$0xff]
        %v1063 = vld [vmem:[%s5 + $0x458] sm:$0xff]
        %v1064 = vld [vmem:[%s5 + $0x460] sm:$0xff]
        %v1065 = vld [vmem:[%s5 + $0x468] sm:$0xff]
        %v1066 = vld [vmem:[%s5 + $0x470] sm:$0xff]
        %v1067 = vld [vmem:[%s5 + $0x478] sm:$0xff]
        %v1068 = vld [vmem:[%s5 + $0x480] sm:$0xff]
        %v1069 = vld [vmem:[%s5 + $0x488] sm:$0xff]
        %v1070 = vld [vmem:[%s5 + $0x490] sm:$0xff]
        %v1071 = vld [vmem:[%s5 + $0x498] sm:$0xff]
        %v1072 = vld [vmem:[%s5 + $0x4a0] sm:$0xff]
        %v1073 = vld [vmem:[%s5 + $0x4a8] sm:$0xff]
        %v1074 = vld [vmem:[%s5 + $0x4b0] sm:$0xff]
        %v1075 = vld [vmem:[%s5 + $0x4b8] sm:$0xff]
        %v1076 = vld [vmem:[%s5 + $0x4c0] sm:$0xff]
        %v1077 = vld [vmem:[%s5 + $0x4c8] sm:$0xff]
        %v1078 = vld [vmem:[%s5 + $0x4d0] sm:$0xff]
        %v1079 = vld [vmem:[%s5 + $0x4d8] sm:$0xff]
        %v1080 = vld [vmem:[%s5 + $0x4e0] sm:$0xff]
        %v1081 = vld [vmem:[%s5 + $0x4e8] sm:$0xff]
        %v1082 = vld [vmem:[%s5 + $0x4f0] sm:$0xff]
        %v1083 = vld [vmem:[%s5 + $0x4f8] sm:$0xff]
        %v1084 = vld [vmem:[%s5 + $0x500] sm:$0xff]
        %v1085 = vld [vmem:[%s5 + $0x508] sm:$0xff]
        %v1086 = vld [vmem:[%s5 + $0x510] sm:$0xff]
        %v1087 = vld [vmem:[%s5 + $0x518] sm:$0xff]
        %v1088 = vld [vmem:[%s5 + $0x520] sm:$0xff]
        %v1089 = vld [vmem:[%s5 + $0x528] sm:$0xff]
        %v1090 = vld [vmem:[%s5 + $0x530] sm:$0xff]
        %v1091 = vld [vmem:[%s5 + $0x538] sm:$0xff]
        %v1092 = vld [vmem:[%s5 + $0x540] sm:$0xff]
        %v1093 = vld [vmem:[%s5 + $0x548] sm:$0xff]
        %v1094 = vld [vmem:[%s5 + $0x550] sm:$0xff]
        %v1095 = vld [vmem:[%s5 + $0x558] sm:$0xff]
        %v1096 = vld [vmem:[%s5 + $0x560] sm:$0xff]
        %v1097 = vld [vmem:[%s5 + $0x568] sm:$0xff]
        %v1098 = vld [vmem:[%s5 + $0x570] sm:$0xff]
        %v1099 = vld [vmem:[%s5 + $0x578] sm:$0xff]
        %v1100 = vld [vmem:[%s5 + $0x580] sm:$0xff]
        %v1101 = vld [vmem:[%s5 + $0x588] sm:$0xff]
        %v1102 = vld [vmem:[%s5 + $0x590] sm:$0xff]
        %v1103 = vld [vmem:[%s5 + $0x598] sm:$0xff]
        %v1104 = vld [vmem:[%s5 + $0x5a0] sm:$0xff]
        %v1105 = vld [vmem:[%s5 + $0x5a8] sm:$0xff]
        %v1106 = vld [vmem:[%s5 + $0x5b0] sm:$0xff]
        %v1107 = vld [vmem:[%s5 + $0x5b8] sm:$0xff]
        %v1108 = vld [vmem:[%s5 + $0x5c0] sm:$0xff]
        %v1109 = vld [vmem:[%s5 + $0x5c8] sm:$0xff]
        %v1110 = vld [vmem:[%s5 + $0x5d0] sm:$0xff]
        %v1111 = vld [vmem:[%s5 + $0x5d8] sm:$0xff]
        %v1112 = vld [vmem:[%s5 + $0x5e0] sm:$0xff]
        %v1113 = vld [vmem:[%s5 + $0x5e8] sm:$0xff]
        %v1114 = vld [vmem:[%s5 + $0x5f0] sm:$0xff]
        %v1115 = vld [vmem:[%s5 + $0x5f8] sm:$0xff]
        %v1116 = vld [vmem:[%s5 + $0x600] sm:$0xff]
        %v1117 = vld [vmem:[%s5 + $0x608] sm:$0xff]
        %v1118 = vld [vmem:[%s5 + $0x610] sm:$0xff]
        %v1119 = vld [vmem:[%s5 + $0x618] sm:$0xff]
        %v1120 = vld [vmem:[%s5 + $0x620] sm:$0xff]
        %v1121 = vld [vmem:[%s5 + $0x628] sm:$0xff]
        %v1122 = vld [vmem:[%s5 + $0x630] sm:$0xff]
        %v1123 = vld [vmem:[%s5 + $0x638] sm:$0xff]
        %v1124 = vld [vmem:[%s5 + $0x640] sm:$0xff]
        %v1125 = vld [vmem:[%s5 + $0x648] sm:$0xff]
        %v1126 = vld [vmem:[%s5 + $0x650] sm:$0xff]
        %v1127 = vld [vmem:[%s5 + $0x658] sm:$0xff]
        %v1128 = vld [vmem:[%s5 + $0x660] sm:$0xff]
        %v1129 = vld [vmem:[%s5 + $0x668] sm:$0xff]
        %v1130 = vld [vmem:[%s5 + $0x670] sm:$0xff]
        %v1131 = vld [vmem:[%s5 + $0x678] sm:$0xff]
        %v1132 = vld [vmem:[%s5 + $0x680] sm:$0xff]
        %v1133 = vld [vmem:[%s5 + $0x688] sm:$0xff]
        %v1134 = vld [vmem:[%s5 + $0x690] sm:$0xff]
        %v1135 = vld [vmem:[%s5 + $0x698] sm:$0xff]
        %v1136 = vld [vmem:[%s5 + $0x6a0] sm:$0xff]
        %v1137 = vld [vmem:[%s5 + $0x6a8] sm:$0xff]
        %v1138 = vld [vmem:[%s5 + $0x6b0] sm:$0xff]
        %v1139 = vld [vmem:[%s5 + $0x6b8] sm:$0xff]
        %v1140 = vld [vmem:[%s5 + $0x6c0] sm:$0xff]
        %v1141 = vld [vmem:[%s5 + $0x6c8] sm:$0xff]
        %v1142 = vld [vmem:[%s5 + $0x6d0] sm:$0xff]
        %v1143 = vld [vmem:[%s5 + $0x6d8] sm:$0xff]
        %v1144 = vld [vmem:[%s5 + $0x6e0] sm:$0xff]
        %v1145 = vld [vmem:[%s5 + $0x6e8] sm:$0xff]
        %v1146 = vld [vmem:[%s5 + $0x6f0] sm:$0xff]
        %v1147 = vld [vmem:[%s5 + $0x6f8] sm:$0xff]
        %v1148 = vld [vmem:[%s5 + $0x700] sm:$0xff]
        %v1149 = vld [vmem:[%s5 + $0x708] sm:$0xff]
        %v1150 = vld [vmem:[%s5 + $0x710] sm:$0xff]
        %v1151 = vld [vmem:[%s5 + $0x718] sm:$0xff]
        %v1152 = vld [vmem:[%s5 + $0x720] sm:$0xff]
        %v1153 = vld [vmem:[%s5 + $0x728] sm:$0xff]
        %v1154 = vld [vmem:[%s5 + $0x730] sm:$0xff]
        %v1155 = vld [vmem:[%s5 + $0x738] sm:$0xff]
        %v1156 = vld [vmem:[%s5 + $0x740] sm:$0xff]
        %v1157 = vld [vmem:[%s5 + $0x748] sm:$0xff]
        %v1158 = vld [vmem:[%s5 + $0x750] sm:$0xff]
        %v1159 = vld [vmem:[%s5 + $0x758] sm:$0xff]
        %v1160 = vld [vmem:[%s5 + $0x760] sm:$0xff]
        %v1161 = vld [vmem:[%s5 + $0x768] sm:$0xff]
        %v1162 = vld [vmem:[%s5 + $0x770] sm:$0xff]
        %v1163 = vld [vmem:[%s5 + $0x778] sm:$0xff]
        %v1164 = vld [vmem:[%s5 + $0x780] sm:$0xff]
        %v1165 = vld [vmem:[%s5 + $0x788] sm:$0xff]
        %v1166 = vld [vmem:[%s5 + $0x790] sm:$0xff]
        %v1167 = vld [vmem:[%s5 + $0x798] sm:$0xff]
        %v1168 = vld [vmem:[%s5 + $0x7a0] sm:$0xff]
        %v1169 = vld [vmem:[%s5 + $0x7a8] sm:$0xff]
        %v1170 = vld [vmem:[%s5 + $0x7b0] sm:$0xff]
        %v1171 = vld [vmem:[%s5 + $0x7b8] sm:$0xff]
        %v1172 = vld [vmem:[%s5 + $0x7c0] sm:$0xff]
        %v1173 = vld [vmem:[%s5 + $0x7c8] sm:$0xff]
        %v1174 = vld [vmem:[%s5 + $0x7d0] sm:$0xff]
        %v1175 = vld [vmem:[%s5 + $0x7d8] sm:$0xff]
        %v1176 = vld [vmem:[%s5 + $0x7e0] sm:$0xff]
        %v1177 = vld [vmem:[%s5 + $0x7e8] sm:$0xff]
        %v1178 = vld [vmem:[%s5 + $0x7f0] sm:$0xff]
        %v1179 = vld [vmem:[%s5 + $0x7f8] sm:$0xff]
        %v1180 = vld [vmem:[%s6] sm:$0xff]
        %v1182 = vlaneseq
        %v1183 = vshrl.u32 %v1182, 7
        %v1184 = vsub.s32 0, %v1183
        %v1185 = vrot.slane %v1180, %v1184
        %v1186 = vlaneseq
        %v1187 = vshrl.u32 %v1186, 7
        %v1188 = vsub.s32 1, %v1187
        %v1189 = vrot.slane %v1180, %v1188
        %v1190 = vlaneseq
        %v1191 = vshrl.u32 %v1190, 7
        %v1192 = vsub.s32 2, %v1191
        %v1193 = vrot.slane %v1180, %v1192
        %v1194 = vlaneseq
        %v1195 = vshrl.u32 %v1194, 7
        %v1196 = vsub.s32 3, %v1195
        %v1197 = vrot.slane %v1180, %v1196
        %v1198 = vlaneseq
        %v1199 = vshrl.u32 %v1198, 7
        %v1200 = vsub.s32 4, %v1199
        %v1201 = vrot.slane %v1180, %v1200
        %v1202 = vlaneseq
        %v1203 = vshrl.u32 %v1202, 7
        %v1204 = vsub.s32 5, %v1203
        %v1205 = vrot.slane %v1180, %v1204
        %v1206 = vlaneseq
        %v1207 = vshrl.u32 %v1206, 7
        %v1208 = vsub.s32 6, %v1207
        %v1209 = vrot.slane %v1180, %v1208
        %v1210 = vlaneseq
        %v1211 = vshrl.u32 %v1210, 7
        %v1212 = vsub.s32 7, %v1211
        %v1213 = vrot.slane %v1180, %v1212
        %v1478 = vunpack.c.l.b16 %v924
        %v1479 = vunpack.c.h.b16 %v924
        %v1480 = vunpack.c.l.b16 %v925
        %v1481 = vunpack.c.h.b16 %v925
        %v1482 = vunpack.c.l.b16 %v926
        %v1483 = vunpack.c.h.b16 %v926
        %v1484 = vunpack.c.l.b16 %v927
        %v1485 = vunpack.c.h.b16 %v927
        %v1486 = vunpack.c.l.b16 %v928
        %v1487 = vunpack.c.h.b16 %v928
        %v1488 = vunpack.c.l.b16 %v929
        %v1489 = vunpack.c.h.b16 %v929
        %v1490 = vunpack.c.l.b16 %v930
        %v1491 = vunpack.c.h.b16 %v930
        %v1492 = vunpack.c.l.b16 %v931
        %v1493 = vunpack.c.h.b16 %v931
        %v1494 = vunpack.c.l.b16 %v932
        %v1495 = vunpack.c.h.b16 %v932
        %v1496 = vunpack.c.l.b16 %v933
        %v1497 = vunpack.c.h.b16 %v933
        %v1498 = vunpack.c.l.b16 %v934
        %v1499 = vunpack.c.h.b16 %v934
        %v1500 = vunpack.c.l.b16 %v935
        %v1501 = vunpack.c.h.b16 %v935
        %v1502 = vunpack.c.l.b16 %v936
        %v1503 = vunpack.c.h.b16 %v936
        %v1504 = vunpack.c.l.b16 %v937
        %v1505 = vunpack.c.h.b16 %v937
        %v1506 = vunpack.c.l.b16 %v938
        %v1507 = vunpack.c.h.b16 %v938
        %v1508 = vunpack.c.l.b16 %v939
        %v1509 = vunpack.c.h.b16 %v939
        %v1510 = vunpack.c.l.b16 %v940
        %v1511 = vunpack.c.h.b16 %v940
        %v1512 = vunpack.c.l.b16 %v941
        %v1513 = vunpack.c.h.b16 %v941
        %v1514 = vunpack.c.l.b16 %v942
        %v1515 = vunpack.c.h.b16 %v942
        %v1516 = vunpack.c.l.b16 %v943
        %v1517 = vunpack.c.h.b16 %v943
        %v1518 = vunpack.c.l.b16 %v944
        %v1519 = vunpack.c.h.b16 %v944
        %v1520 = vunpack.c.l.b16 %v945
        %v1521 = vunpack.c.h.b16 %v945
        %v1522 = vunpack.c.l.b16 %v946
        %v1523 = vunpack.c.h.b16 %v946
        %v1524 = vunpack.c.l.b16 %v947
        %v1525 = vunpack.c.h.b16 %v947
        %v1526 = vunpack.c.l.b16 %v948
        %v1527 = vunpack.c.h.b16 %v948
        %v1528 = vunpack.c.l.b16 %v949
        %v1529 = vunpack.c.h.b16 %v949
        %v1530 = vunpack.c.l.b16 %v950
        %v1531 = vunpack.c.h.b16 %v950
        %v1532 = vunpack.c.l.b16 %v951
        %v1533 = vunpack.c.h.b16 %v951
        %v1534 = vunpack.c.l.b16 %v952
        %v1535 = vunpack.c.h.b16 %v952
        %v1536 = vunpack.c.l.b16 %v953
        %v1537 = vunpack.c.h.b16 %v953
        %v1538 = vunpack.c.l.b16 %v954
        %v1539 = vunpack.c.h.b16 %v954
        %v1540 = vunpack.c.l.b16 %v955
        %v1541 = vunpack.c.h.b16 %v955
        %v1542 = vunpack.c.l.b16 %v956
        %v1543 = vunpack.c.h.b16 %v956
        %v1544 = vunpack.c.l.b16 %v957
        %v1545 = vunpack.c.h.b16 %v957
        %v1546 = vunpack.c.l.b16 %v958
        %v1547 = vunpack.c.h.b16 %v958
        %v1548 = vunpack.c.l.b16 %v959
        %v1549 = vunpack.c.h.b16 %v959
        %v1550 = vunpack.c.l.b16 %v960
        %v1551 = vunpack.c.h.b16 %v960
        %v1552 = vunpack.c.l.b16 %v961
        %v1553 = vunpack.c.h.b16 %v961
        %v1554 = vunpack.c.l.b16 %v962
        %v1555 = vunpack.c.h.b16 %v962
        %v1556 = vunpack.c.l.b16 %v963
        %v1557 = vunpack.c.h.b16 %v963
        %v1558 = vunpack.c.l.b16 %v964
        %v1559 = vunpack.c.h.b16 %v964
        %v1560 = vunpack.c.l.b16 %v965
        %v1561 = vunpack.c.h.b16 %v965
        %v1562 = vunpack.c.l.b16 %v966
        %v1563 = vunpack.c.h.b16 %v966
        %v1564 = vunpack.c.l.b16 %v967
        %v1565 = vunpack.c.h.b16 %v967
        %v1566 = vunpack.c.l.b16 %v968
        %v1567 = vunpack.c.h.b16 %v968
        %v1568 = vunpack.c.l.b16 %v969
        %v1569 = vunpack.c.h.b16 %v969
        %v1570 = vunpack.c.l.b16 %v970
        %v1571 = vunpack.c.h.b16 %v970
        %v1572 = vunpack.c.l.b16 %v971
        %v1573 = vunpack.c.h.b16 %v971
        %v1574 = vunpack.c.l.b16 %v972
        %v1575 = vunpack.c.h.b16 %v972
        %v1576 = vunpack.c.l.b16 %v973
        %v1577 = vunpack.c.h.b16 %v973
        %v1578 = vunpack.c.l.b16 %v974
        %v1579 = vunpack.c.h.b16 %v974
        %v1580 = vunpack.c.l.b16 %v975
        %v1581 = vunpack.c.h.b16 %v975
        %v1582 = vunpack.c.l.b16 %v976
        %v1583 = vunpack.c.h.b16 %v976
        %v1584 = vunpack.c.l.b16 %v977
        %v1585 = vunpack.c.h.b16 %v977
        %v1586 = vunpack.c.l.b16 %v978
        %v1587 = vunpack.c.h.b16 %v978
        %v1588 = vunpack.c.l.b16 %v979
        %v1589 = vunpack.c.h.b16 %v979
        %v1590 = vunpack.c.l.b16 %v980
        %v1591 = vunpack.c.h.b16 %v980
        %v1592 = vunpack.c.l.b16 %v981
        %v1593 = vunpack.c.h.b16 %v981
        %v1594 = vunpack.c.l.b16 %v982
        %v1595 = vunpack.c.h.b16 %v982
        %v1596 = vunpack.c.l.b16 %v983
        %v1597 = vunpack.c.h.b16 %v983
        %v1598 = vunpack.c.l.b16 %v984
        %v1599 = vunpack.c.h.b16 %v984
        %v1600 = vunpack.c.l.b16 %v985
        %v1601 = vunpack.c.h.b16 %v985
        %v1602 = vunpack.c.l.b16 %v986
        %v1603 = vunpack.c.h.b16 %v986
        %v1604 = vunpack.c.l.b16 %v987
        %v1605 = vunpack.c.h.b16 %v987
        %v1606 = vunpack.c.l.b16 %v988
        %v1607 = vunpack.c.h.b16 %v988
        %v1608 = vunpack.c.l.b16 %v989
        %v1609 = vunpack.c.h.b16 %v989
        %v1610 = vunpack.c.l.b16 %v990
        %v1611 = vunpack.c.h.b16 %v990
        %v1612 = vunpack.c.l.b16 %v991
        %v1613 = vunpack.c.h.b16 %v991
        %v1614 = vunpack.c.l.b16 %v992
        %v1615 = vunpack.c.h.b16 %v992
        %v1616 = vunpack.c.l.b16 %v993
        %v1617 = vunpack.c.h.b16 %v993
        %v1618 = vunpack.c.l.b16 %v994
        %v1619 = vunpack.c.h.b16 %v994
        %v1620 = vunpack.c.l.b16 %v995
        %v1621 = vunpack.c.h.b16 %v995
        %v1622 = vunpack.c.l.b16 %v996
        %v1623 = vunpack.c.h.b16 %v996
        %v1624 = vunpack.c.l.b16 %v997
        %v1625 = vunpack.c.h.b16 %v997
        %v1626 = vunpack.c.l.b16 %v998
        %v1627 = vunpack.c.h.b16 %v998
        %v1628 = vunpack.c.l.b16 %v999
        %v1629 = vunpack.c.h.b16 %v999
        %v1630 = vunpack.c.l.b16 %v1000
        %v1631 = vunpack.c.h.b16 %v1000
        %v1632 = vunpack.c.l.b16 %v1001
        %v1633 = vunpack.c.h.b16 %v1001
        %v1634 = vunpack.c.l.b16 %v1002
        %v1635 = vunpack.c.h.b16 %v1002
        %v1636 = vunpack.c.l.b16 %v1003
        %v1637 = vunpack.c.h.b16 %v1003
        %v1638 = vunpack.c.l.b16 %v1004
        %v1639 = vunpack.c.h.b16 %v1004
        %v1640 = vunpack.c.l.b16 %v1005
        %v1641 = vunpack.c.h.b16 %v1005
        %v1642 = vunpack.c.l.b16 %v1006
        %v1643 = vunpack.c.h.b16 %v1006
        %v1644 = vunpack.c.l.b16 %v1007
        %v1645 = vunpack.c.h.b16 %v1007
        %v1646 = vunpack.c.l.b16 %v1008
        %v1647 = vunpack.c.h.b16 %v1008
        %v1648 = vunpack.c.l.b16 %v1009
        %v1649 = vunpack.c.h.b16 %v1009
        %v1650 = vunpack.c.l.b16 %v1010
        %v1651 = vunpack.c.h.b16 %v1010
        %v1652 = vunpack.c.l.b16 %v1011
        %v1653 = vunpack.c.h.b16 %v1011
        %v1654 = vunpack.c.l.b16 %v1012
        %v1655 = vunpack.c.h.b16 %v1012
        %v1656 = vunpack.c.l.b16 %v1013
        %v1657 = vunpack.c.h.b16 %v1013
        %v1658 = vunpack.c.l.b16 %v1014
        %v1659 = vunpack.c.h.b16 %v1014
        %v1660 = vunpack.c.l.b16 %v1015
        %v1661 = vunpack.c.h.b16 %v1015
        %v1662 = vunpack.c.l.b16 %v1016
        %v1663 = vunpack.c.h.b16 %v1016
        %v1664 = vunpack.c.l.b16 %v1017
        %v1665 = vunpack.c.h.b16 %v1017
        %v1666 = vunpack.c.l.b16 %v1018
        %v1667 = vunpack.c.h.b16 %v1018
        %v1668 = vunpack.c.l.b16 %v1019
        %v1669 = vunpack.c.h.b16 %v1019
        %v1670 = vunpack.c.l.b16 %v1020
        %v1671 = vunpack.c.h.b16 %v1020
        %v1672 = vunpack.c.l.b16 %v1021
        %v1673 = vunpack.c.h.b16 %v1021
        %v1674 = vunpack.c.l.b16 %v1022
        %v1675 = vunpack.c.h.b16 %v1022
        %v1676 = vunpack.c.l.b16 %v1023
        %v1677 = vunpack.c.h.b16 %v1023
        %v1678 = vunpack.c.l.b16 %v1024
        %v1679 = vunpack.c.h.b16 %v1024
        %v1680 = vunpack.c.l.b16 %v1025
        %v1681 = vunpack.c.h.b16 %v1025
        %v1682 = vunpack.c.l.b16 %v1026
        %v1683 = vunpack.c.h.b16 %v1026
        %v1684 = vunpack.c.l.b16 %v1027
        %v1685 = vunpack.c.h.b16 %v1027
        %v1686 = vunpack.c.l.b16 %v1028
        %v1687 = vunpack.c.h.b16 %v1028
        %v1688 = vunpack.c.l.b16 %v1029
        %v1689 = vunpack.c.h.b16 %v1029
        %v1690 = vunpack.c.l.b16 %v1030
        %v1691 = vunpack.c.h.b16 %v1030
        %v1692 = vunpack.c.l.b16 %v1031
        %v1693 = vunpack.c.h.b16 %v1031
        %v1694 = vunpack.c.l.b16 %v1032
        %v1695 = vunpack.c.h.b16 %v1032
        %v1696 = vunpack.c.l.b16 %v1033
        %v1697 = vunpack.c.h.b16 %v1033
        %v1698 = vunpack.c.l.b16 %v1034
        %v1699 = vunpack.c.h.b16 %v1034
        %v1700 = vunpack.c.l.b16 %v1035
        %v1701 = vunpack.c.h.b16 %v1035
        %v1702 = vunpack.c.l.b16 %v1036
        %v1703 = vunpack.c.h.b16 %v1036
        %v1704 = vunpack.c.l.b16 %v1037
        %v1705 = vunpack.c.h.b16 %v1037
        %v1706 = vunpack.c.l.b16 %v1038
        %v1707 = vunpack.c.h.b16 %v1038
        %v1708 = vunpack.c.l.b16 %v1039
        %v1709 = vunpack.c.h.b16 %v1039
        %v1710 = vunpack.c.l.b16 %v1040
        %v1711 = vunpack.c.h.b16 %v1040
        %v1712 = vunpack.c.l.b16 %v1041
        %v1713 = vunpack.c.h.b16 %v1041
        %v1714 = vunpack.c.l.b16 %v1042
        %v1715 = vunpack.c.h.b16 %v1042
        %v1716 = vunpack.c.l.b16 %v1043
        %v1717 = vunpack.c.h.b16 %v1043
        %v1718 = vunpack.c.l.b16 %v1044
        %v1719 = vunpack.c.h.b16 %v1044
        %v1720 = vunpack.c.l.b16 %v1045
        %v1721 = vunpack.c.h.b16 %v1045
        %v1722 = vunpack.c.l.b16 %v1046
        %v1723 = vunpack.c.h.b16 %v1046
        %v1724 = vunpack.c.l.b16 %v1047
        %v1725 = vunpack.c.h.b16 %v1047
        %v1726 = vunpack.c.l.b16 %v1048
        %v1727 = vunpack.c.h.b16 %v1048
        %v1728 = vunpack.c.l.b16 %v1049
        %v1729 = vunpack.c.h.b16 %v1049
        %v1730 = vunpack.c.l.b16 %v1050
        %v1731 = vunpack.c.h.b16 %v1050
        %v1732 = vunpack.c.l.b16 %v1051
        %v1733 = vunpack.c.h.b16 %v1051
        %v1734 = vunpack.c.l.b16 %v1052
        %v1735 = vunpack.c.h.b16 %v1052
        %v1736 = vunpack.c.l.b16 %v1053
        %v1737 = vunpack.c.h.b16 %v1053
        %v1738 = vunpack.c.l.b16 %v1054
        %v1739 = vunpack.c.h.b16 %v1054
        %v1740 = vunpack.c.l.b16 %v1055
        %v1741 = vunpack.c.h.b16 %v1055
        %v1742 = vunpack.c.l.b16 %v1056
        %v1743 = vunpack.c.h.b16 %v1056
        %v1744 = vunpack.c.l.b16 %v1057
        %v1745 = vunpack.c.h.b16 %v1057
        %v1746 = vunpack.c.l.b16 %v1058
        %v1747 = vunpack.c.h.b16 %v1058
        %v1748 = vunpack.c.l.b16 %v1059
        %v1749 = vunpack.c.h.b16 %v1059
        %v1750 = vunpack.c.l.b16 %v1060
        %v1751 = vunpack.c.h.b16 %v1060
        %v1752 = vunpack.c.l.b16 %v1061
        %v1753 = vunpack.c.h.b16 %v1061
        %v1754 = vunpack.c.l.b16 %v1062
        %v1755 = vunpack.c.h.b16 %v1062
        %v1756 = vunpack.c.l.b16 %v1063
        %v1757 = vunpack.c.h.b16 %v1063
        %v1758 = vunpack.c.l.b16 %v1064
        %v1759 = vunpack.c.h.b16 %v1064
        %v1760 = vunpack.c.l.b16 %v1065
        %v1761 = vunpack.c.h.b16 %v1065
        %v1762 = vunpack.c.l.b16 %v1066
        %v1763 = vunpack.c.h.b16 %v1066
        %v1764 = vunpack.c.l.b16 %v1067
        %v1765 = vunpack.c.h.b16 %v1067
        %v1766 = vunpack.c.l.b16 %v1068
        %v1767 = vunpack.c.h.b16 %v1068
        %v1768 = vunpack.c.l.b16 %v1069
        %v1769 = vunpack.c.h.b16 %v1069
        %v1770 = vunpack.c.l.b16 %v1070
        %v1771 = vunpack.c.h.b16 %v1070
        %v1772 = vunpack.c.l.b16 %v1071
        %v1773 = vunpack.c.h.b16 %v1071
        %v1774 = vunpack.c.l.b16 %v1072
        %v1775 = vunpack.c.h.b16 %v1072
        %v1776 = vunpack.c.l.b16 %v1073
        %v1777 = vunpack.c.h.b16 %v1073
        %v1778 = vunpack.c.l.b16 %v1074
        %v1779 = vunpack.c.h.b16 %v1074
        %v1780 = vunpack.c.l.b16 %v1075
        %v1781 = vunpack.c.h.b16 %v1075
        %v1782 = vunpack.c.l.b16 %v1076
        %v1783 = vunpack.c.h.b16 %v1076
        %v1784 = vunpack.c.l.b16 %v1077
        %v1785 = vunpack.c.h.b16 %v1077
        %v1786 = vunpack.c.l.b16 %v1078
        %v1787 = vunpack.c.h.b16 %v1078
        %v1788 = vunpack.c.l.b16 %v1079
        %v1789 = vunpack.c.h.b16 %v1079
        %v1790 = vunpack.c.l.b16 %v1080
        %v1791 = vunpack.c.h.b16 %v1080
        %v1792 = vunpack.c.l.b16 %v1081
        %v1793 = vunpack.c.h.b16 %v1081
        %v1794 = vunpack.c.l.b16 %v1082
        %v1795 = vunpack.c.h.b16 %v1082
        %v1796 = vunpack.c.l.b16 %v1083
        %v1797 = vunpack.c.h.b16 %v1083
        %v1798 = vunpack.c.l.b16 %v1084
        %v1799 = vunpack.c.h.b16 %v1084
        %v1800 = vunpack.c.l.b16 %v1085
        %v1801 = vunpack.c.h.b16 %v1085
        %v1802 = vunpack.c.l.b16 %v1086
        %v1803 = vunpack.c.h.b16 %v1086
        %v1804 = vunpack.c.l.b16 %v1087
        %v1805 = vunpack.c.h.b16 %v1087
        %v1806 = vunpack.c.l.b16 %v1088
        %v1807 = vunpack.c.h.b16 %v1088
        %v1808 = vunpack.c.l.b16 %v1089
        %v1809 = vunpack.c.h.b16 %v1089
        %v1810 = vunpack.c.l.b16 %v1090
        %v1811 = vunpack.c.h.b16 %v1090
        %v1812 = vunpack.c.l.b16 %v1091
        %v1813 = vunpack.c.h.b16 %v1091
        %v1814 = vunpack.c.l.b16 %v1092
        %v1815 = vunpack.c.h.b16 %v1092
        %v1816 = vunpack.c.l.b16 %v1093
        %v1817 = vunpack.c.h.b16 %v1093
        %v1818 = vunpack.c.l.b16 %v1094
        %v1819 = vunpack.c.h.b16 %v1094
        %v1820 = vunpack.c.l.b16 %v1095
        %v1821 = vunpack.c.h.b16 %v1095
        %v1822 = vunpack.c.l.b16 %v1096
        %v1823 = vunpack.c.h.b16 %v1096
        %v1824 = vunpack.c.l.b16 %v1097
        %v1825 = vunpack.c.h.b16 %v1097
        %v1826 = vunpack.c.l.b16 %v1098
        %v1827 = vunpack.c.h.b16 %v1098
        %v1828 = vunpack.c.l.b16 %v1099
        %v1829 = vunpack.c.h.b16 %v1099
        %v1830 = vunpack.c.l.b16 %v1100
        %v1831 = vunpack.c.h.b16 %v1100
        %v1832 = vunpack.c.l.b16 %v1101
        %v1833 = vunpack.c.h.b16 %v1101
        %v1834 = vunpack.c.l.b16 %v1102
        %v1835 = vunpack.c.h.b16 %v1102
        %v1836 = vunpack.c.l.b16 %v1103
        %v1837 = vunpack.c.h.b16 %v1103
        %v1838 = vunpack.c.l.b16 %v1104
        %v1839 = vunpack.c.h.b16 %v1104
        %v1840 = vunpack.c.l.b16 %v1105
        %v1841 = vunpack.c.h.b16 %v1105
        %v1842 = vunpack.c.l.b16 %v1106
        %v1843 = vunpack.c.h.b16 %v1106
        %v1844 = vunpack.c.l.b16 %v1107
        %v1845 = vunpack.c.h.b16 %v1107
        %v1846 = vunpack.c.l.b16 %v1108
        %v1847 = vunpack.c.h.b16 %v1108
        %v1848 = vunpack.c.l.b16 %v1109
        %v1849 = vunpack.c.h.b16 %v1109
        %v1850 = vunpack.c.l.b16 %v1110
        %v1851 = vunpack.c.h.b16 %v1110
        %v1852 = vunpack.c.l.b16 %v1111
        %v1853 = vunpack.c.h.b16 %v1111
        %v1854 = vunpack.c.l.b16 %v1112
        %v1855 = vunpack.c.h.b16 %v1112
        %v1856 = vunpack.c.l.b16 %v1113
        %v1857 = vunpack.c.h.b16 %v1113
        %v1858 = vunpack.c.l.b16 %v1114
        %v1859 = vunpack.c.h.b16 %v1114
        %v1860 = vunpack.c.l.b16 %v1115
        %v1861 = vunpack.c.h.b16 %v1115
        %v1862 = vunpack.c.l.b16 %v1116
        %v1863 = vunpack.c.h.b16 %v1116
        %v1864 = vunpack.c.l.b16 %v1117
        %v1865 = vunpack.c.h.b16 %v1117
        %v1866 = vunpack.c.l.b16 %v1118
        %v1867 = vunpack.c.h.b16 %v1118
        %v1868 = vunpack.c.l.b16 %v1119
        %v1869 = vunpack.c.h.b16 %v1119
        %v1870 = vunpack.c.l.b16 %v1120
        %v1871 = vunpack.c.h.b16 %v1120
        %v1872 = vunpack.c.l.b16 %v1121
        %v1873 = vunpack.c.h.b16 %v1121
        %v1874 = vunpack.c.l.b16 %v1122
        %v1875 = vunpack.c.h.b16 %v1122
        %v1876 = vunpack.c.l.b16 %v1123
        %v1877 = vunpack.c.h.b16 %v1123
        %v1878 = vunpack.c.l.b16 %v1124
        %v1879 = vunpack.c.h.b16 %v1124
        %v1880 = vunpack.c.l.b16 %v1125
        %v1881 = vunpack.c.h.b16 %v1125
        %v1882 = vunpack.c.l.b16 %v1126
        %v1883 = vunpack.c.h.b16 %v1126
        %v1884 = vunpack.c.l.b16 %v1127
        %v1885 = vunpack.c.h.b16 %v1127
        %v1886 = vunpack.c.l.b16 %v1128
        %v1887 = vunpack.c.h.b16 %v1128
        %v1888 = vunpack.c.l.b16 %v1129
        %v1889 = vunpack.c.h.b16 %v1129
        %v1890 = vunpack.c.l.b16 %v1130
        %v1891 = vunpack.c.h.b16 %v1130
        %v1892 = vunpack.c.l.b16 %v1131
        %v1893 = vunpack.c.h.b16 %v1131
        %v1894 = vunpack.c.l.b16 %v1132
        %v1895 = vunpack.c.h.b16 %v1132
        %v1896 = vunpack.c.l.b16 %v1133
        %v1897 = vunpack.c.h.b16 %v1133
        %v1898 = vunpack.c.l.b16 %v1134
        %v1899 = vunpack.c.h.b16 %v1134
        %v1900 = vunpack.c.l.b16 %v1135
        %v1901 = vunpack.c.h.b16 %v1135
        %v1902 = vunpack.c.l.b16 %v1136
        %v1903 = vunpack.c.h.b16 %v1136
        %v1904 = vunpack.c.l.b16 %v1137
        %v1905 = vunpack.c.h.b16 %v1137
        %v1906 = vunpack.c.l.b16 %v1138
        %v1907 = vunpack.c.h.b16 %v1138
        %v1908 = vunpack.c.l.b16 %v1139
        %v1909 = vunpack.c.h.b16 %v1139
        %v1910 = vunpack.c.l.b16 %v1140
        %v1911 = vunpack.c.h.b16 %v1140
        %v1912 = vunpack.c.l.b16 %v1141
        %v1913 = vunpack.c.h.b16 %v1141
        %v1914 = vunpack.c.l.b16 %v1142
        %v1915 = vunpack.c.h.b16 %v1142
        %v1916 = vunpack.c.l.b16 %v1143
        %v1917 = vunpack.c.h.b16 %v1143
        %v1918 = vunpack.c.l.b16 %v1144
        %v1919 = vunpack.c.h.b16 %v1144
        %v1920 = vunpack.c.l.b16 %v1145
        %v1921 = vunpack.c.h.b16 %v1145
        %v1922 = vunpack.c.l.b16 %v1146
        %v1923 = vunpack.c.h.b16 %v1146
        %v1924 = vunpack.c.l.b16 %v1147
        %v1925 = vunpack.c.h.b16 %v1147
        %v1926 = vunpack.c.l.b16 %v1148
        %v1927 = vunpack.c.h.b16 %v1148
        %v1928 = vunpack.c.l.b16 %v1149
        %v1929 = vunpack.c.h.b16 %v1149
        %v1930 = vunpack.c.l.b16 %v1150
        %v1931 = vunpack.c.h.b16 %v1150
        %v1932 = vunpack.c.l.b16 %v1151
        %v1933 = vunpack.c.h.b16 %v1151
        %v1934 = vunpack.c.l.b16 %v1152
        %v1935 = vunpack.c.h.b16 %v1152
        %v1936 = vunpack.c.l.b16 %v1153
        %v1937 = vunpack.c.h.b16 %v1153
        %v1938 = vunpack.c.l.b16 %v1154
        %v1939 = vunpack.c.h.b16 %v1154
        %v1940 = vunpack.c.l.b16 %v1155
        %v1941 = vunpack.c.h.b16 %v1155
        %v1942 = vunpack.c.l.b16 %v1156
        %v1943 = vunpack.c.h.b16 %v1156
        %v1944 = vunpack.c.l.b16 %v1157
        %v1945 = vunpack.c.h.b16 %v1157
        %v1946 = vunpack.c.l.b16 %v1158
        %v1947 = vunpack.c.h.b16 %v1158
        %v1948 = vunpack.c.l.b16 %v1159
        %v1949 = vunpack.c.h.b16 %v1159
        %v1950 = vunpack.c.l.b16 %v1160
        %v1951 = vunpack.c.h.b16 %v1160
        %v1952 = vunpack.c.l.b16 %v1161
        %v1953 = vunpack.c.h.b16 %v1161
        %v1954 = vunpack.c.l.b16 %v1162
        %v1955 = vunpack.c.h.b16 %v1162
        %v1956 = vunpack.c.l.b16 %v1163
        %v1957 = vunpack.c.h.b16 %v1163
        %v1958 = vunpack.c.l.b16 %v1164
        %v1959 = vunpack.c.h.b16 %v1164
        %v1960 = vunpack.c.l.b16 %v1165
        %v1961 = vunpack.c.h.b16 %v1165
        %v1962 = vunpack.c.l.b16 %v1166
        %v1963 = vunpack.c.h.b16 %v1166
        %v1964 = vunpack.c.l.b16 %v1167
        %v1965 = vunpack.c.h.b16 %v1167
        %v1966 = vunpack.c.l.b16 %v1168
        %v1967 = vunpack.c.h.b16 %v1168
        %v1968 = vunpack.c.l.b16 %v1169
        %v1969 = vunpack.c.h.b16 %v1169
        %v1970 = vunpack.c.l.b16 %v1170
        %v1971 = vunpack.c.h.b16 %v1170
        %v1972 = vunpack.c.l.b16 %v1171
        %v1973 = vunpack.c.h.b16 %v1171
        %v1974 = vunpack.c.l.b16 %v1172
        %v1975 = vunpack.c.h.b16 %v1172
        %v1976 = vunpack.c.l.b16 %v1173
        %v1977 = vunpack.c.h.b16 %v1173
        %v1978 = vunpack.c.l.b16 %v1174
        %v1979 = vunpack.c.h.b16 %v1174
        %v1980 = vunpack.c.l.b16 %v1175
        %v1981 = vunpack.c.h.b16 %v1175
        %v1982 = vunpack.c.l.b16 %v1176
        %v1983 = vunpack.c.h.b16 %v1176
        %v1984 = vunpack.c.l.b16 %v1177
        %v1985 = vunpack.c.h.b16 %v1177
        %v1986 = vunpack.c.l.b16 %v1178
        %v1987 = vunpack.c.h.b16 %v1178
        %v1988 = vunpack.c.l.b16 %v1179
        %v1989 = vunpack.c.h.b16 %v1179
        %v1990 = vpack.c.b16 %v1486, %v1478
        %v1991 = vpack.c.b16 %v1487, %v1479
        %v1992 = vpack.c.b16 %v1488, %v1480
        %v1993 = vpack.c.b16 %v1489, %v1481
        %v1994 = vpack.c.b16 %v1490, %v1482
        %v1995 = vpack.c.b16 %v1491, %v1483
        %v1996 = vpack.c.b16 %v1492, %v1484
        %v1997 = vpack.c.b16 %v1493, %v1485
        %v1998 = vpack.c.b16 %v1502, %v1494
        %v1999 = vpack.c.b16 %v1503, %v1495
        %v2000 = vpack.c.b16 %v1504, %v1496
        %v2001 = vpack.c.b16 %v1505, %v1497
        %v2002 = vpack.c.b16 %v1506, %v1498
        %v2003 = vpack.c.b16 %v1507, %v1499
        %v2004 = vpack.c.b16 %v1508, %v1500
        %v2005 = vpack.c.b16 %v1509, %v1501
        %v2006 = vpack.c.b16 %v1518, %v1510
        %v2007 = vpack.c.b16 %v1519, %v1511
        %v2008 = vpack.c.b16 %v1520, %v1512
        %v2009 = vpack.c.b16 %v1521, %v1513
        %v2010 = vpack.c.b16 %v1522, %v1514
        %v2011 = vpack.c.b16 %v1523, %v1515
        %v2012 = vpack.c.b16 %v1524, %v1516
        %v2013 = vpack.c.b16 %v1525, %v1517
        %v2014 = vpack.c.b16 %v1534, %v1526
        %v2015 = vpack.c.b16 %v1535, %v1527
        %v2016 = vpack.c.b16 %v1536, %v1528
        %v2017 = vpack.c.b16 %v1537, %v1529
        %v2018 = vpack.c.b16 %v1538, %v1530
        %v2019 = vpack.c.b16 %v1539, %v1531
        %v2020 = vpack.c.b16 %v1540, %v1532
        %v2021 = vpack.c.b16 %v1541, %v1533
        %v2022 = vpack.c.b16 %v1550, %v1542
        %v2023 = vpack.c.b16 %v1551, %v1543
        %v2024 = vpack.c.b16 %v1552, %v1544
        %v2025 = vpack.c.b16 %v1553, %v1545
        %v2026 = vpack.c.b16 %v1554, %v1546
        %v2027 = vpack.c.b16 %v1555, %v1547
        %v2028 = vpack.c.b16 %v1556, %v1548
        %v2029 = vpack.c.b16 %v1557, %v1549
        %v2030 = vpack.c.b16 %v1566, %v1558
        %v2031 = vpack.c.b16 %v1567, %v1559
        %v2032 = vpack.c.b16 %v1568, %v1560
        %v2033 = vpack.c.b16 %v1569, %v1561
        %v2034 = vpack.c.b16 %v1570, %v1562
        %v2035 = vpack.c.b16 %v1571, %v1563
        %v2036 = vpack.c.b16 %v1572, %v1564
        %v2037 = vpack.c.b16 %v1573, %v1565
        %v2038 = vpack.c.b16 %v1582, %v1574
        %v2039 = vpack.c.b16 %v1583, %v1575
        %v2040 = vpack.c.b16 %v1584, %v1576
        %v2041 = vpack.c.b16 %v1585, %v1577
        %v2042 = vpack.c.b16 %v1586, %v1578
        %v2043 = vpack.c.b16 %v1587, %v1579
        %v2044 = vpack.c.b16 %v1588, %v1580
        %v2045 = vpack.c.b16 %v1589, %v1581
        %v2046 = vpack.c.b16 %v1598, %v1590
        %v2047 = vpack.c.b16 %v1599, %v1591
        %v2048 = vpack.c.b16 %v1600, %v1592
        %v2049 = vpack.c.b16 %v1601, %v1593
        %v2050 = vpack.c.b16 %v1602, %v1594
        %v2051 = vpack.c.b16 %v1603, %v1595
        %v2052 = vpack.c.b16 %v1604, %v1596
        %v2053 = vpack.c.b16 %v1605, %v1597
        %v2054 = vpack.c.b16 %v1614, %v1606
        %v2055 = vpack.c.b16 %v1615, %v1607
        %v2056 = vpack.c.b16 %v1616, %v1608
        %v2057 = vpack.c.b16 %v1617, %v1609
        %v2058 = vpack.c.b16 %v1618, %v1610
        %v2059 = vpack.c.b16 %v1619, %v1611
        %v2060 = vpack.c.b16 %v1620, %v1612
        %v2061 = vpack.c.b16 %v1621, %v1613
        %v2062 = vpack.c.b16 %v1630, %v1622
        %v2063 = vpack.c.b16 %v1631, %v1623
        %v2064 = vpack.c.b16 %v1632, %v1624
        %v2065 = vpack.c.b16 %v1633, %v1625
        %v2066 = vpack.c.b16 %v1634, %v1626
        %v2067 = vpack.c.b16 %v1635, %v1627
        %v2068 = vpack.c.b16 %v1636, %v1628
        %v2069 = vpack.c.b16 %v1637, %v1629
        %v2070 = vpack.c.b16 %v1646, %v1638
        %v2071 = vpack.c.b16 %v1647, %v1639
        %v2072 = vpack.c.b16 %v1648, %v1640
        %v2073 = vpack.c.b16 %v1649, %v1641
        %v2074 = vpack.c.b16 %v1650, %v1642
        %v2075 = vpack.c.b16 %v1651, %v1643
        %v2076 = vpack.c.b16 %v1652, %v1644
        %v2077 = vpack.c.b16 %v1653, %v1645
        %v2078 = vpack.c.b16 %v1662, %v1654
        %v2079 = vpack.c.b16 %v1663, %v1655
        %v2080 = vpack.c.b16 %v1664, %v1656
        %v2081 = vpack.c.b16 %v1665, %v1657
        %v2082 = vpack.c.b16 %v1666, %v1658
        %v2083 = vpack.c.b16 %v1667, %v1659
        %v2084 = vpack.c.b16 %v1668, %v1660
        %v2085 = vpack.c.b16 %v1669, %v1661
        %v2086 = vpack.c.b16 %v1678, %v1670
        %v2087 = vpack.c.b16 %v1679, %v1671
        %v2088 = vpack.c.b16 %v1680, %v1672
        %v2089 = vpack.c.b16 %v1681, %v1673
        %v2090 = vpack.c.b16 %v1682, %v1674
        %v2091 = vpack.c.b16 %v1683, %v1675
        %v2092 = vpack.c.b16 %v1684, %v1676
        %v2093 = vpack.c.b16 %v1685, %v1677
        %v2094 = vpack.c.b16 %v1694, %v1686
        %v2095 = vpack.c.b16 %v1695, %v1687
        %v2096 = vpack.c.b16 %v1696, %v1688
        %v2097 = vpack.c.b16 %v1697, %v1689
        %v2098 = vpack.c.b16 %v1698, %v1690
        %v2099 = vpack.c.b16 %v1699, %v1691
        %v2100 = vpack.c.b16 %v1700, %v1692
        %v2101 = vpack.c.b16 %v1701, %v1693
        %v2102 = vpack.c.b16 %v1710, %v1702
        %v2103 = vpack.c.b16 %v1711, %v1703
        %v2104 = vpack.c.b16 %v1712, %v1704
        %v2105 = vpack.c.b16 %v1713, %v1705
        %v2106 = vpack.c.b16 %v1714, %v1706
        %v2107 = vpack.c.b16 %v1715, %v1707
        %v2108 = vpack.c.b16 %v1716, %v1708
        %v2109 = vpack.c.b16 %v1717, %v1709
        %v2110 = vpack.c.b16 %v1726, %v1718
        %v2111 = vpack.c.b16 %v1727, %v1719
        %v2112 = vpack.c.b16 %v1728, %v1720
        %v2113 = vpack.c.b16 %v1729, %v1721
        %v2114 = vpack.c.b16 %v1730, %v1722
        %v2115 = vpack.c.b16 %v1731, %v1723
        %v2116 = vpack.c.b16 %v1732, %v1724
        %v2117 = vpack.c.b16 %v1733, %v1725
        %v2118 = vpack.c.b16 %v1742, %v1734
        %v2119 = vpack.c.b16 %v1743, %v1735
        %v2120 = vpack.c.b16 %v1744, %v1736
        %v2121 = vpack.c.b16 %v1745, %v1737
        %v2122 = vpack.c.b16 %v1746, %v1738
        %v2123 = vpack.c.b16 %v1747, %v1739
        %v2124 = vpack.c.b16 %v1748, %v1740
        %v2125 = vpack.c.b16 %v1749, %v1741
        %v2126 = vpack.c.b16 %v1758, %v1750
        %v2127 = vpack.c.b16 %v1759, %v1751
        %v2128 = vpack.c.b16 %v1760, %v1752
        %v2129 = vpack.c.b16 %v1761, %v1753
        %v2130 = vpack.c.b16 %v1762, %v1754
        %v2131 = vpack.c.b16 %v1763, %v1755
        %v2132 = vpack.c.b16 %v1764, %v1756
        %v2133 = vpack.c.b16 %v1765, %v1757
        %v2134 = vpack.c.b16 %v1774, %v1766
        %v2135 = vpack.c.b16 %v1775, %v1767
        %v2136 = vpack.c.b16 %v1776, %v1768
        %v2137 = vpack.c.b16 %v1777, %v1769
        %v2138 = vpack.c.b16 %v1778, %v1770
        %v2139 = vpack.c.b16 %v1779, %v1771
        %v2140 = vpack.c.b16 %v1780, %v1772
        %v2141 = vpack.c.b16 %v1781, %v1773
        %v2142 = vpack.c.b16 %v1790, %v1782
        %v2143 = vpack.c.b16 %v1791, %v1783
        %v2144 = vpack.c.b16 %v1792, %v1784
        %v2145 = vpack.c.b16 %v1793, %v1785
        %v2146 = vpack.c.b16 %v1794, %v1786
        %v2147 = vpack.c.b16 %v1795, %v1787
        %v2148 = vpack.c.b16 %v1796, %v1788
        %v2149 = vpack.c.b16 %v1797, %v1789
        %v2150 = vpack.c.b16 %v1806, %v1798
        %v2151 = vpack.c.b16 %v1807, %v1799
        %v2152 = vpack.c.b16 %v1808, %v1800
        %v2153 = vpack.c.b16 %v1809, %v1801
        %v2154 = vpack.c.b16 %v1810, %v1802
        %v2155 = vpack.c.b16 %v1811, %v1803
        %v2156 = vpack.c.b16 %v1812, %v1804
        %v2157 = vpack.c.b16 %v1813, %v1805
        %v2158 = vpack.c.b16 %v1822, %v1814
        %v2159 = vpack.c.b16 %v1823, %v1815
        %v2160 = vpack.c.b16 %v1824, %v1816
        %v2161 = vpack.c.b16 %v1825, %v1817
        %v2162 = vpack.c.b16 %v1826, %v1818
        %v2163 = vpack.c.b16 %v1827, %v1819
        %v2164 = vpack.c.b16 %v1828, %v1820
        %v2165 = vpack.c.b16 %v1829, %v1821
        %v2166 = vpack.c.b16 %v1838, %v1830
        %v2167 = vpack.c.b16 %v1839, %v1831
        %v2168 = vpack.c.b16 %v1840, %v1832
        %v2169 = vpack.c.b16 %v1841, %v1833
        %v2170 = vpack.c.b16 %v1842, %v1834
        %v2171 = vpack.c.b16 %v1843, %v1835
        %v2172 = vpack.c.b16 %v1844, %v1836
        %v2173 = vpack.c.b16 %v1845, %v1837
        %v2174 = vpack.c.b16 %v1854, %v1846
        %v2175 = vpack.c.b16 %v1855, %v1847
        %v2176 = vpack.c.b16 %v1856, %v1848
        %v2177 = vpack.c.b16 %v1857, %v1849
        %v2178 = vpack.c.b16 %v1858, %v1850
        %v2179 = vpack.c.b16 %v1859, %v1851
        %v2180 = vpack.c.b16 %v1860, %v1852
        %v2181 = vpack.c.b16 %v1861, %v1853
        %v2182 = vpack.c.b16 %v1870, %v1862
        %v2183 = vpack.c.b16 %v1871, %v1863
        %v2184 = vpack.c.b16 %v1872, %v1864
        %v2185 = vpack.c.b16 %v1873, %v1865
        %v2186 = vpack.c.b16 %v1874, %v1866
        %v2187 = vpack.c.b16 %v1875, %v1867
        %v2188 = vpack.c.b16 %v1876, %v1868
        %v2189 = vpack.c.b16 %v1877, %v1869
        %v2190 = vpack.c.b16 %v1886, %v1878
        %v2191 = vpack.c.b16 %v1887, %v1879
        %v2192 = vpack.c.b16 %v1888, %v1880
        %v2193 = vpack.c.b16 %v1889, %v1881
        %v2194 = vpack.c.b16 %v1890, %v1882
        %v2195 = vpack.c.b16 %v1891, %v1883
        %v2196 = vpack.c.b16 %v1892, %v1884
        %v2197 = vpack.c.b16 %v1893, %v1885
        %v2198 = vpack.c.b16 %v1902, %v1894
        %v2199 = vpack.c.b16 %v1903, %v1895
        %v2200 = vpack.c.b16 %v1904, %v1896
        %v2201 = vpack.c.b16 %v1905, %v1897
        %v2202 = vpack.c.b16 %v1906, %v1898
        %v2203 = vpack.c.b16 %v1907, %v1899
        %v2204 = vpack.c.b16 %v1908, %v1900
        %v2205 = vpack.c.b16 %v1909, %v1901
        %v2206 = vpack.c.b16 %v1918, %v1910
        %v2207 = vpack.c.b16 %v1919, %v1911
        %v2208 = vpack.c.b16 %v1920, %v1912
        %v2209 = vpack.c.b16 %v1921, %v1913
        %v2210 = vpack.c.b16 %v1922, %v1914
        %v2211 = vpack.c.b16 %v1923, %v1915
        %v2212 = vpack.c.b16 %v1924, %v1916
        %v2213 = vpack.c.b16 %v1925, %v1917
        %v2214 = vpack.c.b16 %v1934, %v1926
        %v2215 = vpack.c.b16 %v1935, %v1927
        %v2216 = vpack.c.b16 %v1936, %v1928
        %v2217 = vpack.c.b16 %v1937, %v1929
        %v2218 = vpack.c.b16 %v1938, %v1930
        %v2219 = vpack.c.b16 %v1939, %v1931
        %v2220 = vpack.c.b16 %v1940, %v1932
        %v2221 = vpack.c.b16 %v1941, %v1933
        %v2222 = vpack.c.b16 %v1950, %v1942
        %v2223 = vpack.c.b16 %v1951, %v1943
        %v2224 = vpack.c.b16 %v1952, %v1944
        %v2225 = vpack.c.b16 %v1953, %v1945
        %v2226 = vpack.c.b16 %v1954, %v1946
        %v2227 = vpack.c.b16 %v1955, %v1947
        %v2228 = vpack.c.b16 %v1956, %v1948
        %v2229 = vpack.c.b16 %v1957, %v1949
        %v2230 = vpack.c.b16 %v1966, %v1958
        %v2231 = vpack.c.b16 %v1967, %v1959
        %v2232 = vpack.c.b16 %v1968, %v1960
        %v2233 = vpack.c.b16 %v1969, %v1961
        %v2234 = vpack.c.b16 %v1970, %v1962
        %v2235 = vpack.c.b16 %v1971, %v1963
        %v2236 = vpack.c.b16 %v1972, %v1964
        %v2237 = vpack.c.b16 %v1973, %v1965
        %v2238 = vpack.c.b16 %v1982, %v1974
        %v2239 = vpack.c.b16 %v1983, %v1975
        %v2240 = vpack.c.b16 %v1984, %v1976
        %v2241 = vpack.c.b16 %v1985, %v1977
        %v2242 = vpack.c.b16 %v1986, %v1978
        %v2243 = vpack.c.b16 %v1987, %v1979
        %v2244 = vpack.c.b16 %v1988, %v1980
        %v2245 = vpack.c.b16 %v1989, %v1981
        %2502 = vmatprep.subr.bf16.mxu0 %v2047
        %2503 = vmatpush1.bf16.msra.mxu0 %v2046
        %2504 = vmatprep.subr.bf16.mxu0 %v2039
        %2505 = vmatpush1.bf16.msra.mxu0 %v2038
        %2506 = vmatprep.subr.bf16.mxu0 %v2031
        %2507 = vmatpush1.bf16.msra.mxu0 %v2030
        %2508 = vmatprep.subr.bf16.mxu0 %v2023
        %2509 = vmatpush1.bf16.msra.mxu0 %v2022
        %2510 = vmatprep.subr.bf16.mxu0 %v2015
        %2511 = vmatpush1.bf16.msra.mxu0 %v2014
        %2512 = vmatprep.subr.bf16.mxu0 %v2007
        %2513 = vmatpush1.bf16.msra.mxu0 %v2006
        %2514 = vmatprep.subr.bf16.mxu0 %v1999
        %2515 = vmatpush1.bf16.msra.mxu0 %v1998
        %2516 = vmatprep.subr.bf16.mxu0 %v1991
        %2517 = vmatpush1.bf16.msra.mxu0 %v1990
        %2518 = vmatprep.subr.bf16.mxu0 %v2111
        %2519 = vmatpush2.bf16.msra.mxu0 %v2110
        %2520 = vmatprep.subr.bf16.mxu0 %v2103
        %2521 = vmatpush2.bf16.msra.mxu0 %v2102
        %2522 = vmatprep.subr.bf16.mxu0 %v2095
        %2523 = vmatpush2.bf16.msra.mxu0 %v2094
        %2524 = vmatprep.subr.bf16.mxu0 %v2087
        %2525 = vmatpush2.bf16.msra.mxu0 %v2086
        %2526 = vmatprep.subr.bf16.mxu0 %v2079
        %2527 = vmatpush2.bf16.msra.mxu0 %v2078
        %2528 = vmatprep.subr.bf16.mxu0 %v2071
        %2529 = vmatpush2.bf16.msra.mxu0 %v2070
        %2530 = vmatprep.subr.bf16.mxu0 %v2063
        %2531 = vmatpush2.bf16.msra.mxu0 %v2062
        %2532 = vmatprep.subr.bf16.mxu0 %v2055
        %2533 = vmatpush2.bf16.msra.mxu0 %v2054
        %2534 = vmatprep.mubr.bf16.mxu0 %v921
        %2535 = vmatmul.mubr.bf16.gmra.mxu0 %v920
        %v2536 = vpop.f32.mrf.mxu0
        %v2537 = vadd.f32 %v1185, %v2536
        %v2538 = vpop.f32.mrf.mxu0
        %v2539 = vadd.f32 %v1189, %v2538
        %v2540 = vpop.f32.mrf.mxu0
        %v2541 = vpop.f32.mrf.mxu0
        %2542 = vdwg.mxu0
        %2543 = vmatprep.subr.bf16.mxu0 %v2175
        %2544 = vmatpush1.bf16.msra.mxu0 %v2174
        %2545 = vmatprep.subr.bf16.mxu0 %v2167
        %2546 = vmatpush1.bf16.msra.mxu0 %v2166
        %2547 = vmatprep.subr.bf16.mxu0 %v2159
        %2548 = vmatpush1.bf16.msra.mxu0 %v2158
        %2549 = vmatprep.subr.bf16.mxu0 %v2151
        %2550 = vmatpush1.bf16.msra.mxu0 %v2150
        %2551 = vmatprep.subr.bf16.mxu0 %v2143
        %2552 = vmatpush1.bf16.msra.mxu0 %v2142
        %2553 = vmatprep.subr.bf16.mxu0 %v2135
        %2554 = vmatpush1.bf16.msra.mxu0 %v2134
        %2555 = vmatprep.subr.bf16.mxu0 %v2127
        %2556 = vmatpush1.bf16.msra.mxu0 %v2126
        %2557 = vmatprep.subr.bf16.mxu0 %v2119
        %2558 = vmatpush1.bf16.msra.mxu0 %v2118
        %2559 = vmatprep.subr.bf16.mxu0 %v2239
        %2560 = vmatpush2.bf16.msra.mxu0 %v2238
        %2561 = vmatprep.subr.bf16.mxu0 %v2231
        %2562 = vmatpush2.bf16.msra.mxu0 %v2230
        %2563 = vmatprep.subr.bf16.mxu0 %v2223
        %2564 = vmatpush2.bf16.msra.mxu0 %v2222
        %2565 = vmatprep.subr.bf16.mxu0 %v2215
        %2566 = vmatpush2.bf16.msra.mxu0 %v2214
        %2567 = vmatprep.subr.bf16.mxu0 %v2207
        %2568 = vmatpush2.bf16.msra.mxu0 %v2206
        %2569 = vmatprep.subr.bf16.mxu0 %v2199
        %2570 = vmatpush2.bf16.msra.mxu0 %v2198
        %2571 = vmatprep.subr.bf16.mxu0 %v2191
        %2572 = vmatpush2.bf16.msra.mxu0 %v2190
        %2573 = vmatprep.subr.bf16.mxu0 %v2183
        %2574 = vmatpush2.bf16.msra.mxu0 %v2182
        %2575 = vmatprep.mubr.bf16.mxu0 %v923
        %2576 = vmatmul.mubr.bf16.gmra.mxu0 %v922
        %v2577 = vpop.f32.mrf.mxu0
        %v2578 = vadd.f32 %v2537, %v2577
        %v2579 = vpop.f32.mrf.mxu0
        %v2580 = vadd.f32 %v2539, %v2579
        %v2581 = vpop.f32.mrf.mxu0
        %v2582 = vpop.f32.mrf.mxu0
        %2583 = vdwg.mxu0
        %2584 = vmatprep.subr.bf16.mxu0 %v2049
        %2585 = vmatpush1.bf16.msra.mxu0 %v2048
        %2586 = vmatprep.subr.bf16.mxu0 %v2041
        %2587 = vmatpush1.bf16.msra.mxu0 %v2040
        %2588 = vmatprep.subr.bf16.mxu0 %v2033
        %2589 = vmatpush1.bf16.msra.mxu0 %v2032
        %2590 = vmatprep.subr.bf16.mxu0 %v2025
        %2591 = vmatpush1.bf16.msra.mxu0 %v2024
        %2592 = vmatprep.subr.bf16.mxu0 %v2017
        %2593 = vmatpush1.bf16.msra.mxu0 %v2016
        %2594 = vmatprep.subr.bf16.mxu0 %v2009
        %2595 = vmatpush1.bf16.msra.mxu0 %v2008
        %2596 = vmatprep.subr.bf16.mxu0 %v2001
        %2597 = vmatpush1.bf16.msra.mxu0 %v2000
        %2598 = vmatprep.subr.bf16.mxu0 %v1993
        %2599 = vmatpush1.bf16.msra.mxu0 %v1992
        %2600 = vmatprep.subr.bf16.mxu0 %v2113
        %2601 = vmatpush2.bf16.msra.mxu0 %v2112
        %2602 = vmatprep.subr.bf16.mxu0 %v2105
        %2603 = vmatpush2.bf16.msra.mxu0 %v2104
        %2604 = vmatprep.subr.bf16.mxu0 %v2097
        %2605 = vmatpush2.bf16.msra.mxu0 %v2096
        %2606 = vmatprep.subr.bf16.mxu0 %v2089
        %2607 = vmatpush2.bf16.msra.mxu0 %v2088
        %2608 = vmatprep.subr.bf16.mxu0 %v2081
        %2609 = vmatpush2.bf16.msra.mxu0 %v2080
        %2610 = vmatprep.subr.bf16.mxu0 %v2073
        %2611 = vmatpush2.bf16.msra.mxu0 %v2072
        %2612 = vmatprep.subr.bf16.mxu0 %v2065
        %2613 = vmatpush2.bf16.msra.mxu0 %v2064
        %2614 = vmatprep.subr.bf16.mxu0 %v2057
        %2615 = vmatpush2.bf16.msra.mxu0 %v2056
        %2616 = vmatprep.mubr.bf16.mxu0 %v921
        %2617 = vmatmul.mubr.bf16.gmra.mxu0 %v920
        %v2618 = vpop.f32.mrf.mxu0
        %v2619 = vadd.f32 %v1193, %v2618
        %v2620 = vpop.f32.mrf.mxu0
        %v2621 = vadd.f32 %v1197, %v2620
        %v2622 = vpop.f32.mrf.mxu0
        %v2623 = vpop.f32.mrf.mxu0
        %2624 = vdwg.mxu0
        %2625 = vmatprep.subr.bf16.mxu0 %v2177
        %2626 = vmatpush1.bf16.msra.mxu0 %v2176
        %2627 = vmatprep.subr.bf16.mxu0 %v2169
        %2628 = vmatpush1.bf16.msra.mxu0 %v2168
        %2629 = vmatprep.subr.bf16.mxu0 %v2161
        %2630 = vmatpush1.bf16.msra.mxu0 %v2160
        %2631 = vmatprep.subr.bf16.mxu0 %v2153
        %2632 = vmatpush1.bf16.msra.mxu0 %v2152
        %2633 = vmatprep.subr.bf16.mxu0 %v2145
        %2634 = vmatpush1.bf16.msra.mxu0 %v2144
        %2635 = vmatprep.subr.bf16.mxu0 %v2137
        %2636 = vmatpush1.bf16.msra.mxu0 %v2136
        %2637 = vmatprep.subr.bf16.mxu0 %v2129
        %2638 = vmatpush1.bf16.msra.mxu0 %v2128
        %2639 = vmatprep.subr.bf16.mxu0 %v2121
        %2640 = vmatpush1.bf16.msra.mxu0 %v2120
        %2641 = vmatprep.subr.bf16.mxu0 %v2241
        %2642 = vmatpush2.bf16.msra.mxu0 %v2240
        %2643 = vmatprep.subr.bf16.mxu0 %v2233
        %2644 = vmatpush2.bf16.msra.mxu0 %v2232
        %2645 = vmatprep.subr.bf16.mxu0 %v2225
        %2646 = vmatpush2.bf16.msra.mxu0 %v2224
        %2647 = vmatprep.subr.bf16.mxu0 %v2217
        %2648 = vmatpush2.bf16.msra.mxu0 %v2216
        %2649 = vmatprep.subr.bf16.mxu0 %v2209
        %2650 = vmatpush2.bf16.msra.mxu0 %v2208
        %2651 = vmatprep.subr.bf16.mxu0 %v2201
        %2652 = vmatpush2.bf16.msra.mxu0 %v2200
        %2653 = vmatprep.subr.bf16.mxu0 %v2193
        %2654 = vmatpush2.bf16.msra.mxu0 %v2192
        %2655 = vmatprep.subr.bf16.mxu0 %v2185
        %2656 = vmatpush2.bf16.msra.mxu0 %v2184
        %2657 = vmatprep.mubr.bf16.mxu0 %v923
        %2658 = vmatmul.mubr.bf16.gmra.mxu0 %v922
        %v2659 = vpop.f32.mrf.mxu0
        %v2660 = vadd.f32 %v2619, %v2659
        %v2661 = vpop.f32.mrf.mxu0
        %v2662 = vadd.f32 %v2621, %v2661
        %v2663 = vpop.f32.mrf.mxu0
        %v2664 = vpop.f32.mrf.mxu0
        %2665 = vdwg.mxu0
        %2666 = vmatprep.subr.bf16.mxu0 %v2051
        %2667 = vmatpush1.bf16.msra.mxu0 %v2050
        %2668 = vmatprep.subr.bf16.mxu0 %v2043
        %2669 = vmatpush1.bf16.msra.mxu0 %v2042
        %2670 = vmatprep.subr.bf16.mxu0 %v2035
        %2671 = vmatpush1.bf16.msra.mxu0 %v2034
        %2672 = vmatprep.subr.bf16.mxu0 %v2027
        %2673 = vmatpush1.bf16.msra.mxu0 %v2026
        %2674 = vmatprep.subr.bf16.mxu0 %v2019
        %2675 = vmatpush1.bf16.msra.mxu0 %v2018
        %2676 = vmatprep.subr.bf16.mxu0 %v2011
        %2677 = vmatpush1.bf16.msra.mxu0 %v2010
        %2678 = vmatprep.subr.bf16.mxu0 %v2003
        %2679 = vmatpush1.bf16.msra.mxu0 %v2002
        %2680 = vmatprep.subr.bf16.mxu0 %v1995
        %2681 = vmatpush1.bf16.msra.mxu0 %v1994
        %2682 = vmatprep.subr.bf16.mxu0 %v2115
        %2683 = vmatpush2.bf16.msra.mxu0 %v2114
        %2684 = vmatprep.subr.bf16.mxu0 %v2107
        %2685 = vmatpush2.bf16.msra.mxu0 %v2106
        %2686 = vmatprep.subr.bf16.mxu0 %v2099
        %2687 = vmatpush2.bf16.msra.mxu0 %v2098
        %2688 = vmatprep.subr.bf16.mxu0 %v2091
        %2689 = vmatpush2.bf16.msra.mxu0 %v2090
        %2690 = vmatprep.subr.bf16.mxu0 %v2083
        %2691 = vmatpush2.bf16.msra.mxu0 %v2082
        %2692 = vmatprep.subr.bf16.mxu0 %v2075
        %2693 = vmatpush2.bf16.msra.mxu0 %v2074
        %2694 = vmatprep.subr.bf16.mxu0 %v2067
        %2695 = vmatpush2.bf16.msra.mxu0 %v2066
        %2696 = vmatprep.subr.bf16.mxu0 %v2059
        %2697 = vmatpush2.bf16.msra.mxu0 %v2058
        %2698 = vmatprep.mubr.bf16.mxu0 %v921
        %2699 = vmatmul.mubr.bf16.gmra.mxu0 %v920
        %v2700 = vpop.f32.mrf.mxu0
        %v2701 = vadd.f32 %v1201, %v2700
        %v2702 = vpop.f32.mrf.mxu0
        %v2703 = vadd.f32 %v1205, %v2702
        %v2704 = vpop.f32.mrf.mxu0
        %v2705 = vpop.f32.mrf.mxu0
        %2706 = vdwg.mxu0
        %2707 = vmatprep.subr.bf16.mxu0 %v2179
        %2708 = vmatpush1.bf16.msra.mxu0 %v2178
        %2709 = vmatprep.subr.bf16.mxu0 %v2171
        %2710 = vmatpush1.bf16.msra.mxu0 %v2170
        %2711 = vmatprep.subr.bf16.mxu0 %v2163
        %2712 = vmatpush1.bf16.msra.mxu0 %v2162
        %2713 = vmatprep.subr.bf16.mxu0 %v2155
        %2714 = vmatpush1.bf16.msra.mxu0 %v2154
        %2715 = vmatprep.subr.bf16.mxu0 %v2147
        %2716 = vmatpush1.bf16.msra.mxu0 %v2146
        %2717 = vmatprep.subr.bf16.mxu0 %v2139
        %2718 = vmatpush1.bf16.msra.mxu0 %v2138
        %2719 = vmatprep.subr.bf16.mxu0 %v2131
        %2720 = vmatpush1.bf16.msra.mxu0 %v2130
        %2721 = vmatprep.subr.bf16.mxu0 %v2123
        %2722 = vmatpush1.bf16.msra.mxu0 %v2122
        %2723 = vmatprep.subr.bf16.mxu0 %v2243
        %2724 = vmatpush2.bf16.msra.mxu0 %v2242
        %2725 = vmatprep.subr.bf16.mxu0 %v2235
        %2726 = vmatpush2.bf16.msra.mxu0 %v2234
        %2727 = vmatprep.subr.bf16.mxu0 %v2227
        %2728 = vmatpush2.bf16.msra.mxu0 %v2226
        %2729 = vmatprep.subr.bf16.mxu0 %v2219
        %2730 = vmatpush2.bf16.msra.mxu0 %v2218
        %2731 = vmatprep.subr.bf16.mxu0 %v2211
        %2732 = vmatpush2.bf16.msra.mxu0 %v2210
        %2733 = vmatprep.subr.bf16.mxu0 %v2203
        %2734 = vmatpush2.bf16.msra.mxu0 %v2202
        %2735 = vmatprep.subr.bf16.mxu0 %v2195
        %2736 = vmatpush2.bf16.msra.mxu0 %v2194
        %2737 = vmatprep.subr.bf16.mxu0 %v2187
        %2738 = vmatpush2.bf16.msra.mxu0 %v2186
        %2739 = vmatprep.mubr.bf16.mxu0 %v923
        %2740 = vmatmul.mubr.bf16.gmra.mxu0 %v922
        %v2741 = vpop.f32.mrf.mxu0
        %v2742 = vadd.f32 %v2701, %v2741
        %v2743 = vpop.f32.mrf.mxu0
        %v2744 = vadd.f32 %v2703, %v2743
        %v2745 = vpop.f32.mrf.mxu0
        %v2746 = vpop.f32.mrf.mxu0
        %2747 = vdwg.mxu0
        %2748 = vmatprep.subr.bf16.mxu0 %v2053
        %2749 = vmatpush1.bf16.msra.mxu0 %v2052
        %2750 = vmatprep.subr.bf16.mxu0 %v2045
        %2751 = vmatpush1.bf16.msra.mxu0 %v2044
        %2752 = vmatprep.subr.bf16.mxu0 %v2037
        %2753 = vmatpush1.bf16.msra.mxu0 %v2036
        %2754 = vmatprep.subr.bf16.mxu0 %v2029
        %2755 = vmatpush1.bf16.msra.mxu0 %v2028
        %2756 = vmatprep.subr.bf16.mxu0 %v2021
        %2757 = vmatpush1.bf16.msra.mxu0 %v2020
        %2758 = vmatprep.subr.bf16.mxu0 %v2013
        %2759 = vmatpush1.bf16.msra.mxu0 %v2012
        %2760 = vmatprep.subr.bf16.mxu0 %v2005
        %2761 = vmatpush1.bf16.msra.mxu0 %v2004
        %2762 = vmatprep.subr.bf16.mxu0 %v1997
        %2763 = vmatpush1.bf16.msra.mxu0 %v1996
        %2764 = vmatprep.subr.bf16.mxu0 %v2117
        %2765 = vmatpush2.bf16.msra.mxu0 %v2116
        %2766 = vmatprep.subr.bf16.mxu0 %v2109
        %2767 = vmatpush2.bf16.msra.mxu0 %v2108
        %2768 = vmatprep.subr.bf16.mxu0 %v2101
        %2769 = vmatpush2.bf16.msra.mxu0 %v2100
        %2770 = vmatprep.subr.bf16.mxu0 %v2093
        %2771 = vmatpush2.bf16.msra.mxu0 %v2092
        %2772 = vmatprep.subr.bf16.mxu0 %v2085
        %2773 = vmatpush2.bf16.msra.mxu0 %v2084
        %2774 = vmatprep.subr.bf16.mxu0 %v2077
        %2775 = vmatpush2.bf16.msra.mxu0 %v2076
        %2776 = vmatprep.subr.bf16.mxu0 %v2069
        %2777 = vmatpush2.bf16.msra.mxu0 %v2068
        %2778 = vmatprep.subr.bf16.mxu0 %v2061
        %2779 = vmatpush2.bf16.msra.mxu0 %v2060
        %2780 = vmatprep.mubr.bf16.mxu0 %v921
        %2781 = vmatmul.mubr.bf16.gmra.mxu0 %v920
        %v2782 = vpop.f32.mrf.mxu0
        %v2783 = vadd.f32 %v1209, %v2782
        %v2784 = vpop.f32.mrf.mxu0
        %v2785 = vadd.f32 %v1213, %v2784
        %v2786 = vpop.f32.mrf.mxu0
        %v2787 = vpop.f32.mrf.mxu0
        %2788 = vdwg.mxu0
        %2789 = vmatprep.subr.bf16.mxu0 %v2181
        %2790 = vmatpush1.bf16.msra.mxu0 %v2180
        %2791 = vmatprep.subr.bf16.mxu0 %v2173
        %2792 = vmatpush1.bf16.msra.mxu0 %v2172
        %2793 = vmatprep.subr.bf16.mxu0 %v2165
        %2794 = vmatpush1.bf16.msra.mxu0 %v2164
        %2795 = vmatprep.subr.bf16.mxu0 %v2157
        %2796 = vmatpush1.bf16.msra.mxu0 %v2156
        %2797 = vmatprep.subr.bf16.mxu0 %v2149
        %2798 = vmatpush1.bf16.msra.mxu0 %v2148
        %2799 = vmatprep.subr.bf16.mxu0 %v2141
        %2800 = vmatpush1.bf16.msra.mxu0 %v2140
        %2801 = vmatprep.subr.bf16.mxu0 %v2133
        %2802 = vmatpush1.bf16.msra.mxu0 %v2132
        %2803 = vmatprep.subr.bf16.mxu0 %v2125
        %2804 = vmatpush1.bf16.msra.mxu0 %v2124
        %2805 = vmatprep.subr.bf16.mxu0 %v2245
        %2806 = vmatpush2.bf16.msra.mxu0 %v2244
        %2807 = vmatprep.subr.bf16.mxu0 %v2237
        %2808 = vmatpush2.bf16.msra.mxu0 %v2236
        %2809 = vmatprep.subr.bf16.mxu0 %v2229
        %2810 = vmatpush2.bf16.msra.mxu0 %v2228
        %2811 = vmatprep.subr.bf16.mxu0 %v2221
        %2812 = vmatpush2.bf16.msra.mxu0 %v2220
        %2813 = vmatprep.subr.bf16.mxu0 %v2213
        %2814 = vmatpush2.bf16.msra.mxu0 %v2212
        %2815 = vmatprep.subr.bf16.mxu0 %v2205
        %2816 = vmatpush2.bf16.msra.mxu0 %v2204
        %2817 = vmatprep.subr.bf16.mxu0 %v2197
        %2818 = vmatpush2.bf16.msra.mxu0 %v2196
        %2819 = vmatprep.subr.bf16.mxu0 %v2189
        %2820 = vmatpush2.bf16.msra.mxu0 %v2188
        %2821 = vmatprep.mubr.bf16.mxu0 %v923
        %2822 = vmatmul.mubr.bf16.gmra.mxu0 %v922
        %v2823 = vpop.f32.mrf.mxu0
        %v2824 = vadd.f32 %v2783, %v2823
        %v2825 = vpop.f32.mrf.mxu0
        %v2826 = vadd.f32 %v2785, %v2825
        %v2827 = vpop.f32.mrf.mxu0
        %v2828 = vpop.f32.mrf.mxu0
        %2829 = vdwg.mxu0
        %vm2830 = vcmp.gt.f32.partialorder %v2578, 0.0
        %vm2831 = vcmp.gt.f32.partialorder %v2580, 0.0
        %vm2832 = vcmp.gt.f32.partialorder %v2660, 0.0
        %vm2833 = vcmp.gt.f32.partialorder %v2662, 0.0
        %vm2834 = vcmp.gt.f32.partialorder %v2742, 0.0
        %vm2835 = vcmp.gt.f32.partialorder %v2744, 0.0
        %vm2836 = vcmp.gt.f32.partialorder %v2824, 0.0
        %vm2837 = vcmp.gt.f32.partialorder %v2826, 0.0
        %v2838 = vmul.f32 %v2578, 0.01
        %v2839 = vmul.f32 %v2580, 0.01
        %v2840 = vmul.f32 %v2660, 0.01
        %v2841 = vmul.f32 %v2662, 0.01
        %v2842 = vmul.f32 %v2742, 0.01
        %v2843 = vmul.f32 %v2744, 0.01
        %v2844 = vmul.f32 %v2824, 0.01
        %v2845 = vmul.f32 %v2826, 0.01
        %v2846 = vsel %vm2830, %v2578, %v2838
        %v2847 = vsel %vm2831, %v2580, %v2839
        %v2848 = vsel %vm2832, %v2660, %v2840
        %v2849 = vsel %vm2833, %v2662, %v2841
        %v2850 = vsel %vm2834, %v2742, %v2842
        %v2851 = vsel %vm2835, %v2744, %v2843
        %v2852 = vsel %vm2836, %v2824, %v2844
        %v2853 = vsel %vm2837, %v2826, %v2845
        %v2854 = vpack.c.bf16 %v2846, %v2846
        %v2855 = vpack.c.bf16 %v2847, %v2847
        %v2856 = vpack.c.bf16 %v2848, %v2848
        %v2857 = vpack.c.bf16 %v2849, %v2849
        %v2858 = vpack.c.bf16 %v2850, %v2850
        %v2859 = vpack.c.bf16 %v2851, %v2851
        %v2860 = vpack.c.bf16 %v2852, %v2852
        %v2861 = vpack.c.bf16 %v2853, %v2853
        %v2862 = vld [vmem:[%s7] sm:$0xff]
        %v2863 = vld [vmem:[%s7 + $0x8] sm:$0xff]
        %v2864 = vld [vmem:[%s7 + $0x10] sm:$0xff]
        %v2865 = vld [vmem:[%s7 + $0x18] sm:$0xf]
        %v2866 = vld [vmem:[%s7 + $0x1c] sm:$0xff]
        %v2867 = vld [vmem:[%s7 + $0x24] sm:$0xff]
        %v2868 = vld [vmem:[%s7 + $0x2c] sm:$0xff]
        %v2869 = vld [vmem:[%s7 + $0x34] sm:$0xf]
        %v2870 = vld [vmem:[%s7 + $0x38] sm:$0xff]
        %v2871 = vld [vmem:[%s7 + $0x40] sm:$0xff]
        %v2872 = vld [vmem:[%s7 + $0x48] sm:$0xff]
        %v2873 = vld [vmem:[%s7 + $0x50] sm:$0xf]
        %v2874 = vld [vmem:[%s7 + $0x54] sm:$0xff]
        %v2875 = vld [vmem:[%s7 + $0x5c] sm:$0xff]
        %v2876 = vld [vmem:[%s7 + $0x64] sm:$0xff]
        %v2877 = vld [vmem:[%s7 + $0x6c] sm:$0xf]
        %v2878 = vld [vmem:[%s7 + $0x70] sm:$0xff]
        %v2879 = vld [vmem:[%s7 + $0x78] sm:$0xff]
        %v2880 = vld [vmem:[%s7 + $0x80] sm:$0xff]
        %v2881 = vld [vmem:[%s7 + $0x88] sm:$0xf]
        %v2882 = vld [vmem:[%s7 + $0x8c] sm:$0xff]
        %v2883 = vld [vmem:[%s7 + $0x94] sm:$0xff]
        %v2884 = vld [vmem:[%s7 + $0x9c] sm:$0xff]
        %v2885 = vld [vmem:[%s7 + $0xa4] sm:$0xf]
        %v2886 = vld [vmem:[%s7 + $0xa8] sm:$0xff]
        %v2887 = vld [vmem:[%s7 + $0xb0] sm:$0xff]
        %v2888 = vld [vmem:[%s7 + $0xb8] sm:$0xff]
        %v2889 = vld [vmem:[%s7 + $0xc0] sm:$0xf]
        %v2890 = vld [vmem:[%s7 + $0xc4] sm:$0xff]
        %v2891 = vld [vmem:[%s7 + $0xcc] sm:$0xff]
        %v2892 = vld [vmem:[%s7 + $0xd4] sm:$0xff]
        %v2893 = vld [vmem:[%s7 + $0xdc] sm:$0xf]
        %v2894 = vld [vmem:[%s7 + $0xe0] sm:$0xff]
        %v2895 = vld [vmem:[%s7 + $0xe8] sm:$0xff]
        %v2896 = vld [vmem:[%s7 + $0xf0] sm:$0xff]
        %v2897 = vld [vmem:[%s7 + $0xf8] sm:$0xf]
        %v2898 = vld [vmem:[%s7 + $0xfc] sm:$0xff]
        %v2899 = vld [vmem:[%s7 + $0x104] sm:$0xff]
        %v2900 = vld [vmem:[%s7 + $0x10c] sm:$0xff]
        %v2901 = vld [vmem:[%s7 + $0x114] sm:$0xf]
        %v2902 = vld [vmem:[%s7 + $0x118] sm:$0xff]
        %v2903 = vld [vmem:[%s7 + $0x120] sm:$0xff]
        %v2904 = vld [vmem:[%s7 + $0x128] sm:$0xff]
        %v2905 = vld [vmem:[%s7 + $0x130] sm:$0xf]
        %v2906 = vld [vmem:[%s7 + $0x134] sm:$0xff]
        %v2907 = vld [vmem:[%s7 + $0x13c] sm:$0xff]
        %v2908 = vld [vmem:[%s7 + $0x144] sm:$0xff]
        %v2909 = vld [vmem:[%s7 + $0x14c] sm:$0xf]
        %v2910 = vld [vmem:[%s7 + $0x150] sm:$0xff]
        %v2911 = vld [vmem:[%s7 + $0x158] sm:$0xff]
        %v2912 = vld [vmem:[%s7 + $0x160] sm:$0xff]
        %v2913 = vld [vmem:[%s7 + $0x168] sm:$0xf]
        %v2914 = vld [vmem:[%s7 + $0x16c] sm:$0xff]
        %v2915 = vld [vmem:[%s7 + $0x174] sm:$0xff]
        %v2916 = vld [vmem:[%s7 + $0x17c] sm:$0xff]
        %v2917 = vld [vmem:[%s7 + $0x184] sm:$0xf]
        %v2918 = vld [vmem:[%s7 + $0x188] sm:$0xff]
        %v2919 = vld [vmem:[%s7 + $0x190] sm:$0xff]
        %v2920 = vld [vmem:[%s7 + $0x198] sm:$0xff]
        %v2921 = vld [vmem:[%s7 + $0x1a0] sm:$0xf]
        %v2922 = vld [vmem:[%s7 + $0x1a4] sm:$0xff]
        %v2923 = vld [vmem:[%s7 + $0x1ac] sm:$0xff]
        %v2924 = vld [vmem:[%s7 + $0x1b4] sm:$0xff]
        %v2925 = vld [vmem:[%s7 + $0x1bc] sm:$0xf]
        %v2926 = vld [vmem:[%s7 + $0x1c0] sm:$0xff]
        %v2927 = vld [vmem:[%s7 + $0x1c8] sm:$0xff]
        %v2928 = vld [vmem:[%s7 + $0x1d0] sm:$0xff]
        %v2929 = vld [vmem:[%s7 + $0x1d8] sm:$0xf]
        %v2930 = vld [vmem:[%s7 + $0x1dc] sm:$0xff]
        %v2931 = vld [vmem:[%s7 + $0x1e4] sm:$0xff]
        %v2932 = vld [vmem:[%s7 + $0x1ec] sm:$0xff]
        %v2933 = vld [vmem:[%s7 + $0x1f4] sm:$0xf]
        %v2934 = vld [vmem:[%s7 + $0x1f8] sm:$0xff]
        %v2935 = vld [vmem:[%s7 + $0x200] sm:$0xff]
        %v2936 = vld [vmem:[%s7 + $0x208] sm:$0xff]
        %v2937 = vld [vmem:[%s7 + $0x210] sm:$0xf]
        %v2938 = vld [vmem:[%s7 + $0x214] sm:$0xff]
        %v2939 = vld [vmem:[%s7 + $0x21c] sm:$0xff]
        %v2940 = vld [vmem:[%s7 + $0x224] sm:$0xff]
        %v2941 = vld [vmem:[%s7 + $0x22c] sm:$0xf]
        %v2942 = vld [vmem:[%s7 + $0x230] sm:$0xff]
        %v2943 = vld [vmem:[%s7 + $0x238] sm:$0xff]
        %v2944 = vld [vmem:[%s7 + $0x240] sm:$0xff]
        %v2945 = vld [vmem:[%s7 + $0x248] sm:$0xf]
        %v2946 = vld [vmem:[%s7 + $0x24c] sm:$0xff]
        %v2947 = vld [vmem:[%s7 + $0x254] sm:$0xff]
        %v2948 = vld [vmem:[%s7 + $0x25c] sm:$0xff]
        %v2949 = vld [vmem:[%s7 + $0x264] sm:$0xf]
        %v2950 = vld [vmem:[%s7 + $0x268] sm:$0xff]
        %v2951 = vld [vmem:[%s7 + $0x270] sm:$0xff]
        %v2952 = vld [vmem:[%s7 + $0x278] sm:$0xff]
        %v2953 = vld [vmem:[%s7 + $0x280] sm:$0xf]
        %v2954 = vld [vmem:[%s7 + $0x284] sm:$0xff]
        %v2955 = vld [vmem:[%s7 + $0x28c] sm:$0xff]
        %v2956 = vld [vmem:[%s7 + $0x294] sm:$0xff]
        %v2957 = vld [vmem:[%s7 + $0x29c] sm:$0xf]
        %v2958 = vld [vmem:[%s7 + $0x2a0] sm:$0xff]
        %v2959 = vld [vmem:[%s7 + $0x2a8] sm:$0xff]
        %v2960 = vld [vmem:[%s7 + $0x2b0] sm:$0xff]
        %v2961 = vld [vmem:[%s7 + $0x2b8] sm:$0xf]
        %v2962 = vld [vmem:[%s7 + $0x2bc] sm:$0xff]
        %v2963 = vld [vmem:[%s7 + $0x2c4] sm:$0xff]
        %v2964 = vld [vmem:[%s7 + $0x2cc] sm:$0xff]
        %v2965 = vld [vmem:[%s7 + $0x2d4] sm:$0xf]
        %v2966 = vld [vmem:[%s7 + $0x2d8] sm:$0xff]
        %v2967 = vld [vmem:[%s7 + $0x2e0] sm:$0xff]
        %v2968 = vld [vmem:[%s7 + $0x2e8] sm:$0xff]
        %v2969 = vld [vmem:[%s7 + $0x2f0] sm:$0xf]
        %v2970 = vld [vmem:[%s7 + $0x2f4] sm:$0xff]
        %v2971 = vld [vmem:[%s7 + $0x2fc] sm:$0xff]
        %v2972 = vld [vmem:[%s7 + $0x304] sm:$0xff]
        %v2973 = vld [vmem:[%s7 + $0x30c] sm:$0xf]
        %v2974 = vld [vmem:[%s7 + $0x310] sm:$0xff]
        %v2975 = vld [vmem:[%s7 + $0x318] sm:$0xff]
        %v2976 = vld [vmem:[%s7 + $0x320] sm:$0xff]
        %v2977 = vld [vmem:[%s7 + $0x328] sm:$0xf]
        %v2978 = vld [vmem:[%s7 + $0x32c] sm:$0xff]
        %v2979 = vld [vmem:[%s7 + $0x334] sm:$0xff]
        %v2980 = vld [vmem:[%s7 + $0x33c] sm:$0xff]
        %v2981 = vld [vmem:[%s7 + $0x344] sm:$0xf]
        %v2982 = vld [vmem:[%s7 + $0x348] sm:$0xff]
        %v2983 = vld [vmem:[%s7 + $0x350] sm:$0xff]
        %v2984 = vld [vmem:[%s7 + $0x358] sm:$0xff]
        %v2985 = vld [vmem:[%s7 + $0x360] sm:$0xf]
        %v2986 = vld [vmem:[%s7 + $0x364] sm:$0xff]
        %v2987 = vld [vmem:[%s7 + $0x36c] sm:$0xff]
        %v2988 = vld [vmem:[%s7 + $0x374] sm:$0xff]
        %v2989 = vld [vmem:[%s7 + $0x37c] sm:$0xf]
        %v2990 = vld [vmem:[%s7 + $0x380] sm:$0xff]
        %v2991 = vld [vmem:[%s7 + $0x388] sm:$0xff]
        %v2992 = vld [vmem:[%s7 + $0x390] sm:$0xff]
        %v2993 = vld [vmem:[%s7 + $0x398] sm:$0xf]
        %v2994 = vld [vmem:[%s7 + $0x39c] sm:$0xff]
        %v2995 = vld [vmem:[%s7 + $0x3a4] sm:$0xff]
        %v2996 = vld [vmem:[%s7 + $0x3ac] sm:$0xff]
        %v2997 = vld [vmem:[%s7 + $0x3b4] sm:$0xf]
        %v2998 = vld [vmem:[%s7 + $0x3b8] sm:$0xff]
        %v2999 = vld [vmem:[%s7 + $0x3c0] sm:$0xff]
        %v3000 = vld [vmem:[%s7 + $0x3c8] sm:$0xff]
        %v3001 = vld [vmem:[%s7 + $0x3d0] sm:$0xf]
        %v3002 = vld [vmem:[%s7 + $0x3d4] sm:$0xff]
        %v3003 = vld [vmem:[%s7 + $0x3dc] sm:$0xff]
        %v3004 = vld [vmem:[%s7 + $0x3e4] sm:$0xff]
        %v3005 = vld [vmem:[%s7 + $0x3ec] sm:$0xf]
        %v3006 = vld [vmem:[%s7 + $0x3f0] sm:$0xff]
        %v3007 = vld [vmem:[%s7 + $0x3f8] sm:$0xff]
        %v3008 = vld [vmem:[%s7 + $0x400] sm:$0xff]
        %v3009 = vld [vmem:[%s7 + $0x408] sm:$0xf]
        %v3010 = vld [vmem:[%s7 + $0x40c] sm:$0xff]
        %v3011 = vld [vmem:[%s7 + $0x414] sm:$0xff]
        %v3012 = vld [vmem:[%s7 + $0x41c] sm:$0xff]
        %v3013 = vld [vmem:[%s7 + $0x424] sm:$0xf]
        %v3014 = vld [vmem:[%s7 + $0x428] sm:$0xff]
        %v3015 = vld [vmem:[%s7 + $0x430] sm:$0xff]
        %v3016 = vld [vmem:[%s7 + $0x438] sm:$0xff]
        %v3017 = vld [vmem:[%s7 + $0x440] sm:$0xf]
        %v3018 = vld [vmem:[%s7 + $0x444] sm:$0xff]
        %v3019 = vld [vmem:[%s7 + $0x44c] sm:$0xff]
        %v3020 = vld [vmem:[%s7 + $0x454] sm:$0xff]
        %v3021 = vld [vmem:[%s7 + $0x45c] sm:$0xf]
        %v3022 = vld [vmem:[%s7 + $0x460] sm:$0xff]
        %v3023 = vld [vmem:[%s7 + $0x468] sm:$0xff]
        %v3024 = vld [vmem:[%s7 + $0x470] sm:$0xff]
        %v3025 = vld [vmem:[%s7 + $0x478] sm:$0xf]
        %v3026 = vld [vmem:[%s7 + $0x47c] sm:$0xff]
        %v3027 = vld [vmem:[%s7 + $0x484] sm:$0xff]
        %v3028 = vld [vmem:[%s7 + $0x48c] sm:$0xff]
        %v3029 = vld [vmem:[%s7 + $0x494] sm:$0xf]
        %v3030 = vld [vmem:[%s7 + $0x498] sm:$0xff]
        %v3031 = vld [vmem:[%s7 + $0x4a0] sm:$0xff]
        %v3032 = vld [vmem:[%s7 + $0x4a8] sm:$0xff]
        %v3033 = vld [vmem:[%s7 + $0x4b0] sm:$0xf]
        %v3034 = vld [vmem:[%s7 + $0x4b4] sm:$0xff]
        %v3035 = vld [vmem:[%s7 + $0x4bc] sm:$0xff]
        %v3036 = vld [vmem:[%s7 + $0x4c4] sm:$0xff]
        %v3037 = vld [vmem:[%s7 + $0x4cc] sm:$0xf]
        %v3038 = vld [vmem:[%s7 + $0x4d0] sm:$0xff]
        %v3039 = vld [vmem:[%s7 + $0x4d8] sm:$0xff]
        %v3040 = vld [vmem:[%s7 + $0x4e0] sm:$0xff]
        %v3041 = vld [vmem:[%s7 + $0x4e8] sm:$0xf]
        %v3042 = vld [vmem:[%s7 + $0x4ec] sm:$0xff]
        %v3043 = vld [vmem:[%s7 + $0x4f4] sm:$0xff]
        %v3044 = vld [vmem:[%s7 + $0x4fc] sm:$0xff]
        %v3045 = vld [vmem:[%s7 + $0x504] sm:$0xf]
        %v3046 = vld [vmem:[%s7 + $0x508] sm:$0xff]
        %v3047 = vld [vmem:[%s7 + $0x510] sm:$0xff]
        %v3048 = vld [vmem:[%s7 + $0x518] sm:$0xff]
        %v3049 = vld [vmem:[%s7 + $0x520] sm:$0xf]
        %v3050 = vld [vmem:[%s7 + $0x524] sm:$0xff]
        %v3051 = vld [vmem:[%s7 + $0x52c] sm:$0xff]
        %v3052 = vld [vmem:[%s7 + $0x534] sm:$0xff]
        %v3053 = vld [vmem:[%s7 + $0x53c] sm:$0xf]
        %v3054 = vld [vmem:[%s7 + $0x540] sm:$0xff]
        %v3055 = vld [vmem:[%s7 + $0x548] sm:$0xff]
        %v3056 = vld [vmem:[%s7 + $0x550] sm:$0xff]
        %v3057 = vld [vmem:[%s7 + $0x558] sm:$0xf]
        %v3058 = vld [vmem:[%s7 + $0x55c] sm:$0xff]
        %v3059 = vld [vmem:[%s7 + $0x564] sm:$0xff]
        %v3060 = vld [vmem:[%s7 + $0x56c] sm:$0xff]
        %v3061 = vld [vmem:[%s7 + $0x574] sm:$0xf]
        %v3062 = vld [vmem:[%s7 + $0x578] sm:$0xff]
        %v3063 = vld [vmem:[%s7 + $0x580] sm:$0xff]
        %v3064 = vld [vmem:[%s7 + $0x588] sm:$0xff]
        %v3065 = vld [vmem:[%s7 + $0x590] sm:$0xf]
        %v3066 = vld [vmem:[%s7 + $0x594] sm:$0xff]
        %v3067 = vld [vmem:[%s7 + $0x59c] sm:$0xff]
        %v3068 = vld [vmem:[%s7 + $0x5a4] sm:$0xff]
        %v3069 = vld [vmem:[%s7 + $0x5ac] sm:$0xf]
        %v3070 = vld [vmem:[%s7 + $0x5b0] sm:$0xff]
        %v3071 = vld [vmem:[%s7 + $0x5b8] sm:$0xff]
        %v3072 = vld [vmem:[%s7 + $0x5c0] sm:$0xff]
        %v3073 = vld [vmem:[%s7 + $0x5c8] sm:$0xf]
        %v3074 = vld [vmem:[%s7 + $0x5cc] sm:$0xff]
        %v3075 = vld [vmem:[%s7 + $0x5d4] sm:$0xff]
        %v3076 = vld [vmem:[%s7 + $0x5dc] sm:$0xff]
        %v3077 = vld [vmem:[%s7 + $0x5e4] sm:$0xf]
        %v3078 = vld [vmem:[%s7 + $0x5e8] sm:$0xff]
        %v3079 = vld [vmem:[%s7 + $0x5f0] sm:$0xff]
        %v3080 = vld [vmem:[%s7 + $0x5f8] sm:$0xff]
        %v3081 = vld [vmem:[%s7 + $0x600] sm:$0xf]
        %v3082 = vld [vmem:[%s7 + $0x604] sm:$0xff]
        %v3083 = vld [vmem:[%s7 + $0x60c] sm:$0xff]
        %v3084 = vld [vmem:[%s7 + $0x614] sm:$0xff]
        %v3085 = vld [vmem:[%s7 + $0x61c] sm:$0xf]
        %v3086 = vld [vmem:[%s7 + $0x620] sm:$0xff]
        %v3087 = vld [vmem:[%s7 + $0x628] sm:$0xff]
        %v3088 = vld [vmem:[%s7 + $0x630] sm:$0xff]
        %v3089 = vld [vmem:[%s7 + $0x638] sm:$0xf]
        %v3090 = vld [vmem:[%s7 + $0x63c] sm:$0xff]
        %v3091 = vld [vmem:[%s7 + $0x644] sm:$0xff]
        %v3092 = vld [vmem:[%s7 + $0x64c] sm:$0xff]
        %v3093 = vld [vmem:[%s7 + $0x654] sm:$0xf]
        %v3094 = vld [vmem:[%s7 + $0x658] sm:$0xff]
        %v3095 = vld [vmem:[%s7 + $0x660] sm:$0xff]
        %v3096 = vld [vmem:[%s7 + $0x668] sm:$0xff]
        %v3097 = vld [vmem:[%s7 + $0x670] sm:$0xf]
        %v3098 = vld [vmem:[%s7 + $0x674] sm:$0xff]
        %v3099 = vld [vmem:[%s7 + $0x67c] sm:$0xff]
        %v3100 = vld [vmem:[%s7 + $0x684] sm:$0xff]
        %v3101 = vld [vmem:[%s7 + $0x68c] sm:$0xf]
        %v3102 = vld [vmem:[%s7 + $0x690] sm:$0xff]
        %v3103 = vld [vmem:[%s7 + $0x698] sm:$0xff]
        %v3104 = vld [vmem:[%s7 + $0x6a0] sm:$0xff]
        %v3105 = vld [vmem:[%s7 + $0x6a8] sm:$0xf]
        %v3106 = vld [vmem:[%s7 + $0x6ac] sm:$0xff]
        %v3107 = vld [vmem:[%s7 + $0x6b4] sm:$0xff]
        %v3108 = vld [vmem:[%s7 + $0x6bc] sm:$0xff]
        %v3109 = vld [vmem:[%s7 + $0x6c4] sm:$0xf]
        %v3110 = vld [vmem:[%s7 + $0x6c8] sm:$0xff]
        %v3111 = vld [vmem:[%s7 + $0x6d0] sm:$0xff]
        %v3112 = vld [vmem:[%s7 + $0x6d8] sm:$0xff]
        %v3113 = vld [vmem:[%s7 + $0x6e0] sm:$0xf]
        %v3114 = vld [vmem:[%s7 + $0x6e4] sm:$0xff]
        %v3115 = vld [vmem:[%s7 + $0x6ec] sm:$0xff]
        %v3116 = vld [vmem:[%s7 + $0x6f4] sm:$0xff]
        %v3117 = vld [vmem:[%s7 + $0x6fc] sm:$0xf]
        %v3118 = vld [vmem:[%s7 + $0x700] sm:$0xff]
        %v3119 = vld [vmem:[%s7 + $0x708] sm:$0xff]
        %v3120 = vld [vmem:[%s7 + $0x710] sm:$0xff]
        %v3121 = vld [vmem:[%s7 + $0x718] sm:$0xf]
        %v3122 = vld [vmem:[%s7 + $0x71c] sm:$0xff]
        %v3123 = vld [vmem:[%s7 + $0x724] sm:$0xff]
        %v3124 = vld [vmem:[%s7 + $0x72c] sm:$0xff]
        %v3125 = vld [vmem:[%s7 + $0x734] sm:$0xf]
        %v3126 = vld [vmem:[%s7 + $0x738] sm:$0xff]
        %v3127 = vld [vmem:[%s7 + $0x740] sm:$0xff]
        %v3128 = vld [vmem:[%s7 + $0x748] sm:$0xff]
        %v3129 = vld [vmem:[%s7 + $0x750] sm:$0xf]
        %v3130 = vld [vmem:[%s7 + $0x754] sm:$0xff]
        %v3131 = vld [vmem:[%s7 + $0x75c] sm:$0xff]
        %v3132 = vld [vmem:[%s7 + $0x764] sm:$0xff]
        %v3133 = vld [vmem:[%s7 + $0x76c] sm:$0xf]
        %v3134 = vld [vmem:[%s7 + $0x770] sm:$0xff]
        %v3135 = vld [vmem:[%s7 + $0x778] sm:$0xff]
        %v3136 = vld [vmem:[%s7 + $0x780] sm:$0xff]
        %v3137 = vld [vmem:[%s7 + $0x788] sm:$0xf]
        %v3138 = vld [vmem:[%s7 + $0x78c] sm:$0xff]
        %v3139 = vld [vmem:[%s7 + $0x794] sm:$0xff]
        %v3140 = vld [vmem:[%s7 + $0x79c] sm:$0xff]
        %v3141 = vld [vmem:[%s7 + $0x7a4] sm:$0xf]
        %v3142 = vld [vmem:[%s7 + $0x7a8] sm:$0xff]
        %v3143 = vld [vmem:[%s7 + $0x7b0] sm:$0xff]
        %v3144 = vld [vmem:[%s7 + $0x7b8] sm:$0xff]
        %v3145 = vld [vmem:[%s7 + $0x7c0] sm:$0xf]
        %v3146 = vld [vmem:[%s7 + $0x7c4] sm:$0xff]
        %v3147 = vld [vmem:[%s7 + $0x7cc] sm:$0xff]
        %v3148 = vld [vmem:[%s7 + $0x7d4] sm:$0xff]
        %v3149 = vld [vmem:[%s7 + $0x7dc] sm:$0xf]
        %v3150 = vld [vmem:[%s7 + $0x7e0] sm:$0xff]
        %v3151 = vld [vmem:[%s7 + $0x7e8] sm:$0xff]
        %v3152 = vld [vmem:[%s7 + $0x7f0] sm:$0xff]
        %v3153 = vld [vmem:[%s7 + $0x7f8] sm:$0xf]
        %v3154 = vld [vmem:[%s7 + $0x7fc] sm:$0xff]
        %v3155 = vld [vmem:[%s7 + $0x804] sm:$0xff]
        %v3156 = vld [vmem:[%s7 + $0x80c] sm:$0xff]
        %v3157 = vld [vmem:[%s7 + $0x814] sm:$0xf]
        %v3158 = vld [vmem:[%s7 + $0x818] sm:$0xff]
        %v3159 = vld [vmem:[%s7 + $0x820] sm:$0xff]
        %v3160 = vld [vmem:[%s7 + $0x828] sm:$0xff]
        %v3161 = vld [vmem:[%s7 + $0x830] sm:$0xf]
        %v3162 = vld [vmem:[%s7 + $0x834] sm:$0xff]
        %v3163 = vld [vmem:[%s7 + $0x83c] sm:$0xff]
        %v3164 = vld [vmem:[%s7 + $0x844] sm:$0xff]
        %v3165 = vld [vmem:[%s7 + $0x84c] sm:$0xf]
        %v3166 = vld [vmem:[%s7 + $0x850] sm:$0xff]
        %v3167 = vld [vmem:[%s7 + $0x858] sm:$0xff]
        %v3168 = vld [vmem:[%s7 + $0x860] sm:$0xff]
        %v3169 = vld [vmem:[%s7 + $0x868] sm:$0xf]
        %v3170 = vld [vmem:[%s7 + $0x86c] sm:$0xff]
        %v3171 = vld [vmem:[%s7 + $0x874] sm:$0xff]
        %v3172 = vld [vmem:[%s7 + $0x87c] sm:$0xff]
        %v3173 = vld [vmem:[%s7 + $0x884] sm:$0xf]
        %v3174 = vld [vmem:[%s7 + $0x888] sm:$0xff]
        %v3175 = vld [vmem:[%s7 + $0x890] sm:$0xff]
        %v3176 = vld [vmem:[%s7 + $0x898] sm:$0xff]
        %v3177 = vld [vmem:[%s7 + $0x8a0] sm:$0xf]
        %v3178 = vld [vmem:[%s7 + $0x8a4] sm:$0xff]
        %v3179 = vld [vmem:[%s7 + $0x8ac] sm:$0xff]
        %v3180 = vld [vmem:[%s7 + $0x8b4] sm:$0xff]
        %v3181 = vld [vmem:[%s7 + $0x8bc] sm:$0xf]
        %v3182 = vld [vmem:[%s7 + $0x8c0] sm:$0xff]
        %v3183 = vld [vmem:[%s7 + $0x8c8] sm:$0xff]
        %v3184 = vld [vmem:[%s7 + $0x8d0] sm:$0xff]
        %v3185 = vld [vmem:[%s7 + $0x8d8] sm:$0xf]
        %v3186 = vld [vmem:[%s7 + $0x8dc] sm:$0xff]
        %v3187 = vld [vmem:[%s7 + $0x8e4] sm:$0xff]
        %v3188 = vld [vmem:[%s7 + $0x8ec] sm:$0xff]
        %v3189 = vld [vmem:[%s7 + $0x8f4] sm:$0xf]
        %v3190 = vld [vmem:[%s7 + $0x8f8] sm:$0xff]
        %v3191 = vld [vmem:[%s7 + $0x900] sm:$0xff]
        %v3192 = vld [vmem:[%s7 + $0x908] sm:$0xff]
        %v3193 = vld [vmem:[%s7 + $0x910] sm:$0xf]
        %v3194 = vld [vmem:[%s7 + $0x914] sm:$0xff]
        %v3195 = vld [vmem:[%s7 + $0x91c] sm:$0xff]
        %v3196 = vld [vmem:[%s7 + $0x924] sm:$0xff]
        %v3197 = vld [vmem:[%s7 + $0x92c] sm:$0xf]
        %v3198 = vld [vmem:[%s7 + $0x930] sm:$0xff]
        %v3199 = vld [vmem:[%s7 + $0x938] sm:$0xff]
        %v3200 = vld [vmem:[%s7 + $0x940] sm:$0xff]
        %v3201 = vld [vmem:[%s7 + $0x948] sm:$0xf]
        %v3202 = vld [vmem:[%s7 + $0x94c] sm:$0xff]
        %v3203 = vld [vmem:[%s7 + $0x954] sm:$0xff]
        %v3204 = vld [vmem:[%s7 + $0x95c] sm:$0xff]
        %v3205 = vld [vmem:[%s7 + $0x964] sm:$0xf]
        %v3206 = vld [vmem:[%s7 + $0x968] sm:$0xff]
        %v3207 = vld [vmem:[%s7 + $0x970] sm:$0xff]
        %v3208 = vld [vmem:[%s7 + $0x978] sm:$0xff]
        %v3209 = vld [vmem:[%s7 + $0x980] sm:$0xf]
        %v3210 = vld [vmem:[%s7 + $0x984] sm:$0xff]
        %v3211 = vld [vmem:[%s7 + $0x98c] sm:$0xff]
        %v3212 = vld [vmem:[%s7 + $0x994] sm:$0xff]
        %v3213 = vld [vmem:[%s7 + $0x99c] sm:$0xf]
        %v3214 = vld [vmem:[%s7 + $0x9a0] sm:$0xff]
        %v3215 = vld [vmem:[%s7 + $0x9a8] sm:$0xff]
        %v3216 = vld [vmem:[%s7 + $0x9b0] sm:$0xff]
        %v3217 = vld [vmem:[%s7 + $0x9b8] sm:$0xf]
        %v3218 = vld [vmem:[%s7 + $0x9bc] sm:$0xff]
        %v3219 = vld [vmem:[%s7 + $0x9c4] sm:$0xff]
        %v3220 = vld [vmem:[%s7 + $0x9cc] sm:$0xff]
        %v3221 = vld [vmem:[%s7 + $0x9d4] sm:$0xf]
        %v3222 = vld [vmem:[%s7 + $0x9d8] sm:$0xff]
        %v3223 = vld [vmem:[%s7 + $0x9e0] sm:$0xff]
        %v3224 = vld [vmem:[%s7 + $0x9e8] sm:$0xff]
        %v3225 = vld [vmem:[%s7 + $0x9f0] sm:$0xf]
        %v3226 = vld [vmem:[%s7 + $0x9f4] sm:$0xff]
        %v3227 = vld [vmem:[%s7 + $0x9fc] sm:$0xff]
        %v3228 = vld [vmem:[%s7 + $0xa04] sm:$0xff]
        %v3229 = vld [vmem:[%s7 + $0xa0c] sm:$0xf]
        %v3230 = vld [vmem:[%s7 + $0xa10] sm:$0xff]
        %v3231 = vld [vmem:[%s7 + $0xa18] sm:$0xff]
        %v3232 = vld [vmem:[%s7 + $0xa20] sm:$0xff]
        %v3233 = vld [vmem:[%s7 + $0xa28] sm:$0xf]
        %v3234 = vld [vmem:[%s7 + $0xa2c] sm:$0xff]
        %v3235 = vld [vmem:[%s7 + $0xa34] sm:$0xff]
        %v3236 = vld [vmem:[%s7 + $0xa3c] sm:$0xff]
        %v3237 = vld [vmem:[%s7 + $0xa44] sm:$0xf]
        %v3238 = vld [vmem:[%s7 + $0xa48] sm:$0xff]
        %v3239 = vld [vmem:[%s7 + $0xa50] sm:$0xff]
        %v3240 = vld [vmem:[%s7 + $0xa58] sm:$0xff]
        %v3241 = vld [vmem:[%s7 + $0xa60] sm:$0xf]
        %v3242 = vld [vmem:[%s7 + $0xa64] sm:$0xff]
        %v3243 = vld [vmem:[%s7 + $0xa6c] sm:$0xff]
        %v3244 = vld [vmem:[%s7 + $0xa74] sm:$0xff]
        %v3245 = vld [vmem:[%s7 + $0xa7c] sm:$0xf]
        %v3246 = vld [vmem:[%s7 + $0xa80] sm:$0xff]
        %v3247 = vld [vmem:[%s7 + $0xa88] sm:$0xff]
        %v3248 = vld [vmem:[%s7 + $0xa90] sm:$0xff]
        %v3249 = vld [vmem:[%s7 + $0xa98] sm:$0xf]
        %v3250 = vld [vmem:[%s7 + $0xa9c] sm:$0xff]
        %v3251 = vld [vmem:[%s7 + $0xaa4] sm:$0xff]
        %v3252 = vld [vmem:[%s7 + $0xaac] sm:$0xff]
        %v3253 = vld [vmem:[%s7 + $0xab4] sm:$0xf]
        %v3254 = vld [vmem:[%s7 + $0xab8] sm:$0xff]
        %v3255 = vld [vmem:[%s7 + $0xac0] sm:$0xff]
        %v3256 = vld [vmem:[%s7 + $0xac8] sm:$0xff]
        %v3257 = vld [vmem:[%s7 + $0xad0] sm:$0xf]
        %v3258 = vld [vmem:[%s7 + $0xad4] sm:$0xff]
        %v3259 = vld [vmem:[%s7 + $0xadc] sm:$0xff]
        %v3260 = vld [vmem:[%s7 + $0xae4] sm:$0xff]
        %v3261 = vld [vmem:[%s7 + $0xaec] sm:$0xf]
        %v3262 = vld [vmem:[%s7 + $0xaf0] sm:$0xff]
        %v3263 = vld [vmem:[%s7 + $0xaf8] sm:$0xff]
        %v3264 = vld [vmem:[%s7 + $0xb00] sm:$0xff]
        %v3265 = vld [vmem:[%s7 + $0xb08] sm:$0xf]
        %v3266 = vld [vmem:[%s7 + $0xb0c] sm:$0xff]
        %v3267 = vld [vmem:[%s7 + $0xb14] sm:$0xff]
        %v3268 = vld [vmem:[%s7 + $0xb1c] sm:$0xff]
        %v3269 = vld [vmem:[%s7 + $0xb24] sm:$0xf]
        %v3270 = vld [vmem:[%s7 + $0xb28] sm:$0xff]
        %v3271 = vld [vmem:[%s7 + $0xb30] sm:$0xff]
        %v3272 = vld [vmem:[%s7 + $0xb38] sm:$0xff]
        %v3273 = vld [vmem:[%s7 + $0xb40] sm:$0xf]
        %v3274 = vld [vmem:[%s7 + $0xb44] sm:$0xff]
        %v3275 = vld [vmem:[%s7 + $0xb4c] sm:$0xff]
        %v3276 = vld [vmem:[%s7 + $0xb54] sm:$0xff]
        %v3277 = vld [vmem:[%s7 + $0xb5c] sm:$0xf]
        %v3278 = vld [vmem:[%s7 + $0xb60] sm:$0xff]
        %v3279 = vld [vmem:[%s7 + $0xb68] sm:$0xff]
        %v3280 = vld [vmem:[%s7 + $0xb70] sm:$0xff]
        %v3281 = vld [vmem:[%s7 + $0xb78] sm:$0xf]
        %v3282 = vld [vmem:[%s7 + $0xb7c] sm:$0xff]
        %v3283 = vld [vmem:[%s7 + $0xb84] sm:$0xff]
        %v3284 = vld [vmem:[%s7 + $0xb8c] sm:$0xff]
        %v3285 = vld [vmem:[%s7 + $0xb94] sm:$0xf]
        %v3286 = vld [vmem:[%s7 + $0xb98] sm:$0xff]
        %v3287 = vld [vmem:[%s7 + $0xba0] sm:$0xff]
        %v3288 = vld [vmem:[%s7 + $0xba8] sm:$0xff]
        %v3289 = vld [vmem:[%s7 + $0xbb0] sm:$0xf]
        %v3290 = vld [vmem:[%s7 + $0xbb4] sm:$0xff]
        %v3291 = vld [vmem:[%s7 + $0xbbc] sm:$0xff]
        %v3292 = vld [vmem:[%s7 + $0xbc4] sm:$0xff]
        %v3293 = vld [vmem:[%s7 + $0xbcc] sm:$0xf]
        %v3294 = vld [vmem:[%s7 + $0xbd0] sm:$0xff]
        %v3295 = vld [vmem:[%s7 + $0xbd8] sm:$0xff]
        %v3296 = vld [vmem:[%s7 + $0xbe0] sm:$0xff]
        %v3297 = vld [vmem:[%s7 + $0xbe8] sm:$0xf]
        %v3298 = vld [vmem:[%s7 + $0xbec] sm:$0xff]
        %v3299 = vld [vmem:[%s7 + $0xbf4] sm:$0xff]
        %v3300 = vld [vmem:[%s7 + $0xbfc] sm:$0xff]
        %v3301 = vld [vmem:[%s7 + $0xc04] sm:$0xf]
        %v3302 = vld [vmem:[%s7 + $0xc08] sm:$0xff]
        %v3303 = vld [vmem:[%s7 + $0xc10] sm:$0xff]
        %v3304 = vld [vmem:[%s7 + $0xc18] sm:$0xff]
        %v3305 = vld [vmem:[%s7 + $0xc20] sm:$0xf]
        %v3306 = vld [vmem:[%s7 + $0xc24] sm:$0xff]
        %v3307 = vld [vmem:[%s7 + $0xc2c] sm:$0xff]
        %v3308 = vld [vmem:[%s7 + $0xc34] sm:$0xff]
        %v3309 = vld [vmem:[%s7 + $0xc3c] sm:$0xf]
        %v3310 = vld [vmem:[%s7 + $0xc40] sm:$0xff]
        %v3311 = vld [vmem:[%s7 + $0xc48] sm:$0xff]
        %v3312 = vld [vmem:[%s7 + $0xc50] sm:$0xff]
        %v3313 = vld [vmem:[%s7 + $0xc58] sm:$0xf]
        %v3314 = vld [vmem:[%s7 + $0xc5c] sm:$0xff]
        %v3315 = vld [vmem:[%s7 + $0xc64] sm:$0xff]
        %v3316 = vld [vmem:[%s7 + $0xc6c] sm:$0xff]
        %v3317 = vld [vmem:[%s7 + $0xc74] sm:$0xf]
        %v3318 = vld [vmem:[%s7 + $0xc78] sm:$0xff]
        %v3319 = vld [vmem:[%s7 + $0xc80] sm:$0xff]
        %v3320 = vld [vmem:[%s7 + $0xc88] sm:$0xff]
        %v3321 = vld [vmem:[%s7 + $0xc90] sm:$0xf]
        %v3322 = vld [vmem:[%s7 + $0xc94] sm:$0xff]
        %v3323 = vld [vmem:[%s7 + $0xc9c] sm:$0xff]
        %v3324 = vld [vmem:[%s7 + $0xca4] sm:$0xff]
        %v3325 = vld [vmem:[%s7 + $0xcac] sm:$0xf]
        %v3326 = vld [vmem:[%s7 + $0xcb0] sm:$0xff]
        %v3327 = vld [vmem:[%s7 + $0xcb8] sm:$0xff]
        %v3328 = vld [vmem:[%s7 + $0xcc0] sm:$0xff]
        %v3329 = vld [vmem:[%s7 + $0xcc8] sm:$0xf]
        %v3330 = vld [vmem:[%s7 + $0xccc] sm:$0xff]
        %v3331 = vld [vmem:[%s7 + $0xcd4] sm:$0xff]
        %v3332 = vld [vmem:[%s7 + $0xcdc] sm:$0xff]
        %v3333 = vld [vmem:[%s7 + $0xce4] sm:$0xf]
        %v3334 = vld [vmem:[%s7 + $0xce8] sm:$0xff]
        %v3335 = vld [vmem:[%s7 + $0xcf0] sm:$0xff]
        %v3336 = vld [vmem:[%s7 + $0xcf8] sm:$0xff]
        %v3337 = vld [vmem:[%s7 + $0xd00] sm:$0xf]
        %v3338 = vld [vmem:[%s7 + $0xd04] sm:$0xff]
        %v3339 = vld [vmem:[%s7 + $0xd0c] sm:$0xff]
        %v3340 = vld [vmem:[%s7 + $0xd14] sm:$0xff]
        %v3341 = vld [vmem:[%s7 + $0xd1c] sm:$0xf]
        %v3342 = vld [vmem:[%s7 + $0xd20] sm:$0xff]
        %v3343 = vld [vmem:[%s7 + $0xd28] sm:$0xff]
        %v3344 = vld [vmem:[%s7 + $0xd30] sm:$0xff]
        %v3345 = vld [vmem:[%s7 + $0xd38] sm:$0xf]
        %v3346 = vld [vmem:[%s7 + $0xd3c] sm:$0xff]
        %v3347 = vld [vmem:[%s7 + $0xd44] sm:$0xff]
        %v3348 = vld [vmem:[%s7 + $0xd4c] sm:$0xff]
        %v3349 = vld [vmem:[%s7 + $0xd54] sm:$0xf]
        %v3350 = vld [vmem:[%s7 + $0xd58] sm:$0xff]
        %v3351 = vld [vmem:[%s7 + $0xd60] sm:$0xff]
        %v3352 = vld [vmem:[%s7 + $0xd68] sm:$0xff]
        %v3353 = vld [vmem:[%s7 + $0xd70] sm:$0xf]
        %v3354 = vld [vmem:[%s7 + $0xd74] sm:$0xff]
        %v3355 = vld [vmem:[%s7 + $0xd7c] sm:$0xff]
        %v3356 = vld [vmem:[%s7 + $0xd84] sm:$0xff]
        %v3357 = vld [vmem:[%s7 + $0xd8c] sm:$0xf]
        %v3358 = vld [vmem:[%s7 + $0xd90] sm:$0xff]
        %v3359 = vld [vmem:[%s7 + $0xd98] sm:$0xff]
        %v3360 = vld [vmem:[%s7 + $0xda0] sm:$0xff]
        %v3361 = vld [vmem:[%s7 + $0xda8] sm:$0xf]
        %v3362 = vld [vmem:[%s7 + $0xdac] sm:$0xff]
        %v3363 = vld [vmem:[%s7 + $0xdb4] sm:$0xff]
        %v3364 = vld [vmem:[%s7 + $0xdbc] sm:$0xff]
        %v3365 = vld [vmem:[%s7 + $0xdc4] sm:$0xf]
        %v3366 = vld [vmem:[%s7 + $0xdc8] sm:$0xff]
        %v3367 = vld [vmem:[%s7 + $0xdd0] sm:$0xff]
        %v3368 = vld [vmem:[%s7 + $0xdd8] sm:$0xff]
        %v3369 = vld [vmem:[%s7 + $0xde0] sm:$0xf]
        %v3370 = vld [vmem:[%s7 + $0xde4] sm:$0xff]
        %v3371 = vld [vmem:[%s7 + $0xdec] sm:$0xff]
        %v3372 = vld [vmem:[%s7 + $0xdf4] sm:$0xff]
        %v3373 = vld [vmem:[%s7 + $0xdfc] sm:$0xf]
        %v3374 = vld [vmem:[%s8] sm:$0x7f]
        %v3376 = vlaneseq
        %v3377 = vshrl.u32 %v3376, 7
        %v3378 = vsub.s32 0, %v3377
        %v3379 = vrot.slane %v3374, %v3378
        %v3380 = vlaneseq
        %v3381 = vshrl.u32 %v3380, 7
        %v3382 = vsub.s32 1, %v3381
        %v3383 = vrot.slane %v3374, %v3382
        %v3384 = vlaneseq
        %v3385 = vshrl.u32 %v3384, 7
        %v3386 = vsub.s32 2, %v3385
        %v3387 = vrot.slane %v3374, %v3386
        %v3388 = vlaneseq
        %v3389 = vshrl.u32 %v3388, 7
        %v3390 = vsub.s32 3, %v3389
        %v3391 = vrot.slane %v3374, %v3390
        %v3392 = vlaneseq
        %v3393 = vshrl.u32 %v3392, 7
        %v3394 = vsub.s32 4, %v3393
        %v3395 = vrot.slane %v3374, %v3394
        %v3396 = vlaneseq
        %v3397 = vshrl.u32 %v3396, 7
        %v3398 = vsub.s32 5, %v3397
        %v3399 = vrot.slane %v3374, %v3398
        %v3400 = vlaneseq
        %v3401 = vshrl.u32 %v3400, 7
        %v3402 = vsub.s32 6, %v3401
        %v3403 = vrot.slane %v3374, %v3402
        %v3923 = vunpack.c.l.b16 %v2862
        %v3924 = vunpack.c.h.b16 %v2862
        %v3925 = vunpack.c.l.b16 %v2863
        %v3926 = vunpack.c.h.b16 %v2863
        %v3927 = vunpack.c.l.b16 %v2864
        %v3928 = vunpack.c.h.b16 %v2864
        %v3929 = vunpack.c.l.b16 %v2865
        %v3930 = vunpack.c.l.b16 %v2866
        %v3931 = vunpack.c.h.b16 %v2866
        %v3932 = vunpack.c.l.b16 %v2867
        %v3933 = vunpack.c.h.b16 %v2867
        %v3934 = vunpack.c.l.b16 %v2868
        %v3935 = vunpack.c.h.b16 %v2868
        %v3936 = vunpack.c.l.b16 %v2869
        %v3937 = vunpack.c.l.b16 %v2870
        %v3938 = vunpack.c.h.b16 %v2870
        %v3939 = vunpack.c.l.b16 %v2871
        %v3940 = vunpack.c.h.b16 %v2871
        %v3941 = vunpack.c.l.b16 %v2872
        %v3942 = vunpack.c.h.b16 %v2872
        %v3943 = vunpack.c.l.b16 %v2873
        %v3944 = vunpack.c.l.b16 %v2874
        %v3945 = vunpack.c.h.b16 %v2874
        %v3946 = vunpack.c.l.b16 %v2875
        %v3947 = vunpack.c.h.b16 %v2875
        %v3948 = vunpack.c.l.b16 %v2876
        %v3949 = vunpack.c.h.b16 %v2876
        %v3950 = vunpack.c.l.b16 %v2877
        %v3951 = vunpack.c.l.b16 %v2878
        %v3952 = vunpack.c.h.b16 %v2878
        %v3953 = vunpack.c.l.b16 %v2879
        %v3954 = vunpack.c.h.b16 %v2879
        %v3955 = vunpack.c.l.b16 %v2880
        %v3956 = vunpack.c.h.b16 %v2880
        %v3957 = vunpack.c.l.b16 %v2881
        %v3958 = vunpack.c.l.b16 %v2882
        %v3959 = vunpack.c.h.b16 %v2882
        %v3960 = vunpack.c.l.b16 %v2883
        %v3961 = vunpack.c.h.b16 %v2883
        %v3962 = vunpack.c.l.b16 %v2884
        %v3963 = vunpack.c.h.b16 %v2884
        %v3964 = vunpack.c.l.b16 %v2885
        %v3965 = vunpack.c.l.b16 %v2886
        %v3966 = vunpack.c.h.b16 %v2886
        %v3967 = vunpack.c.l.b16 %v2887
        %v3968 = vunpack.c.h.b16 %v2887
        %v3969 = vunpack.c.l.b16 %v2888
        %v3970 = vunpack.c.h.b16 %v2888
        %v3971 = vunpack.c.l.b16 %v2889
        %v3972 = vunpack.c.l.b16 %v2890
        %v3973 = vunpack.c.h.b16 %v2890
        %v3974 = vunpack.c.l.b16 %v2891
        %v3975 = vunpack.c.h.b16 %v2891
        %v3976 = vunpack.c.l.b16 %v2892
        %v3977 = vunpack.c.h.b16 %v2892
        %v3978 = vunpack.c.l.b16 %v2893
        %v3979 = vunpack.c.l.b16 %v2894
        %v3980 = vunpack.c.h.b16 %v2894
        %v3981 = vunpack.c.l.b16 %v2895
        %v3982 = vunpack.c.h.b16 %v2895
        %v3983 = vunpack.c.l.b16 %v2896
        %v3984 = vunpack.c.h.b16 %v2896
        %v3985 = vunpack.c.l.b16 %v2897
        %v3986 = vunpack.c.l.b16 %v2898
        %v3987 = vunpack.c.h.b16 %v2898
        %v3988 = vunpack.c.l.b16 %v2899
        %v3989 = vunpack.c.h.b16 %v2899
        %v3990 = vunpack.c.l.b16 %v2900
        %v3991 = vunpack.c.h.b16 %v2900
        %v3992 = vunpack.c.l.b16 %v2901
        %v3993 = vunpack.c.l.b16 %v2902
        %v3994 = vunpack.c.h.b16 %v2902
        %v3995 = vunpack.c.l.b16 %v2903
        %v3996 = vunpack.c.h.b16 %v2903
        %v3997 = vunpack.c.l.b16 %v2904
        %v3998 = vunpack.c.h.b16 %v2904
        %v3999 = vunpack.c.l.b16 %v2905
        %v4000 = vunpack.c.l.b16 %v2906
        %v4001 = vunpack.c.h.b16 %v2906
        %v4002 = vunpack.c.l.b16 %v2907
        %v4003 = vunpack.c.h.b16 %v2907
        %v4004 = vunpack.c.l.b16 %v2908
        %v4005 = vunpack.c.h.b16 %v2908
        %v4006 = vunpack.c.l.b16 %v2909
        %v4007 = vunpack.c.l.b16 %v2910
        %v4008 = vunpack.c.h.b16 %v2910
        %v4009 = vunpack.c.l.b16 %v2911
        %v4010 = vunpack.c.h.b16 %v2911
        %v4011 = vunpack.c.l.b16 %v2912
        %v4012 = vunpack.c.h.b16 %v2912
        %v4013 = vunpack.c.l.b16 %v2913
        %v4014 = vunpack.c.l.b16 %v2914
        %v4015 = vunpack.c.h.b16 %v2914
        %v4016 = vunpack.c.l.b16 %v2915
        %v4017 = vunpack.c.h.b16 %v2915
        %v4018 = vunpack.c.l.b16 %v2916
        %v4019 = vunpack.c.h.b16 %v2916
        %v4020 = vunpack.c.l.b16 %v2917
        %v4021 = vunpack.c.l.b16 %v2918
        %v4022 = vunpack.c.h.b16 %v2918
        %v4023 = vunpack.c.l.b16 %v2919
        %v4024 = vunpack.c.h.b16 %v2919
        %v4025 = vunpack.c.l.b16 %v2920
        %v4026 = vunpack.c.h.b16 %v2920
        %v4027 = vunpack.c.l.b16 %v2921
        %v4028 = vunpack.c.l.b16 %v2922
        %v4029 = vunpack.c.h.b16 %v2922
        %v4030 = vunpack.c.l.b16 %v2923
        %v4031 = vunpack.c.h.b16 %v2923
        %v4032 = vunpack.c.l.b16 %v2924
        %v4033 = vunpack.c.h.b16 %v2924
        %v4034 = vunpack.c.l.b16 %v2925
        %v4035 = vunpack.c.l.b16 %v2926
        %v4036 = vunpack.c.h.b16 %v2926
        %v4037 = vunpack.c.l.b16 %v2927
        %v4038 = vunpack.c.h.b16 %v2927
        %v4039 = vunpack.c.l.b16 %v2928
        %v4040 = vunpack.c.h.b16 %v2928
        %v4041 = vunpack.c.l.b16 %v2929
        %v4042 = vunpack.c.l.b16 %v2930
        %v4043 = vunpack.c.h.b16 %v2930
        %v4044 = vunpack.c.l.b16 %v2931
        %v4045 = vunpack.c.h.b16 %v2931
        %v4046 = vunpack.c.l.b16 %v2932
        %v4047 = vunpack.c.h.b16 %v2932
        %v4048 = vunpack.c.l.b16 %v2933
        %v4049 = vunpack.c.l.b16 %v2934
        %v4050 = vunpack.c.h.b16 %v2934
        %v4051 = vunpack.c.l.b16 %v2935
        %v4052 = vunpack.c.h.b16 %v2935
        %v4053 = vunpack.c.l.b16 %v2936
        %v4054 = vunpack.c.h.b16 %v2936
        %v4055 = vunpack.c.l.b16 %v2937
        %v4056 = vunpack.c.l.b16 %v2938
        %v4057 = vunpack.c.h.b16 %v2938
        %v4058 = vunpack.c.l.b16 %v2939
        %v4059 = vunpack.c.h.b16 %v2939
        %v4060 = vunpack.c.l.b16 %v2940
        %v4061 = vunpack.c.h.b16 %v2940
        %v4062 = vunpack.c.l.b16 %v2941
        %v4063 = vunpack.c.l.b16 %v2942
        %v4064 = vunpack.c.h.b16 %v2942
        %v4065 = vunpack.c.l.b16 %v2943
        %v4066 = vunpack.c.h.b16 %v2943
        %v4067 = vunpack.c.l.b16 %v2944
        %v4068 = vunpack.c.h.b16 %v2944
        %v4069 = vunpack.c.l.b16 %v2945
        %v4070 = vunpack.c.l.b16 %v2946
        %v4071 = vunpack.c.h.b16 %v2946
        %v4072 = vunpack.c.l.b16 %v2947
        %v4073 = vunpack.c.h.b16 %v2947
        %v4074 = vunpack.c.l.b16 %v2948
        %v4075 = vunpack.c.h.b16 %v2948
        %v4076 = vunpack.c.l.b16 %v2949
        %v4077 = vunpack.c.l.b16 %v2950
        %v4078 = vunpack.c.h.b16 %v2950
        %v4079 = vunpack.c.l.b16 %v2951
        %v4080 = vunpack.c.h.b16 %v2951
        %v4081 = vunpack.c.l.b16 %v2952
        %v4082 = vunpack.c.h.b16 %v2952
        %v4083 = vunpack.c.l.b16 %v2953
        %v4084 = vunpack.c.l.b16 %v2954
        %v4085 = vunpack.c.h.b16 %v2954
        %v4086 = vunpack.c.l.b16 %v2955
        %v4087 = vunpack.c.h.b16 %v2955
        %v4088 = vunpack.c.l.b16 %v2956
        %v4089 = vunpack.c.h.b16 %v2956
        %v4090 = vunpack.c.l.b16 %v2957
        %v4091 = vunpack.c.l.b16 %v2958
        %v4092 = vunpack.c.h.b16 %v2958
        %v4093 = vunpack.c.l.b16 %v2959
        %v4094 = vunpack.c.h.b16 %v2959
        %v4095 = vunpack.c.l.b16 %v2960
        %v4096 = vunpack.c.h.b16 %v2960
        %v4097 = vunpack.c.l.b16 %v2961
        %v4098 = vunpack.c.l.b16 %v2962
        %v4099 = vunpack.c.h.b16 %v2962
        %v4100 = vunpack.c.l.b16 %v2963
        %v4101 = vunpack.c.h.b16 %v2963
        %v4102 = vunpack.c.l.b16 %v2964
        %v4103 = vunpack.c.h.b16 %v2964
        %v4104 = vunpack.c.l.b16 %v2965
        %v4105 = vunpack.c.l.b16 %v2966
        %v4106 = vunpack.c.h.b16 %v2966
        %v4107 = vunpack.c.l.b16 %v2967
        %v4108 = vunpack.c.h.b16 %v2967
        %v4109 = vunpack.c.l.b16 %v2968
        %v4110 = vunpack.c.h.b16 %v2968
        %v4111 = vunpack.c.l.b16 %v2969
        %v4112 = vunpack.c.l.b16 %v2970
        %v4113 = vunpack.c.h.b16 %v2970
        %v4114 = vunpack.c.l.b16 %v2971
        %v4115 = vunpack.c.h.b16 %v2971
        %v4116 = vunpack.c.l.b16 %v2972
        %v4117 = vunpack.c.h.b16 %v2972
        %v4118 = vunpack.c.l.b16 %v2973
        %v4119 = vunpack.c.l.b16 %v2974
        %v4120 = vunpack.c.h.b16 %v2974
        %v4121 = vunpack.c.l.b16 %v2975
        %v4122 = vunpack.c.h.b16 %v2975
        %v4123 = vunpack.c.l.b16 %v2976
        %v4124 = vunpack.c.h.b16 %v2976
        %v4125 = vunpack.c.l.b16 %v2977
        %v4126 = vunpack.c.l.b16 %v2978
        %v4127 = vunpack.c.h.b16 %v2978
        %v4128 = vunpack.c.l.b16 %v2979
        %v4129 = vunpack.c.h.b16 %v2979
        %v4130 = vunpack.c.l.b16 %v2980
        %v4131 = vunpack.c.h.b16 %v2980
        %v4132 = vunpack.c.l.b16 %v2981
        %v4133 = vunpack.c.l.b16 %v2982
        %v4134 = vunpack.c.h.b16 %v2982
        %v4135 = vunpack.c.l.b16 %v2983
        %v4136 = vunpack.c.h.b16 %v2983
        %v4137 = vunpack.c.l.b16 %v2984
        %v4138 = vunpack.c.h.b16 %v2984
        %v4139 = vunpack.c.l.b16 %v2985
        %v4140 = vunpack.c.l.b16 %v2986
        %v4141 = vunpack.c.h.b16 %v2986
        %v4142 = vunpack.c.l.b16 %v2987
        %v4143 = vunpack.c.h.b16 %v2987
        %v4144 = vunpack.c.l.b16 %v2988
        %v4145 = vunpack.c.h.b16 %v2988
        %v4146 = vunpack.c.l.b16 %v2989
        %v4147 = vunpack.c.l.b16 %v2990
        %v4148 = vunpack.c.h.b16 %v2990
        %v4149 = vunpack.c.l.b16 %v2991
        %v4150 = vunpack.c.h.b16 %v2991
        %v4151 = vunpack.c.l.b16 %v2992
        %v4152 = vunpack.c.h.b16 %v2992
        %v4153 = vunpack.c.l.b16 %v2993
        %v4154 = vunpack.c.l.b16 %v2994
        %v4155 = vunpack.c.h.b16 %v2994
        %v4156 = vunpack.c.l.b16 %v2995
        %v4157 = vunpack.c.h.b16 %v2995
        %v4158 = vunpack.c.l.b16 %v2996
        %v4159 = vunpack.c.h.b16 %v2996
        %v4160 = vunpack.c.l.b16 %v2997
        %v4161 = vunpack.c.l.b16 %v2998
        %v4162 = vunpack.c.h.b16 %v2998
        %v4163 = vunpack.c.l.b16 %v2999
        %v4164 = vunpack.c.h.b16 %v2999
        %v4165 = vunpack.c.l.b16 %v3000
        %v4166 = vunpack.c.h.b16 %v3000
        %v4167 = vunpack.c.l.b16 %v3001
        %v4168 = vunpack.c.l.b16 %v3002
        %v4169 = vunpack.c.h.b16 %v3002
        %v4170 = vunpack.c.l.b16 %v3003
        %v4171 = vunpack.c.h.b16 %v3003
        %v4172 = vunpack.c.l.b16 %v3004
        %v4173 = vunpack.c.h.b16 %v3004
        %v4174 = vunpack.c.l.b16 %v3005
        %v4175 = vunpack.c.l.b16 %v3006
        %v4176 = vunpack.c.h.b16 %v3006
        %v4177 = vunpack.c.l.b16 %v3007
        %v4178 = vunpack.c.h.b16 %v3007
        %v4179 = vunpack.c.l.b16 %v3008
        %v4180 = vunpack.c.h.b16 %v3008
        %v4181 = vunpack.c.l.b16 %v3009
        %v4182 = vunpack.c.l.b16 %v3010
        %v4183 = vunpack.c.h.b16 %v3010
        %v4184 = vunpack.c.l.b16 %v3011
        %v4185 = vunpack.c.h.b16 %v3011
        %v4186 = vunpack.c.l.b16 %v3012
        %v4187 = vunpack.c.h.b16 %v3012
        %v4188 = vunpack.c.l.b16 %v3013
        %v4189 = vunpack.c.l.b16 %v3014
        %v4190 = vunpack.c.h.b16 %v3014
        %v4191 = vunpack.c.l.b16 %v3015
        %v4192 = vunpack.c.h.b16 %v3015
        %v4193 = vunpack.c.l.b16 %v3016
        %v4194 = vunpack.c.h.b16 %v3016
        %v4195 = vunpack.c.l.b16 %v3017
        %v4196 = vunpack.c.l.b16 %v3018
        %v4197 = vunpack.c.h.b16 %v3018
        %v4198 = vunpack.c.l.b16 %v3019
        %v4199 = vunpack.c.h.b16 %v3019
        %v4200 = vunpack.c.l.b16 %v3020
        %v4201 = vunpack.c.h.b16 %v3020
        %v4202 = vunpack.c.l.b16 %v3021
        %v4203 = vunpack.c.l.b16 %v3022
        %v4204 = vunpack.c.h.b16 %v3022
        %v4205 = vunpack.c.l.b16 %v3023
        %v4206 = vunpack.c.h.b16 %v3023
        %v4207 = vunpack.c.l.b16 %v3024
        %v4208 = vunpack.c.h.b16 %v3024
        %v4209 = vunpack.c.l.b16 %v3025
        %v4210 = vunpack.c.l.b16 %v3026
        %v4211 = vunpack.c.h.b16 %v3026
        %v4212 = vunpack.c.l.b16 %v3027
        %v4213 = vunpack.c.h.b16 %v3027
        %v4214 = vunpack.c.l.b16 %v3028
        %v4215 = vunpack.c.h.b16 %v3028
        %v4216 = vunpack.c.l.b16 %v3029
        %v4217 = vunpack.c.l.b16 %v3030
        %v4218 = vunpack.c.h.b16 %v3030
        %v4219 = vunpack.c.l.b16 %v3031
        %v4220 = vunpack.c.h.b16 %v3031
        %v4221 = vunpack.c.l.b16 %v3032
        %v4222 = vunpack.c.h.b16 %v3032
        %v4223 = vunpack.c.l.b16 %v3033
        %v4224 = vunpack.c.l.b16 %v3034
        %v4225 = vunpack.c.h.b16 %v3034
        %v4226 = vunpack.c.l.b16 %v3035
        %v4227 = vunpack.c.h.b16 %v3035
        %v4228 = vunpack.c.l.b16 %v3036
        %v4229 = vunpack.c.h.b16 %v3036
        %v4230 = vunpack.c.l.b16 %v3037
        %v4231 = vunpack.c.l.b16 %v3038
        %v4232 = vunpack.c.h.b16 %v3038
        %v4233 = vunpack.c.l.b16 %v3039
        %v4234 = vunpack.c.h.b16 %v3039
        %v4235 = vunpack.c.l.b16 %v3040
        %v4236 = vunpack.c.h.b16 %v3040
        %v4237 = vunpack.c.l.b16 %v3041
        %v4238 = vunpack.c.l.b16 %v3042
        %v4239 = vunpack.c.h.b16 %v3042
        %v4240 = vunpack.c.l.b16 %v3043
        %v4241 = vunpack.c.h.b16 %v3043
        %v4242 = vunpack.c.l.b16 %v3044
        %v4243 = vunpack.c.h.b16 %v3044
        %v4244 = vunpack.c.l.b16 %v3045
        %v4245 = vunpack.c.l.b16 %v3046
        %v4246 = vunpack.c.h.b16 %v3046
        %v4247 = vunpack.c.l.b16 %v3047
        %v4248 = vunpack.c.h.b16 %v3047
        %v4249 = vunpack.c.l.b16 %v3048
        %v4250 = vunpack.c.h.b16 %v3048
        %v4251 = vunpack.c.l.b16 %v3049
        %v4252 = vunpack.c.l.b16 %v3050
        %v4253 = vunpack.c.h.b16 %v3050
        %v4254 = vunpack.c.l.b16 %v3051
        %v4255 = vunpack.c.h.b16 %v3051
        %v4256 = vunpack.c.l.b16 %v3052
        %v4257 = vunpack.c.h.b16 %v3052
        %v4258 = vunpack.c.l.b16 %v3053
        %v4259 = vunpack.c.l.b16 %v3054
        %v4260 = vunpack.c.h.b16 %v3054
        %v4261 = vunpack.c.l.b16 %v3055
        %v4262 = vunpack.c.h.b16 %v3055
        %v4263 = vunpack.c.l.b16 %v3056
        %v4264 = vunpack.c.h.b16 %v3056
        %v4265 = vunpack.c.l.b16 %v3057
        %v4266 = vunpack.c.l.b16 %v3058
        %v4267 = vunpack.c.h.b16 %v3058
        %v4268 = vunpack.c.l.b16 %v3059
        %v4269 = vunpack.c.h.b16 %v3059
        %v4270 = vunpack.c.l.b16 %v3060
        %v4271 = vunpack.c.h.b16 %v3060
        %v4272 = vunpack.c.l.b16 %v3061
        %v4273 = vunpack.c.l.b16 %v3062
        %v4274 = vunpack.c.h.b16 %v3062
        %v4275 = vunpack.c.l.b16 %v3063
        %v4276 = vunpack.c.h.b16 %v3063
        %v4277 = vunpack.c.l.b16 %v3064
        %v4278 = vunpack.c.h.b16 %v3064
        %v4279 = vunpack.c.l.b16 %v3065
        %v4280 = vunpack.c.l.b16 %v3066
        %v4281 = vunpack.c.h.b16 %v3066
        %v4282 = vunpack.c.l.b16 %v3067
        %v4283 = vunpack.c.h.b16 %v3067
        %v4284 = vunpack.c.l.b16 %v3068
        %v4285 = vunpack.c.h.b16 %v3068
        %v4286 = vunpack.c.l.b16 %v3069
        %v4287 = vunpack.c.l.b16 %v3070
        %v4288 = vunpack.c.h.b16 %v3070
        %v4289 = vunpack.c.l.b16 %v3071
        %v4290 = vunpack.c.h.b16 %v3071
        %v4291 = vunpack.c.l.b16 %v3072
        %v4292 = vunpack.c.h.b16 %v3072
        %v4293 = vunpack.c.l.b16 %v3073
        %v4294 = vunpack.c.l.b16 %v3074
        %v4295 = vunpack.c.h.b16 %v3074
        %v4296 = vunpack.c.l.b16 %v3075
        %v4297 = vunpack.c.h.b16 %v3075
        %v4298 = vunpack.c.l.b16 %v3076
        %v4299 = vunpack.c.h.b16 %v3076
        %v4300 = vunpack.c.l.b16 %v3077
        %v4301 = vunpack.c.l.b16 %v3078
        %v4302 = vunpack.c.h.b16 %v3078
        %v4303 = vunpack.c.l.b16 %v3079
        %v4304 = vunpack.c.h.b16 %v3079
        %v4305 = vunpack.c.l.b16 %v3080
        %v4306 = vunpack.c.h.b16 %v3080
        %v4307 = vunpack.c.l.b16 %v3081
        %v4308 = vunpack.c.l.b16 %v3082
        %v4309 = vunpack.c.h.b16 %v3082
        %v4310 = vunpack.c.l.b16 %v3083
        %v4311 = vunpack.c.h.b16 %v3083
        %v4312 = vunpack.c.l.b16 %v3084
        %v4313 = vunpack.c.h.b16 %v3084
        %v4314 = vunpack.c.l.b16 %v3085
        %v4315 = vunpack.c.l.b16 %v3086
        %v4316 = vunpack.c.h.b16 %v3086
        %v4317 = vunpack.c.l.b16 %v3087
        %v4318 = vunpack.c.h.b16 %v3087
        %v4319 = vunpack.c.l.b16 %v3088
        %v4320 = vunpack.c.h.b16 %v3088
        %v4321 = vunpack.c.l.b16 %v3089
        %v4322 = vunpack.c.l.b16 %v3090
        %v4323 = vunpack.c.h.b16 %v3090
        %v4324 = vunpack.c.l.b16 %v3091
        %v4325 = vunpack.c.h.b16 %v3091
        %v4326 = vunpack.c.l.b16 %v3092
        %v4327 = vunpack.c.h.b16 %v3092
        %v4328 = vunpack.c.l.b16 %v3093
        %v4329 = vunpack.c.l.b16 %v3094
        %v4330 = vunpack.c.h.b16 %v3094
        %v4331 = vunpack.c.l.b16 %v3095
        %v4332 = vunpack.c.h.b16 %v3095
        %v4333 = vunpack.c.l.b16 %v3096
        %v4334 = vunpack.c.h.b16 %v3096
        %v4335 = vunpack.c.l.b16 %v3097
        %v4336 = vunpack.c.l.b16 %v3098
        %v4337 = vunpack.c.h.b16 %v3098
        %v4338 = vunpack.c.l.b16 %v3099
        %v4339 = vunpack.c.h.b16 %v3099
        %v4340 = vunpack.c.l.b16 %v3100
        %v4341 = vunpack.c.h.b16 %v3100
        %v4342 = vunpack.c.l.b16 %v3101
        %v4343 = vunpack.c.l.b16 %v3102
        %v4344 = vunpack.c.h.b16 %v3102
        %v4345 = vunpack.c.l.b16 %v3103
        %v4346 = vunpack.c.h.b16 %v3103
        %v4347 = vunpack.c.l.b16 %v3104
        %v4348 = vunpack.c.h.b16 %v3104
        %v4349 = vunpack.c.l.b16 %v3105
        %v4350 = vunpack.c.l.b16 %v3106
        %v4351 = vunpack.c.h.b16 %v3106
        %v4352 = vunpack.c.l.b16 %v3107
        %v4353 = vunpack.c.h.b16 %v3107
        %v4354 = vunpack.c.l.b16 %v3108
        %v4355 = vunpack.c.h.b16 %v3108
        %v4356 = vunpack.c.l.b16 %v3109
        %v4357 = vunpack.c.l.b16 %v3110
        %v4358 = vunpack.c.h.b16 %v3110
        %v4359 = vunpack.c.l.b16 %v3111
        %v4360 = vunpack.c.h.b16 %v3111
        %v4361 = vunpack.c.l.b16 %v3112
        %v4362 = vunpack.c.h.b16 %v3112
        %v4363 = vunpack.c.l.b16 %v3113
        %v4364 = vunpack.c.l.b16 %v3114
        %v4365 = vunpack.c.h.b16 %v3114
        %v4366 = vunpack.c.l.b16 %v3115
        %v4367 = vunpack.c.h.b16 %v3115
        %v4368 = vunpack.c.l.b16 %v3116
        %v4369 = vunpack.c.h.b16 %v3116
        %v4370 = vunpack.c.l.b16 %v3117
        %v4371 = vunpack.c.l.b16 %v3118
        %v4372 = vunpack.c.h.b16 %v3118
        %v4373 = vunpack.c.l.b16 %v3119
        %v4374 = vunpack.c.h.b16 %v3119
        %v4375 = vunpack.c.l.b16 %v3120
        %v4376 = vunpack.c.h.b16 %v3120
        %v4377 = vunpack.c.l.b16 %v3121
        %v4378 = vunpack.c.l.b16 %v3122
        %v4379 = vunpack.c.h.b16 %v3122
        %v4380 = vunpack.c.l.b16 %v3123
        %v4381 = vunpack.c.h.b16 %v3123
        %v4382 = vunpack.c.l.b16 %v3124
        %v4383 = vunpack.c.h.b16 %v3124
        %v4384 = vunpack.c.l.b16 %v3125
        %v4385 = vunpack.c.l.b16 %v3126
        %v4386 = vunpack.c.h.b16 %v3126
        %v4387 = vunpack.c.l.b16 %v3127
        %v4388 = vunpack.c.h.b16 %v3127
        %v4389 = vunpack.c.l.b16 %v3128
        %v4390 = vunpack.c.h.b16 %v3128
        %v4391 = vunpack.c.l.b16 %v3129
        %v4392 = vunpack.c.l.b16 %v3130
        %v4393 = vunpack.c.h.b16 %v3130
        %v4394 = vunpack.c.l.b16 %v3131
        %v4395 = vunpack.c.h.b16 %v3131
        %v4396 = vunpack.c.l.b16 %v3132
        %v4397 = vunpack.c.h.b16 %v3132
        %v4398 = vunpack.c.l.b16 %v3133
        %v4399 = vunpack.c.l.b16 %v3134
        %v4400 = vunpack.c.h.b16 %v3134
        %v4401 = vunpack.c.l.b16 %v3135
        %v4402 = vunpack.c.h.b16 %v3135
        %v4403 = vunpack.c.l.b16 %v3136
        %v4404 = vunpack.c.h.b16 %v3136
        %v4405 = vunpack.c.l.b16 %v3137
        %v4406 = vunpack.c.l.b16 %v3138
        %v4407 = vunpack.c.h.b16 %v3138
        %v4408 = vunpack.c.l.b16 %v3139
        %v4409 = vunpack.c.h.b16 %v3139
        %v4410 = vunpack.c.l.b16 %v3140
        %v4411 = vunpack.c.h.b16 %v3140
        %v4412 = vunpack.c.l.b16 %v3141
        %v4413 = vunpack.c.l.b16 %v3142
        %v4414 = vunpack.c.h.b16 %v3142
        %v4415 = vunpack.c.l.b16 %v3143
        %v4416 = vunpack.c.h.b16 %v3143
        %v4417 = vunpack.c.l.b16 %v3144
        %v4418 = vunpack.c.h.b16 %v3144
        %v4419 = vunpack.c.l.b16 %v3145
        %v4420 = vunpack.c.l.b16 %v3146
        %v4421 = vunpack.c.h.b16 %v3146
        %v4422 = vunpack.c.l.b16 %v3147
        %v4423 = vunpack.c.h.b16 %v3147
        %v4424 = vunpack.c.l.b16 %v3148
        %v4425 = vunpack.c.h.b16 %v3148
        %v4426 = vunpack.c.l.b16 %v3149
        %v4427 = vunpack.c.l.b16 %v3150
        %v4428 = vunpack.c.h.b16 %v3150
        %v4429 = vunpack.c.l.b16 %v3151
        %v4430 = vunpack.c.h.b16 %v3151
        %v4431 = vunpack.c.l.b16 %v3152
        %v4432 = vunpack.c.h.b16 %v3152
        %v4433 = vunpack.c.l.b16 %v3153
        %v4434 = vunpack.c.l.b16 %v3154
        %v4435 = vunpack.c.h.b16 %v3154
        %v4436 = vunpack.c.l.b16 %v3155
        %v4437 = vunpack.c.h.b16 %v3155
        %v4438 = vunpack.c.l.b16 %v3156
        %v4439 = vunpack.c.h.b16 %v3156
        %v4440 = vunpack.c.l.b16 %v3157
        %v4441 = vunpack.c.l.b16 %v3158
        %v4442 = vunpack.c.h.b16 %v3158
        %v4443 = vunpack.c.l.b16 %v3159
        %v4444 = vunpack.c.h.b16 %v3159
        %v4445 = vunpack.c.l.b16 %v3160
        %v4446 = vunpack.c.h.b16 %v3160
        %v4447 = vunpack.c.l.b16 %v3161
        %v4448 = vunpack.c.l.b16 %v3162
        %v4449 = vunpack.c.h.b16 %v3162
        %v4450 = vunpack.c.l.b16 %v3163
        %v4451 = vunpack.c.h.b16 %v3163
        %v4452 = vunpack.c.l.b16 %v3164
        %v4453 = vunpack.c.h.b16 %v3164
        %v4454 = vunpack.c.l.b16 %v3165
        %v4455 = vunpack.c.l.b16 %v3166
        %v4456 = vunpack.c.h.b16 %v3166
        %v4457 = vunpack.c.l.b16 %v3167
        %v4458 = vunpack.c.h.b16 %v3167
        %v4459 = vunpack.c.l.b16 %v3168
        %v4460 = vunpack.c.h.b16 %v3168
        %v4461 = vunpack.c.l.b16 %v3169
        %v4462 = vunpack.c.l.b16 %v3170
        %v4463 = vunpack.c.h.b16 %v3170
        %v4464 = vunpack.c.l.b16 %v3171
        %v4465 = vunpack.c.h.b16 %v3171
        %v4466 = vunpack.c.l.b16 %v3172
        %v4467 = vunpack.c.h.b16 %v3172
        %v4468 = vunpack.c.l.b16 %v3173
        %v4469 = vunpack.c.l.b16 %v3174
        %v4470 = vunpack.c.h.b16 %v3174
        %v4471 = vunpack.c.l.b16 %v3175
        %v4472 = vunpack.c.h.b16 %v3175
        %v4473 = vunpack.c.l.b16 %v3176
        %v4474 = vunpack.c.h.b16 %v3176
        %v4475 = vunpack.c.l.b16 %v3177
        %v4476 = vunpack.c.l.b16 %v3178
        %v4477 = vunpack.c.h.b16 %v3178
        %v4478 = vunpack.c.l.b16 %v3179
        %v4479 = vunpack.c.h.b16 %v3179
        %v4480 = vunpack.c.l.b16 %v3180
        %v4481 = vunpack.c.h.b16 %v3180
        %v4482 = vunpack.c.l.b16 %v3181
        %v4483 = vunpack.c.l.b16 %v3182
        %v4484 = vunpack.c.h.b16 %v3182
        %v4485 = vunpack.c.l.b16 %v3183
        %v4486 = vunpack.c.h.b16 %v3183
        %v4487 = vunpack.c.l.b16 %v3184
        %v4488 = vunpack.c.h.b16 %v3184
        %v4489 = vunpack.c.l.b16 %v3185
        %v4490 = vunpack.c.l.b16 %v3186
        %v4491 = vunpack.c.h.b16 %v3186
        %v4492 = vunpack.c.l.b16 %v3187
        %v4493 = vunpack.c.h.b16 %v3187
        %v4494 = vunpack.c.l.b16 %v3188
        %v4495 = vunpack.c.h.b16 %v3188
        %v4496 = vunpack.c.l.b16 %v3189
        %v4497 = vunpack.c.l.b16 %v3190
        %v4498 = vunpack.c.h.b16 %v3190
        %v4499 = vunpack.c.l.b16 %v3191
        %v4500 = vunpack.c.h.b16 %v3191
        %v4501 = vunpack.c.l.b16 %v3192
        %v4502 = vunpack.c.h.b16 %v3192
        %v4503 = vunpack.c.l.b16 %v3193
        %v4504 = vunpack.c.l.b16 %v3194
        %v4505 = vunpack.c.h.b16 %v3194
        %v4506 = vunpack.c.l.b16 %v3195
        %v4507 = vunpack.c.h.b16 %v3195
        %v4508 = vunpack.c.l.b16 %v3196
        %v4509 = vunpack.c.h.b16 %v3196
        %v4510 = vunpack.c.l.b16 %v3197
        %v4511 = vunpack.c.l.b16 %v3198
        %v4512 = vunpack.c.h.b16 %v3198
        %v4513 = vunpack.c.l.b16 %v3199
        %v4514 = vunpack.c.h.b16 %v3199
        %v4515 = vunpack.c.l.b16 %v3200
        %v4516 = vunpack.c.h.b16 %v3200
        %v4517 = vunpack.c.l.b16 %v3201
        %v4518 = vunpack.c.l.b16 %v3202
        %v4519 = vunpack.c.h.b16 %v3202
        %v4520 = vunpack.c.l.b16 %v3203
        %v4521 = vunpack.c.h.b16 %v3203
        %v4522 = vunpack.c.l.b16 %v3204
        %v4523 = vunpack.c.h.b16 %v3204
        %v4524 = vunpack.c.l.b16 %v3205
        %v4525 = vunpack.c.l.b16 %v3206
        %v4526 = vunpack.c.h.b16 %v3206
        %v4527 = vunpack.c.l.b16 %v3207
        %v4528 = vunpack.c.h.b16 %v3207
        %v4529 = vunpack.c.l.b16 %v3208
        %v4530 = vunpack.c.h.b16 %v3208
        %v4531 = vunpack.c.l.b16 %v3209
        %v4532 = vunpack.c.l.b16 %v3210
        %v4533 = vunpack.c.h.b16 %v3210
        %v4534 = vunpack.c.l.b16 %v3211
        %v4535 = vunpack.c.h.b16 %v3211
        %v4536 = vunpack.c.l.b16 %v3212
        %v4537 = vunpack.c.h.b16 %v3212
        %v4538 = vunpack.c.l.b16 %v3213
        %v4539 = vunpack.c.l.b16 %v3214
        %v4540 = vunpack.c.h.b16 %v3214
        %v4541 = vunpack.c.l.b16 %v3215
        %v4542 = vunpack.c.h.b16 %v3215
        %v4543 = vunpack.c.l.b16 %v3216
        %v4544 = vunpack.c.h.b16 %v3216
        %v4545 = vunpack.c.l.b16 %v3217
        %v4546 = vunpack.c.l.b16 %v3218
        %v4547 = vunpack.c.h.b16 %v3218
        %v4548 = vunpack.c.l.b16 %v3219
        %v4549 = vunpack.c.h.b16 %v3219
        %v4550 = vunpack.c.l.b16 %v3220
        %v4551 = vunpack.c.h.b16 %v3220
        %v4552 = vunpack.c.l.b16 %v3221
        %v4553 = vunpack.c.l.b16 %v3222
        %v4554 = vunpack.c.h.b16 %v3222
        %v4555 = vunpack.c.l.b16 %v3223
        %v4556 = vunpack.c.h.b16 %v3223
        %v4557 = vunpack.c.l.b16 %v3224
        %v4558 = vunpack.c.h.b16 %v3224
        %v4559 = vunpack.c.l.b16 %v3225
        %v4560 = vunpack.c.l.b16 %v3226
        %v4561 = vunpack.c.h.b16 %v3226
        %v4562 = vunpack.c.l.b16 %v3227
        %v4563 = vunpack.c.h.b16 %v3227
        %v4564 = vunpack.c.l.b16 %v3228
        %v4565 = vunpack.c.h.b16 %v3228
        %v4566 = vunpack.c.l.b16 %v3229
        %v4567 = vunpack.c.l.b16 %v3230
        %v4568 = vunpack.c.h.b16 %v3230
        %v4569 = vunpack.c.l.b16 %v3231
        %v4570 = vunpack.c.h.b16 %v3231
        %v4571 = vunpack.c.l.b16 %v3232
        %v4572 = vunpack.c.h.b16 %v3232
        %v4573 = vunpack.c.l.b16 %v3233
        %v4574 = vunpack.c.l.b16 %v3234
        %v4575 = vunpack.c.h.b16 %v3234
        %v4576 = vunpack.c.l.b16 %v3235
        %v4577 = vunpack.c.h.b16 %v3235
        %v4578 = vunpack.c.l.b16 %v3236
        %v4579 = vunpack.c.h.b16 %v3236
        %v4580 = vunpack.c.l.b16 %v3237
        %v4581 = vunpack.c.l.b16 %v3238
        %v4582 = vunpack.c.h.b16 %v3238
        %v4583 = vunpack.c.l.b16 %v3239
        %v4584 = vunpack.c.h.b16 %v3239
        %v4585 = vunpack.c.l.b16 %v3240
        %v4586 = vunpack.c.h.b16 %v3240
        %v4587 = vunpack.c.l.b16 %v3241
        %v4588 = vunpack.c.l.b16 %v3242
        %v4589 = vunpack.c.h.b16 %v3242
        %v4590 = vunpack.c.l.b16 %v3243
        %v4591 = vunpack.c.h.b16 %v3243
        %v4592 = vunpack.c.l.b16 %v3244
        %v4593 = vunpack.c.h.b16 %v3244
        %v4594 = vunpack.c.l.b16 %v3245
        %v4595 = vunpack.c.l.b16 %v3246
        %v4596 = vunpack.c.h.b16 %v3246
        %v4597 = vunpack.c.l.b16 %v3247
        %v4598 = vunpack.c.h.b16 %v3247
        %v4599 = vunpack.c.l.b16 %v3248
        %v4600 = vunpack.c.h.b16 %v3248
        %v4601 = vunpack.c.l.b16 %v3249
        %v4602 = vunpack.c.l.b16 %v3250
        %v4603 = vunpack.c.h.b16 %v3250
        %v4604 = vunpack.c.l.b16 %v3251
        %v4605 = vunpack.c.h.b16 %v3251
        %v4606 = vunpack.c.l.b16 %v3252
        %v4607 = vunpack.c.h.b16 %v3252
        %v4608 = vunpack.c.l.b16 %v3253
        %v4609 = vunpack.c.l.b16 %v3254
        %v4610 = vunpack.c.h.b16 %v3254
        %v4611 = vunpack.c.l.b16 %v3255
        %v4612 = vunpack.c.h.b16 %v3255
        %v4613 = vunpack.c.l.b16 %v3256
        %v4614 = vunpack.c.h.b16 %v3256
        %v4615 = vunpack.c.l.b16 %v3257
        %v4616 = vunpack.c.l.b16 %v3258
        %v4617 = vunpack.c.h.b16 %v3258
        %v4618 = vunpack.c.l.b16 %v3259
        %v4619 = vunpack.c.h.b16 %v3259
        %v4620 = vunpack.c.l.b16 %v3260
        %v4621 = vunpack.c.h.b16 %v3260
        %v4622 = vunpack.c.l.b16 %v3261
        %v4623 = vunpack.c.l.b16 %v3262
        %v4624 = vunpack.c.h.b16 %v3262
        %v4625 = vunpack.c.l.b16 %v3263
        %v4626 = vunpack.c.h.b16 %v3263
        %v4627 = vunpack.c.l.b16 %v3264
        %v4628 = vunpack.c.h.b16 %v3264
        %v4629 = vunpack.c.l.b16 %v3265
        %v4630 = vunpack.c.l.b16 %v3266
        %v4631 = vunpack.c.h.b16 %v3266
        %v4632 = vunpack.c.l.b16 %v3267
        %v4633 = vunpack.c.h.b16 %v3267
        %v4634 = vunpack.c.l.b16 %v3268
        %v4635 = vunpack.c.h.b16 %v3268
        %v4636 = vunpack.c.l.b16 %v3269
        %v4637 = vunpack.c.l.b16 %v3270
        %v4638 = vunpack.c.h.b16 %v3270
        %v4639 = vunpack.c.l.b16 %v3271
        %v4640 = vunpack.c.h.b16 %v3271
        %v4641 = vunpack.c.l.b16 %v3272
        %v4642 = vunpack.c.h.b16 %v3272
        %v4643 = vunpack.c.l.b16 %v3273
        %v4644 = vunpack.c.l.b16 %v3274
        %v4645 = vunpack.c.h.b16 %v3274
        %v4646 = vunpack.c.l.b16 %v3275
        %v4647 = vunpack.c.h.b16 %v3275
        %v4648 = vunpack.c.l.b16 %v3276
        %v4649 = vunpack.c.h.b16 %v3276
        %v4650 = vunpack.c.l.b16 %v3277
        %v4651 = vunpack.c.l.b16 %v3278
        %v4652 = vunpack.c.h.b16 %v3278
        %v4653 = vunpack.c.l.b16 %v3279
        %v4654 = vunpack.c.h.b16 %v3279
        %v4655 = vunpack.c.l.b16 %v3280
        %v4656 = vunpack.c.h.b16 %v3280
        %v4657 = vunpack.c.l.b16 %v3281
        %v4658 = vunpack.c.l.b16 %v3282
        %v4659 = vunpack.c.h.b16 %v3282
        %v4660 = vunpack.c.l.b16 %v3283
        %v4661 = vunpack.c.h.b16 %v3283
        %v4662 = vunpack.c.l.b16 %v3284
        %v4663 = vunpack.c.h.b16 %v3284
        %v4664 = vunpack.c.l.b16 %v3285
        %v4665 = vunpack.c.l.b16 %v3286
        %v4666 = vunpack.c.h.b16 %v3286
        %v4667 = vunpack.c.l.b16 %v3287
        %v4668 = vunpack.c.h.b16 %v3287
        %v4669 = vunpack.c.l.b16 %v3288
        %v4670 = vunpack.c.h.b16 %v3288
        %v4671 = vunpack.c.l.b16 %v3289
        %v4672 = vunpack.c.l.b16 %v3290
        %v4673 = vunpack.c.h.b16 %v3290
        %v4674 = vunpack.c.l.b16 %v3291
        %v4675 = vunpack.c.h.b16 %v3291
        %v4676 = vunpack.c.l.b16 %v3292
        %v4677 = vunpack.c.h.b16 %v3292
        %v4678 = vunpack.c.l.b16 %v3293
        %v4679 = vunpack.c.l.b16 %v3294
        %v4680 = vunpack.c.h.b16 %v3294
        %v4681 = vunpack.c.l.b16 %v3295
        %v4682 = vunpack.c.h.b16 %v3295
        %v4683 = vunpack.c.l.b16 %v3296
        %v4684 = vunpack.c.h.b16 %v3296
        %v4685 = vunpack.c.l.b16 %v3297
        %v4686 = vunpack.c.l.b16 %v3298
        %v4687 = vunpack.c.h.b16 %v3298
        %v4688 = vunpack.c.l.b16 %v3299
        %v4689 = vunpack.c.h.b16 %v3299
        %v4690 = vunpack.c.l.b16 %v3300
        %v4691 = vunpack.c.h.b16 %v3300
        %v4692 = vunpack.c.l.b16 %v3301
        %v4693 = vunpack.c.l.b16 %v3302
        %v4694 = vunpack.c.h.b16 %v3302
        %v4695 = vunpack.c.l.b16 %v3303
        %v4696 = vunpack.c.h.b16 %v3303
        %v4697 = vunpack.c.l.b16 %v3304
        %v4698 = vunpack.c.h.b16 %v3304
        %v4699 = vunpack.c.l.b16 %v3305
        %v4700 = vunpack.c.l.b16 %v3306
        %v4701 = vunpack.c.h.b16 %v3306
        %v4702 = vunpack.c.l.b16 %v3307
        %v4703 = vunpack.c.h.b16 %v3307
        %v4704 = vunpack.c.l.b16 %v3308
        %v4705 = vunpack.c.h.b16 %v3308
        %v4706 = vunpack.c.l.b16 %v3309
        %v4707 = vunpack.c.l.b16 %v3310
        %v4708 = vunpack.c.h.b16 %v3310
        %v4709 = vunpack.c.l.b16 %v3311
        %v4710 = vunpack.c.h.b16 %v3311
        %v4711 = vunpack.c.l.b16 %v3312
        %v4712 = vunpack.c.h.b16 %v3312
        %v4713 = vunpack.c.l.b16 %v3313
        %v4714 = vunpack.c.l.b16 %v3314
        %v4715 = vunpack.c.h.b16 %v3314
        %v4716 = vunpack.c.l.b16 %v3315
        %v4717 = vunpack.c.h.b16 %v3315
        %v4718 = vunpack.c.l.b16 %v3316
        %v4719 = vunpack.c.h.b16 %v3316
        %v4720 = vunpack.c.l.b16 %v3317
        %v4721 = vunpack.c.l.b16 %v3318
        %v4722 = vunpack.c.h.b16 %v3318
        %v4723 = vunpack.c.l.b16 %v3319
        %v4724 = vunpack.c.h.b16 %v3319
        %v4725 = vunpack.c.l.b16 %v3320
        %v4726 = vunpack.c.h.b16 %v3320
        %v4727 = vunpack.c.l.b16 %v3321
        %v4728 = vunpack.c.l.b16 %v3322
        %v4729 = vunpack.c.h.b16 %v3322
        %v4730 = vunpack.c.l.b16 %v3323
        %v4731 = vunpack.c.h.b16 %v3323
        %v4732 = vunpack.c.l.b16 %v3324
        %v4733 = vunpack.c.h.b16 %v3324
        %v4734 = vunpack.c.l.b16 %v3325
        %v4735 = vunpack.c.l.b16 %v3326
        %v4736 = vunpack.c.h.b16 %v3326
        %v4737 = vunpack.c.l.b16 %v3327
        %v4738 = vunpack.c.h.b16 %v3327
        %v4739 = vunpack.c.l.b16 %v3328
        %v4740 = vunpack.c.h.b16 %v3328
        %v4741 = vunpack.c.l.b16 %v3329
        %v4742 = vunpack.c.l.b16 %v3330
        %v4743 = vunpack.c.h.b16 %v3330
        %v4744 = vunpack.c.l.b16 %v3331
        %v4745 = vunpack.c.h.b16 %v3331
        %v4746 = vunpack.c.l.b16 %v3332
        %v4747 = vunpack.c.h.b16 %v3332
        %v4748 = vunpack.c.l.b16 %v3333
        %v4749 = vunpack.c.l.b16 %v3334
        %v4750 = vunpack.c.h.b16 %v3334
        %v4751 = vunpack.c.l.b16 %v3335
        %v4752 = vunpack.c.h.b16 %v3335
        %v4753 = vunpack.c.l.b16 %v3336
        %v4754 = vunpack.c.h.b16 %v3336
        %v4755 = vunpack.c.l.b16 %v3337
        %v4756 = vunpack.c.l.b16 %v3338
        %v4757 = vunpack.c.h.b16 %v3338
        %v4758 = vunpack.c.l.b16 %v3339
        %v4759 = vunpack.c.h.b16 %v3339
        %v4760 = vunpack.c.l.b16 %v3340
        %v4761 = vunpack.c.h.b16 %v3340
        %v4762 = vunpack.c.l.b16 %v3341
        %v4763 = vunpack.c.l.b16 %v3342
        %v4764 = vunpack.c.h.b16 %v3342
        %v4765 = vunpack.c.l.b16 %v3343
        %v4766 = vunpack.c.h.b16 %v3343
        %v4767 = vunpack.c.l.b16 %v3344
        %v4768 = vunpack.c.h.b16 %v3344
        %v4769 = vunpack.c.l.b16 %v3345
        %v4770 = vunpack.c.l.b16 %v3346
        %v4771 = vunpack.c.h.b16 %v3346
        %v4772 = vunpack.c.l.b16 %v3347
        %v4773 = vunpack.c.h.b16 %v3347
        %v4774 = vunpack.c.l.b16 %v3348
        %v4775 = vunpack.c.h.b16 %v3348
        %v4776 = vunpack.c.l.b16 %v3349
        %v4777 = vunpack.c.l.b16 %v3350
        %v4778 = vunpack.c.h.b16 %v3350
        %v4779 = vunpack.c.l.b16 %v3351
        %v4780 = vunpack.c.h.b16 %v3351
        %v4781 = vunpack.c.l.b16 %v3352
        %v4782 = vunpack.c.h.b16 %v3352
        %v4783 = vunpack.c.l.b16 %v3353
        %v4784 = vunpack.c.l.b16 %v3354
        %v4785 = vunpack.c.h.b16 %v3354
        %v4786 = vunpack.c.l.b16 %v3355
        %v4787 = vunpack.c.h.b16 %v3355
        %v4788 = vunpack.c.l.b16 %v3356
        %v4789 = vunpack.c.h.b16 %v3356
        %v4790 = vunpack.c.l.b16 %v3357
        %v4791 = vunpack.c.l.b16 %v3358
        %v4792 = vunpack.c.h.b16 %v3358
        %v4793 = vunpack.c.l.b16 %v3359
        %v4794 = vunpack.c.h.b16 %v3359
        %v4795 = vunpack.c.l.b16 %v3360
        %v4796 = vunpack.c.h.b16 %v3360
        %v4797 = vunpack.c.l.b16 %v3361
        %v4798 = vunpack.c.l.b16 %v3362
        %v4799 = vunpack.c.h.b16 %v3362
        %v4800 = vunpack.c.l.b16 %v3363
        %v4801 = vunpack.c.h.b16 %v3363
        %v4802 = vunpack.c.l.b16 %v3364
        %v4803 = vunpack.c.h.b16 %v3364
        %v4804 = vunpack.c.l.b16 %v3365
        %v4805 = vunpack.c.l.b16 %v3366
        %v4806 = vunpack.c.h.b16 %v3366
        %v4807 = vunpack.c.l.b16 %v3367
        %v4808 = vunpack.c.h.b16 %v3367
        %v4809 = vunpack.c.l.b16 %v3368
        %v4810 = vunpack.c.h.b16 %v3368
        %v4811 = vunpack.c.l.b16 %v3369
        %v4812 = vunpack.c.l.b16 %v3370
        %v4813 = vunpack.c.h.b16 %v3370
        %v4814 = vunpack.c.l.b16 %v3371
        %v4815 = vunpack.c.h.b16 %v3371
        %v4816 = vunpack.c.l.b16 %v3372
        %v4817 = vunpack.c.h.b16 %v3372
        %v4818 = vunpack.c.l.b16 %v3373
        %v4819 = vpack.c.b16 %v3930, %v3923
        %v4820 = vpack.c.b16 %v3931, %v3924
        %v4821 = vpack.c.b16 %v3932, %v3925
        %v4822 = vpack.c.b16 %v3933, %v3926
        %v4823 = vpack.c.b16 %v3934, %v3927
        %v4824 = vpack.c.b16 %v3935, %v3928
        %v4825 = vpack.c.b16 %v3936, %v3929
        %v4826 = vpack.c.b16 %v3944, %v3937
        %v4827 = vpack.c.b16 %v3945, %v3938
        %v4828 = vpack.c.b16 %v3946, %v3939
        %v4829 = vpack.c.b16 %v3947, %v3940
        %v4830 = vpack.c.b16 %v3948, %v3941
        %v4831 = vpack.c.b16 %v3949, %v3942
        %v4832 = vpack.c.b16 %v3950, %v3943
        %v4833 = vpack.c.b16 %v3958, %v3951
        %v4834 = vpack.c.b16 %v3959, %v3952
        %v4835 = vpack.c.b16 %v3960, %v3953
        %v4836 = vpack.c.b16 %v3961, %v3954
        %v4837 = vpack.c.b16 %v3962, %v3955
        %v4838 = vpack.c.b16 %v3963, %v3956
        %v4839 = vpack.c.b16 %v3964, %v3957
        %v4840 = vpack.c.b16 %v3972, %v3965
        %v4841 = vpack.c.b16 %v3973, %v3966
        %v4842 = vpack.c.b16 %v3974, %v3967
        %v4843 = vpack.c.b16 %v3975, %v3968
        %v4844 = vpack.c.b16 %v3976, %v3969
        %v4845 = vpack.c.b16 %v3977, %v3970
        %v4846 = vpack.c.b16 %v3978, %v3971
        %v4847 = vpack.c.b16 %v3986, %v3979
        %v4848 = vpack.c.b16 %v3987, %v3980
        %v4849 = vpack.c.b16 %v3988, %v3981
        %v4850 = vpack.c.b16 %v3989, %v3982
        %v4851 = vpack.c.b16 %v3990, %v3983
        %v4852 = vpack.c.b16 %v3991, %v3984
        %v4853 = vpack.c.b16 %v3992, %v3985
        %v4854 = vpack.c.b16 %v4000, %v3993
        %v4855 = vpack.c.b16 %v4001, %v3994
        %v4856 = vpack.c.b16 %v4002, %v3995
        %v4857 = vpack.c.b16 %v4003, %v3996
        %v4858 = vpack.c.b16 %v4004, %v3997
        %v4859 = vpack.c.b16 %v4005, %v3998
        %v4860 = vpack.c.b16 %v4006, %v3999
        %v4861 = vpack.c.b16 %v4014, %v4007
        %v4862 = vpack.c.b16 %v4015, %v4008
        %v4863 = vpack.c.b16 %v4016, %v4009
        %v4864 = vpack.c.b16 %v4017, %v4010
        %v4865 = vpack.c.b16 %v4018, %v4011
        %v4866 = vpack.c.b16 %v4019, %v4012
        %v4867 = vpack.c.b16 %v4020, %v4013
        %v4868 = vpack.c.b16 %v4028, %v4021
        %v4869 = vpack.c.b16 %v4029, %v4022
        %v4870 = vpack.c.b16 %v4030, %v4023
        %v4871 = vpack.c.b16 %v4031, %v4024
        %v4872 = vpack.c.b16 %v4032, %v4025
        %v4873 = vpack.c.b16 %v4033, %v4026
        %v4874 = vpack.c.b16 %v4034, %v4027
        %v4875 = vpack.c.b16 %v4042, %v4035
        %v4876 = vpack.c.b16 %v4043, %v4036
        %v4877 = vpack.c.b16 %v4044, %v4037
        %v4878 = vpack.c.b16 %v4045, %v4038
        %v4879 = vpack.c.b16 %v4046, %v4039
        %v4880 = vpack.c.b16 %v4047, %v4040
        %v4881 = vpack.c.b16 %v4048, %v4041
        %v4882 = vpack.c.b16 %v4056, %v4049
        %v4883 = vpack.c.b16 %v4057, %v4050
        %v4884 = vpack.c.b16 %v4058, %v4051
        %v4885 = vpack.c.b16 %v4059, %v4052
        %v4886 = vpack.c.b16 %v4060, %v4053
        %v4887 = vpack.c.b16 %v4061, %v4054
        %v4888 = vpack.c.b16 %v4062, %v4055
        %v4889 = vpack.c.b16 %v4070, %v4063
        %v4890 = vpack.c.b16 %v4071, %v4064
        %v4891 = vpack.c.b16 %v4072, %v4065
        %v4892 = vpack.c.b16 %v4073, %v4066
        %v4893 = vpack.c.b16 %v4074, %v4067
        %v4894 = vpack.c.b16 %v4075, %v4068
        %v4895 = vpack.c.b16 %v4076, %v4069
        %v4896 = vpack.c.b16 %v4084, %v4077
        %v4897 = vpack.c.b16 %v4085, %v4078
        %v4898 = vpack.c.b16 %v4086, %v4079
        %v4899 = vpack.c.b16 %v4087, %v4080
        %v4900 = vpack.c.b16 %v4088, %v4081
        %v4901 = vpack.c.b16 %v4089, %v4082
        %v4902 = vpack.c.b16 %v4090, %v4083
        %v4903 = vpack.c.b16 %v4098, %v4091
        %v4904 = vpack.c.b16 %v4099, %v4092
        %v4905 = vpack.c.b16 %v4100, %v4093
        %v4906 = vpack.c.b16 %v4101, %v4094
        %v4907 = vpack.c.b16 %v4102, %v4095
        %v4908 = vpack.c.b16 %v4103, %v4096
        %v4909 = vpack.c.b16 %v4104, %v4097
        %v4910 = vpack.c.b16 %v4112, %v4105
        %v4911 = vpack.c.b16 %v4113, %v4106
        %v4912 = vpack.c.b16 %v4114, %v4107
        %v4913 = vpack.c.b16 %v4115, %v4108
        %v4914 = vpack.c.b16 %v4116, %v4109
        %v4915 = vpack.c.b16 %v4117, %v4110
        %v4916 = vpack.c.b16 %v4118, %v4111
        %v4917 = vpack.c.b16 %v4126, %v4119
        %v4918 = vpack.c.b16 %v4127, %v4120
        %v4919 = vpack.c.b16 %v4128, %v4121
        %v4920 = vpack.c.b16 %v4129, %v4122
        %v4921 = vpack.c.b16 %v4130, %v4123
        %v4922 = vpack.c.b16 %v4131, %v4124
        %v4923 = vpack.c.b16 %v4132, %v4125
        %v4924 = vpack.c.b16 %v4140, %v4133
        %v4925 = vpack.c.b16 %v4141, %v4134
        %v4926 = vpack.c.b16 %v4142, %v4135
        %v4927 = vpack.c.b16 %v4143, %v4136
        %v4928 = vpack.c.b16 %v4144, %v4137
        %v4929 = vpack.c.b16 %v4145, %v4138
        %v4930 = vpack.c.b16 %v4146, %v4139
        %v4931 = vpack.c.b16 %v4154, %v4147
        %v4932 = vpack.c.b16 %v4155, %v4148
        %v4933 = vpack.c.b16 %v4156, %v4149
        %v4934 = vpack.c.b16 %v4157, %v4150
        %v4935 = vpack.c.b16 %v4158, %v4151
        %v4936 = vpack.c.b16 %v4159, %v4152
        %v4937 = vpack.c.b16 %v4160, %v4153
        %v4938 = vpack.c.b16 %v4168, %v4161
        %v4939 = vpack.c.b16 %v4169, %v4162
        %v4940 = vpack.c.b16 %v4170, %v4163
        %v4941 = vpack.c.b16 %v4171, %v4164
        %v4942 = vpack.c.b16 %v4172, %v4165
        %v4943 = vpack.c.b16 %v4173, %v4166
        %v4944 = vpack.c.b16 %v4174, %v4167
        %v4945 = vpack.c.b16 %v4182, %v4175
        %v4946 = vpack.c.b16 %v4183, %v4176
        %v4947 = vpack.c.b16 %v4184, %v4177
        %v4948 = vpack.c.b16 %v4185, %v4178
        %v4949 = vpack.c.b16 %v4186, %v4179
        %v4950 = vpack.c.b16 %v4187, %v4180
        %v4951 = vpack.c.b16 %v4188, %v4181
        %v4952 = vpack.c.b16 %v4196, %v4189
        %v4953 = vpack.c.b16 %v4197, %v4190
        %v4954 = vpack.c.b16 %v4198, %v4191
        %v4955 = vpack.c.b16 %v4199, %v4192
        %v4956 = vpack.c.b16 %v4200, %v4193
        %v4957 = vpack.c.b16 %v4201, %v4194
        %v4958 = vpack.c.b16 %v4202, %v4195
        %v4959 = vpack.c.b16 %v4210, %v4203
        %v4960 = vpack.c.b16 %v4211, %v4204
        %v4961 = vpack.c.b16 %v4212, %v4205
        %v4962 = vpack.c.b16 %v4213, %v4206
        %v4963 = vpack.c.b16 %v4214, %v4207
        %v4964 = vpack.c.b16 %v4215, %v4208
        %v4965 = vpack.c.b16 %v4216, %v4209
        %v4966 = vpack.c.b16 %v4224, %v4217
        %v4967 = vpack.c.b16 %v4225, %v4218
        %v4968 = vpack.c.b16 %v4226, %v4219
        %v4969 = vpack.c.b16 %v4227, %v4220
        %v4970 = vpack.c.b16 %v4228, %v4221
        %v4971 = vpack.c.b16 %v4229, %v4222
        %v4972 = vpack.c.b16 %v4230, %v4223
        %v4973 = vpack.c.b16 %v4238, %v4231
        %v4974 = vpack.c.b16 %v4239, %v4232
        %v4975 = vpack.c.b16 %v4240, %v4233
        %v4976 = vpack.c.b16 %v4241, %v4234
        %v4977 = vpack.c.b16 %v4242, %v4235
        %v4978 = vpack.c.b16 %v4243, %v4236
        %v4979 = vpack.c.b16 %v4244, %v4237
        %v4980 = vpack.c.b16 %v4252, %v4245
        %v4981 = vpack.c.b16 %v4253, %v4246
        %v4982 = vpack.c.b16 %v4254, %v4247
        %v4983 = vpack.c.b16 %v4255, %v4248
        %v4984 = vpack.c.b16 %v4256, %v4249
        %v4985 = vpack.c.b16 %v4257, %v4250
        %v4986 = vpack.c.b16 %v4258, %v4251
        %v4987 = vpack.c.b16 %v4266, %v4259
        %v4988 = vpack.c.b16 %v4267, %v4260
        %v4989 = vpack.c.b16 %v4268, %v4261
        %v4990 = vpack.c.b16 %v4269, %v4262
        %v4991 = vpack.c.b16 %v4270, %v4263
        %v4992 = vpack.c.b16 %v4271, %v4264
        %v4993 = vpack.c.b16 %v4272, %v4265
        %v4994 = vpack.c.b16 %v4280, %v4273
        %v4995 = vpack.c.b16 %v4281, %v4274
        %v4996 = vpack.c.b16 %v4282, %v4275
        %v4997 = vpack.c.b16 %v4283, %v4276
        %v4998 = vpack.c.b16 %v4284, %v4277
        %v4999 = vpack.c.b16 %v4285, %v4278
        %v5000 = vpack.c.b16 %v4286, %v4279
        %v5001 = vpack.c.b16 %v4294, %v4287
        %v5002 = vpack.c.b16 %v4295, %v4288
        %v5003 = vpack.c.b16 %v4296, %v4289
        %v5004 = vpack.c.b16 %v4297, %v4290
        %v5005 = vpack.c.b16 %v4298, %v4291
        %v5006 = vpack.c.b16 %v4299, %v4292
        %v5007 = vpack.c.b16 %v4300, %v4293
        %v5008 = vpack.c.b16 %v4308, %v4301
        %v5009 = vpack.c.b16 %v4309, %v4302
        %v5010 = vpack.c.b16 %v4310, %v4303
        %v5011 = vpack.c.b16 %v4311, %v4304
        %v5012 = vpack.c.b16 %v4312, %v4305
        %v5013 = vpack.c.b16 %v4313, %v4306
        %v5014 = vpack.c.b16 %v4314, %v4307
        %v5015 = vpack.c.b16 %v4322, %v4315
        %v5016 = vpack.c.b16 %v4323, %v4316
        %v5017 = vpack.c.b16 %v4324, %v4317
        %v5018 = vpack.c.b16 %v4325, %v4318
        %v5019 = vpack.c.b16 %v4326, %v4319
        %v5020 = vpack.c.b16 %v4327, %v4320
        %v5021 = vpack.c.b16 %v4328, %v4321
        %v5022 = vpack.c.b16 %v4336, %v4329
        %v5023 = vpack.c.b16 %v4337, %v4330
        %v5024 = vpack.c.b16 %v4338, %v4331
        %v5025 = vpack.c.b16 %v4339, %v4332
        %v5026 = vpack.c.b16 %v4340, %v4333
        %v5027 = vpack.c.b16 %v4341, %v4334
        %v5028 = vpack.c.b16 %v4342, %v4335
        %v5029 = vpack.c.b16 %v4350, %v4343
        %v5030 = vpack.c.b16 %v4351, %v4344
        %v5031 = vpack.c.b16 %v4352, %v4345
        %v5032 = vpack.c.b16 %v4353, %v4346
        %v5033 = vpack.c.b16 %v4354, %v4347
        %v5034 = vpack.c.b16 %v4355, %v4348
        %v5035 = vpack.c.b16 %v4356, %v4349
        %v5036 = vpack.c.b16 %v4364, %v4357
        %v5037 = vpack.c.b16 %v4365, %v4358
        %v5038 = vpack.c.b16 %v4366, %v4359
        %v5039 = vpack.c.b16 %v4367, %v4360
        %v5040 = vpack.c.b16 %v4368, %v4361
        %v5041 = vpack.c.b16 %v4369, %v4362
        %v5042 = vpack.c.b16 %v4370, %v4363
        %v5043 = vpack.c.b16 %v4378, %v4371
        %v5044 = vpack.c.b16 %v4379, %v4372
        %v5045 = vpack.c.b16 %v4380, %v4373
        %v5046 = vpack.c.b16 %v4381, %v4374
        %v5047 = vpack.c.b16 %v4382, %v4375
        %v5048 = vpack.c.b16 %v4383, %v4376
        %v5049 = vpack.c.b16 %v4384, %v4377
        %v5050 = vpack.c.b16 %v4392, %v4385
        %v5051 = vpack.c.b16 %v4393, %v4386
        %v5052 = vpack.c.b16 %v4394, %v4387
        %v5053 = vpack.c.b16 %v4395, %v4388
        %v5054 = vpack.c.b16 %v4396, %v4389
        %v5055 = vpack.c.b16 %v4397, %v4390
        %v5056 = vpack.c.b16 %v4398, %v4391
        %v5057 = vpack.c.b16 %v4406, %v4399
        %v5058 = vpack.c.b16 %v4407, %v4400
        %v5059 = vpack.c.b16 %v4408, %v4401
        %v5060 = vpack.c.b16 %v4409, %v4402
        %v5061 = vpack.c.b16 %v4410, %v4403
        %v5062 = vpack.c.b16 %v4411, %v4404
        %v5063 = vpack.c.b16 %v4412, %v4405
        %v5064 = vpack.c.b16 %v4420, %v4413
        %v5065 = vpack.c.b16 %v4421, %v4414
        %v5066 = vpack.c.b16 %v4422, %v4415
        %v5067 = vpack.c.b16 %v4423, %v4416
        %v5068 = vpack.c.b16 %v4424, %v4417
        %v5069 = vpack.c.b16 %v4425, %v4418
        %v5070 = vpack.c.b16 %v4426, %v4419
        %v5071 = vpack.c.b16 %v4434, %v4427
        %v5072 = vpack.c.b16 %v4435, %v4428
        %v5073 = vpack.c.b16 %v4436, %v4429
        %v5074 = vpack.c.b16 %v4437, %v4430
        %v5075 = vpack.c.b16 %v4438, %v4431
        %v5076 = vpack.c.b16 %v4439, %v4432
        %v5077 = vpack.c.b16 %v4440, %v4433
        %v5078 = vpack.c.b16 %v4448, %v4441
        %v5079 = vpack.c.b16 %v4449, %v4442
        %v5080 = vpack.c.b16 %v4450, %v4443
        %v5081 = vpack.c.b16 %v4451, %v4444
        %v5082 = vpack.c.b16 %v4452, %v4445
        %v5083 = vpack.c.b16 %v4453, %v4446
        %v5084 = vpack.c.b16 %v4454, %v4447
        %v5085 = vpack.c.b16 %v4462, %v4455
        %v5086 = vpack.c.b16 %v4463, %v4456
        %v5087 = vpack.c.b16 %v4464, %v4457
        %v5088 = vpack.c.b16 %v4465, %v4458
        %v5089 = vpack.c.b16 %v4466, %v4459
        %v5090 = vpack.c.b16 %v4467, %v4460
        %v5091 = vpack.c.b16 %v4468, %v4461
        %v5092 = vpack.c.b16 %v4476, %v4469
        %v5093 = vpack.c.b16 %v4477, %v4470
        %v5094 = vpack.c.b16 %v4478, %v4471
        %v5095 = vpack.c.b16 %v4479, %v4472
        %v5096 = vpack.c.b16 %v4480, %v4473
        %v5097 = vpack.c.b16 %v4481, %v4474
        %v5098 = vpack.c.b16 %v4482, %v4475
        %v5099 = vpack.c.b16 %v4490, %v4483
        %v5100 = vpack.c.b16 %v4491, %v4484
        %v5101 = vpack.c.b16 %v4492, %v4485
        %v5102 = vpack.c.b16 %v4493, %v4486
        %v5103 = vpack.c.b16 %v4494, %v4487
        %v5104 = vpack.c.b16 %v4495, %v4488
        %v5105 = vpack.c.b16 %v4496, %v4489
        %v5106 = vpack.c.b16 %v4504, %v4497
        %v5107 = vpack.c.b16 %v4505, %v4498
        %v5108 = vpack.c.b16 %v4506, %v4499
        %v5109 = vpack.c.b16 %v4507, %v4500
        %v5110 = vpack.c.b16 %v4508, %v4501
        %v5111 = vpack.c.b16 %v4509, %v4502
        %v5112 = vpack.c.b16 %v4510, %v4503
        %v5113 = vpack.c.b16 %v4518, %v4511
        %v5114 = vpack.c.b16 %v4519, %v4512
        %v5115 = vpack.c.b16 %v4520, %v4513
        %v5116 = vpack.c.b16 %v4521, %v4514
        %v5117 = vpack.c.b16 %v4522, %v4515
        %v5118 = vpack.c.b16 %v4523, %v4516
        %v5119 = vpack.c.b16 %v4524, %v4517
        %v5120 = vpack.c.b16 %v4532, %v4525
        %v5121 = vpack.c.b16 %v4533, %v4526
        %v5122 = vpack.c.b16 %v4534, %v4527
        %v5123 = vpack.c.b16 %v4535, %v4528
        %v5124 = vpack.c.b16 %v4536, %v4529
        %v5125 = vpack.c.b16 %v4537, %v4530
        %v5126 = vpack.c.b16 %v4538, %v4531
        %v5127 = vpack.c.b16 %v4546, %v4539
        %v5128 = vpack.c.b16 %v4547, %v4540
        %v5129 = vpack.c.b16 %v4548, %v4541
        %v5130 = vpack.c.b16 %v4549, %v4542
        %v5131 = vpack.c.b16 %v4550, %v4543
        %v5132 = vpack.c.b16 %v4551, %v4544
        %v5133 = vpack.c.b16 %v4552, %v4545
        %v5134 = vpack.c.b16 %v4560, %v4553
        %v5135 = vpack.c.b16 %v4561, %v4554
        %v5136 = vpack.c.b16 %v4562, %v4555
        %v5137 = vpack.c.b16 %v4563, %v4556
        %v5138 = vpack.c.b16 %v4564, %v4557
        %v5139 = vpack.c.b16 %v4565, %v4558
        %v5140 = vpack.c.b16 %v4566, %v4559
        %v5141 = vpack.c.b16 %v4574, %v4567
        %v5142 = vpack.c.b16 %v4575, %v4568
        %v5143 = vpack.c.b16 %v4576, %v4569
        %v5144 = vpack.c.b16 %v4577, %v4570
        %v5145 = vpack.c.b16 %v4578, %v4571
        %v5146 = vpack.c.b16 %v4579, %v4572
        %v5147 = vpack.c.b16 %v4580, %v4573
        %v5148 = vpack.c.b16 %v4588, %v4581
        %v5149 = vpack.c.b16 %v4589, %v4582
        %v5150 = vpack.c.b16 %v4590, %v4583
        %v5151 = vpack.c.b16 %v4591, %v4584
        %v5152 = vpack.c.b16 %v4592, %v4585
        %v5153 = vpack.c.b16 %v4593, %v4586
        %v5154 = vpack.c.b16 %v4594, %v4587
        %v5155 = vpack.c.b16 %v4602, %v4595
        %v5156 = vpack.c.b16 %v4603, %v4596
        %v5157 = vpack.c.b16 %v4604, %v4597
        %v5158 = vpack.c.b16 %v4605, %v4598
        %v5159 = vpack.c.b16 %v4606, %v4599
        %v5160 = vpack.c.b16 %v4607, %v4600
        %v5161 = vpack.c.b16 %v4608, %v4601
        %v5162 = vpack.c.b16 %v4616, %v4609
        %v5163 = vpack.c.b16 %v4617, %v4610
        %v5164 = vpack.c.b16 %v4618, %v4611
        %v5165 = vpack.c.b16 %v4619, %v4612
        %v5166 = vpack.c.b16 %v4620, %v4613
        %v5167 = vpack.c.b16 %v4621, %v4614
        %v5168 = vpack.c.b16 %v4622, %v4615
        %v5169 = vpack.c.b16 %v4630, %v4623
        %v5170 = vpack.c.b16 %v4631, %v4624
        %v5171 = vpack.c.b16 %v4632, %v4625
        %v5172 = vpack.c.b16 %v4633, %v4626
        %v5173 = vpack.c.b16 %v4634, %v4627
        %v5174 = vpack.c.b16 %v4635, %v4628
        %v5175 = vpack.c.b16 %v4636, %v4629
        %v5176 = vpack.c.b16 %v4644, %v4637
        %v5177 = vpack.c.b16 %v4645, %v4638
        %v5178 = vpack.c.b16 %v4646, %v4639
        %v5179 = vpack.c.b16 %v4647, %v4640
        %v5180 = vpack.c.b16 %v4648, %v4641
        %v5181 = vpack.c.b16 %v4649, %v4642
        %v5182 = vpack.c.b16 %v4650, %v4643
        %v5183 = vpack.c.b16 %v4658, %v4651
        %v5184 = vpack.c.b16 %v4659, %v4652
        %v5185 = vpack.c.b16 %v4660, %v4653
        %v5186 = vpack.c.b16 %v4661, %v4654
        %v5187 = vpack.c.b16 %v4662, %v4655
        %v5188 = vpack.c.b16 %v4663, %v4656
        %v5189 = vpack.c.b16 %v4664, %v4657
        %v5190 = vpack.c.b16 %v4672, %v4665
        %v5191 = vpack.c.b16 %v4673, %v4666
        %v5192 = vpack.c.b16 %v4674, %v4667
        %v5193 = vpack.c.b16 %v4675, %v4668
        %v5194 = vpack.c.b16 %v4676, %v4669
        %v5195 = vpack.c.b16 %v4677, %v4670
        %v5196 = vpack.c.b16 %v4678, %v4671
        %v5197 = vpack.c.b16 %v4686, %v4679
        %v5198 = vpack.c.b16 %v4687, %v4680
        %v5199 = vpack.c.b16 %v4688, %v4681
        %v5200 = vpack.c.b16 %v4689, %v4682
        %v5201 = vpack.c.b16 %v4690, %v4683
        %v5202 = vpack.c.b16 %v4691, %v4684
        %v5203 = vpack.c.b16 %v4692, %v4685
        %v5204 = vpack.c.b16 %v4700, %v4693
        %v5205 = vpack.c.b16 %v4701, %v4694
        %v5206 = vpack.c.b16 %v4702, %v4695
        %v5207 = vpack.c.b16 %v4703, %v4696
        %v5208 = vpack.c.b16 %v4704, %v4697
        %v5209 = vpack.c.b16 %v4705, %v4698
        %v5210 = vpack.c.b16 %v4706, %v4699
        %v5211 = vpack.c.b16 %v4714, %v4707
        %v5212 = vpack.c.b16 %v4715, %v4708
        %v5213 = vpack.c.b16 %v4716, %v4709
        %v5214 = vpack.c.b16 %v4717, %v4710
        %v5215 = vpack.c.b16 %v4718, %v4711
        %v5216 = vpack.c.b16 %v4719, %v4712
        %v5217 = vpack.c.b16 %v4720, %v4713
        %v5218 = vpack.c.b16 %v4728, %v4721
        %v5219 = vpack.c.b16 %v4729, %v4722
        %v5220 = vpack.c.b16 %v4730, %v4723
        %v5221 = vpack.c.b16 %v4731, %v4724
        %v5222 = vpack.c.b16 %v4732, %v4725
        %v5223 = vpack.c.b16 %v4733, %v4726
        %v5224 = vpack.c.b16 %v4734, %v4727
        %v5225 = vpack.c.b16 %v4742, %v4735
        %v5226 = vpack.c.b16 %v4743, %v4736
        %v5227 = vpack.c.b16 %v4744, %v4737
        %v5228 = vpack.c.b16 %v4745, %v4738
        %v5229 = vpack.c.b16 %v4746, %v4739
        %v5230 = vpack.c.b16 %v4747, %v4740
        %v5231 = vpack.c.b16 %v4748, %v4741
        %v5232 = vpack.c.b16 %v4756, %v4749
        %v5233 = vpack.c.b16 %v4757, %v4750
        %v5234 = vpack.c.b16 %v4758, %v4751
        %v5235 = vpack.c.b16 %v4759, %v4752
        %v5236 = vpack.c.b16 %v4760, %v4753
        %v5237 = vpack.c.b16 %v4761, %v4754
        %v5238 = vpack.c.b16 %v4762, %v4755
        %v5239 = vpack.c.b16 %v4770, %v4763
        %v5240 = vpack.c.b16 %v4771, %v4764
        %v5241 = vpack.c.b16 %v4772, %v4765
        %v5242 = vpack.c.b16 %v4773, %v4766
        %v5243 = vpack.c.b16 %v4774, %v4767
        %v5244 = vpack.c.b16 %v4775, %v4768
        %v5245 = vpack.c.b16 %v4776, %v4769
        %v5246 = vpack.c.b16 %v4784, %v4777
        %v5247 = vpack.c.b16 %v4785, %v4778
        %v5248 = vpack.c.b16 %v4786, %v4779
        %v5249 = vpack.c.b16 %v4787, %v4780
        %v5250 = vpack.c.b16 %v4788, %v4781
        %v5251 = vpack.c.b16 %v4789, %v4782
        %v5252 = vpack.c.b16 %v4790, %v4783
        %v5253 = vpack.c.b16 %v4798, %v4791
        %v5254 = vpack.c.b16 %v4799, %v4792
        %v5255 = vpack.c.b16 %v4800, %v4793
        %v5256 = vpack.c.b16 %v4801, %v4794
        %v5257 = vpack.c.b16 %v4802, %v4795
        %v5258 = vpack.c.b16 %v4803, %v4796
        %v5259 = vpack.c.b16 %v4804, %v4797
        %v5260 = vpack.c.b16 %v4812, %v4805
        %v5261 = vpack.c.b16 %v4813, %v4806
        %v5262 = vpack.c.b16 %v4814, %v4807
        %v5263 = vpack.c.b16 %v4815, %v4808
        %v5264 = vpack.c.b16 %v4816, %v4809
        %v5265 = vpack.c.b16 %v4817, %v4810
        %v5266 = vpack.c.b16 %v4818, %v4811
        %5715 = vmatprep.subr.bf16.mxu0 %v4869
        %5716 = vmatpush1.bf16.msra.mxu0 %v4868
        %5717 = vmatprep.subr.bf16.mxu0 %v4862
        %5718 = vmatpush1.bf16.msra.mxu0 %v4861
        %5719 = vmatprep.subr.bf16.mxu0 %v4855
        %5720 = vmatpush1.bf16.msra.mxu0 %v4854
        %5721 = vmatprep.subr.bf16.mxu0 %v4848
        %5722 = vmatpush1.bf16.msra.mxu0 %v4847
        %5723 = vmatprep.subr.bf16.mxu0 %v4841
        %5724 = vmatpush1.bf16.msra.mxu0 %v4840
        %5725 = vmatprep.subr.bf16.mxu0 %v4834
        %5726 = vmatpush1.bf16.msra.mxu0 %v4833
        %5727 = vmatprep.subr.bf16.mxu0 %v4827
        %5728 = vmatpush1.bf16.msra.mxu0 %v4826
        %5729 = vmatprep.subr.bf16.mxu0 %v4820
        %5730 = vmatpush1.bf16.msra.mxu0 %v4819
        %5731 = vmatprep.subr.bf16.mxu0 %v4925
        %5732 = vmatpush2.bf16.msra.mxu0 %v4924
        %5733 = vmatprep.subr.bf16.mxu0 %v4918
        %5734 = vmatpush2.bf16.msra.mxu0 %v4917
        %5735 = vmatprep.subr.bf16.mxu0 %v4911
        %5736 = vmatpush2.bf16.msra.mxu0 %v4910
        %5737 = vmatprep.subr.bf16.mxu0 %v4904
        %5738 = vmatpush2.bf16.msra.mxu0 %v4903
        %5739 = vmatprep.subr.bf16.mxu0 %v4897
        %5740 = vmatpush2.bf16.msra.mxu0 %v4896
        %5741 = vmatprep.subr.bf16.mxu0 %v4890
        %5742 = vmatpush2.bf16.msra.mxu0 %v4889
        %5743 = vmatprep.subr.bf16.mxu0 %v4883
        %5744 = vmatpush2.bf16.msra.mxu0 %v4882
        %5745 = vmatprep.subr.bf16.mxu0 %v4876
        %5746 = vmatpush2.bf16.msra.mxu0 %v4875
        %5747 = vmatprep.mubr.bf16.mxu0 %v2855
        %5748 = vmatmul.mubr.bf16.gmra.mxu0 %v2854
        %v5749 = vpop.f32.mrf.mxu0
        %v5750 = vadd.f32 %v3379, %v5749
        %v5751 = vpop.f32.mrf.mxu0
        %v5752 = vadd.f32 %v3383, %v5751
        %v5753 = vpop.f32.mrf.mxu0
        %v5754 = vpop.f32.mrf.mxu0
        %5755 = vdwg.mxu0
        %5756 = vmatprep.subr.bf16.mxu0 %v4981
        %5757 = vmatpush1.bf16.msra.mxu0 %v4980
        %5758 = vmatprep.subr.bf16.mxu0 %v4974
        %5759 = vmatpush1.bf16.msra.mxu0 %v4973
        %5760 = vmatprep.subr.bf16.mxu0 %v4967
        %5761 = vmatpush1.bf16.msra.mxu0 %v4966
        %5762 = vmatprep.subr.bf16.mxu0 %v4960
        %5763 = vmatpush1.bf16.msra.mxu0 %v4959
        %5764 = vmatprep.subr.bf16.mxu0 %v4953
        %5765 = vmatpush1.bf16.msra.mxu0 %v4952
        %5766 = vmatprep.subr.bf16.mxu0 %v4946
        %5767 = vmatpush1.bf16.msra.mxu0 %v4945
        %5768 = vmatprep.subr.bf16.mxu0 %v4939
        %5769 = vmatpush1.bf16.msra.mxu0 %v4938
        %5770 = vmatprep.subr.bf16.mxu0 %v4932
        %5771 = vmatpush1.bf16.msra.mxu0 %v4931
        %5772 = vmatprep.subr.bf16.mxu0 %v5037
        %5773 = vmatpush2.bf16.msra.mxu0 %v5036
        %5774 = vmatprep.subr.bf16.mxu0 %v5030
        %5775 = vmatpush2.bf16.msra.mxu0 %v5029
        %5776 = vmatprep.subr.bf16.mxu0 %v5023
        %5777 = vmatpush2.bf16.msra.mxu0 %v5022
        %5778 = vmatprep.subr.bf16.mxu0 %v5016
        %5779 = vmatpush2.bf16.msra.mxu0 %v5015
        %5780 = vmatprep.subr.bf16.mxu0 %v5009
        %5781 = vmatpush2.bf16.msra.mxu0 %v5008
        %5782 = vmatprep.subr.bf16.mxu0 %v5002
        %5783 = vmatpush2.bf16.msra.mxu0 %v5001
        %5784 = vmatprep.subr.bf16.mxu0 %v4995
        %5785 = vmatpush2.bf16.msra.mxu0 %v4994
        %5786 = vmatprep.subr.bf16.mxu0 %v4988
        %5787 = vmatpush2.bf16.msra.mxu0 %v4987
        %5788 = vmatprep.mubr.bf16.mxu0 %v2857
        %5789 = vmatmul.mubr.bf16.gmra.mxu0 %v2856
        %v5790 = vpop.f32.mrf.mxu0
        %v5791 = vadd.f32 %v5750, %v5790
        %v5792 = vpop.f32.mrf.mxu0
        %v5793 = vadd.f32 %v5752, %v5792
        %v5794 = vpop.f32.mrf.mxu0
        %v5795 = vpop.f32.mrf.mxu0
        %5796 = vdwg.mxu0
        %5797 = vmatprep.subr.bf16.mxu0 %v5093
        %5798 = vmatpush1.bf16.msra.mxu0 %v5092
        %5799 = vmatprep.subr.bf16.mxu0 %v5086
        %5800 = vmatpush1.bf16.msra.mxu0 %v5085
        %5801 = vmatprep.subr.bf16.mxu0 %v5079
        %5802 = vmatpush1.bf16.msra.mxu0 %v5078
        %5803 = vmatprep.subr.bf16.mxu0 %v5072
        %5804 = vmatpush1.bf16.msra.mxu0 %v5071
        %5805 = vmatprep.subr.bf16.mxu0 %v5065
        %5806 = vmatpush1.bf16.msra.mxu0 %v5064
        %5807 = vmatprep.subr.bf16.mxu0 %v5058
        %5808 = vmatpush1.bf16.msra.mxu0 %v5057
        %5809 = vmatprep.subr.bf16.mxu0 %v5051
        %5810 = vmatpush1.bf16.msra.mxu0 %v5050
        %5811 = vmatprep.subr.bf16.mxu0 %v5044
        %5812 = vmatpush1.bf16.msra.mxu0 %v5043
        %5813 = vmatprep.subr.bf16.mxu0 %v5149
        %5814 = vmatpush2.bf16.msra.mxu0 %v5148
        %5815 = vmatprep.subr.bf16.mxu0 %v5142
        %5816 = vmatpush2.bf16.msra.mxu0 %v5141
        %5817 = vmatprep.subr.bf16.mxu0 %v5135
        %5818 = vmatpush2.bf16.msra.mxu0 %v5134
        %5819 = vmatprep.subr.bf16.mxu0 %v5128
        %5820 = vmatpush2.bf16.msra.mxu0 %v5127
        %5821 = vmatprep.subr.bf16.mxu0 %v5121
        %5822 = vmatpush2.bf16.msra.mxu0 %v5120
        %5823 = vmatprep.subr.bf16.mxu0 %v5114
        %5824 = vmatpush2.bf16.msra.mxu0 %v5113
        %5825 = vmatprep.subr.bf16.mxu0 %v5107
        %5826 = vmatpush2.bf16.msra.mxu0 %v5106
        %5827 = vmatprep.subr.bf16.mxu0 %v5100
        %5828 = vmatpush2.bf16.msra.mxu0 %v5099
        %5829 = vmatprep.mubr.bf16.mxu0 %v2859
        %5830 = vmatmul.mubr.bf16.gmra.mxu0 %v2858
        %v5831 = vpop.f32.mrf.mxu0
        %v5832 = vadd.f32 %v5791, %v5831
        %v5833 = vpop.f32.mrf.mxu0
        %v5834 = vadd.f32 %v5793, %v5833
        %v5835 = vpop.f32.mrf.mxu0
        %v5836 = vpop.f32.mrf.mxu0
        %5837 = vdwg.mxu0
        %5838 = vmatprep.subr.bf16.mxu0 %v5205
        %5839 = vmatpush1.bf16.msra.mxu0 %v5204
        %5840 = vmatprep.subr.bf16.mxu0 %v5198
        %5841 = vmatpush1.bf16.msra.mxu0 %v5197
        %5842 = vmatprep.subr.bf16.mxu0 %v5191
        %5843 = vmatpush1.bf16.msra.mxu0 %v5190
        %5844 = vmatprep.subr.bf16.mxu0 %v5184
        %5845 = vmatpush1.bf16.msra.mxu0 %v5183
        %5846 = vmatprep.subr.bf16.mxu0 %v5177
        %5847 = vmatpush1.bf16.msra.mxu0 %v5176
        %5848 = vmatprep.subr.bf16.mxu0 %v5170
        %5849 = vmatpush1.bf16.msra.mxu0 %v5169
        %5850 = vmatprep.subr.bf16.mxu0 %v5163
        %5851 = vmatpush1.bf16.msra.mxu0 %v5162
        %5852 = vmatprep.subr.bf16.mxu0 %v5156
        %5853 = vmatpush1.bf16.msra.mxu0 %v5155
        %5854 = vmatprep.subr.bf16.mxu0 %v5261
        %5855 = vmatpush2.bf16.msra.mxu0 %v5260
        %5856 = vmatprep.subr.bf16.mxu0 %v5254
        %5857 = vmatpush2.bf16.msra.mxu0 %v5253
        %5858 = vmatprep.subr.bf16.mxu0 %v5247
        %5859 = vmatpush2.bf16.msra.mxu0 %v5246
        %5860 = vmatprep.subr.bf16.mxu0 %v5240
        %5861 = vmatpush2.bf16.msra.mxu0 %v5239
        %5862 = vmatprep.subr.bf16.mxu0 %v5233
        %5863 = vmatpush2.bf16.msra.mxu0 %v5232
        %5864 = vmatprep.subr.bf16.mxu0 %v5226
        %5865 = vmatpush2.bf16.msra.mxu0 %v5225
        %5866 = vmatprep.subr.bf16.mxu0 %v5219
        %5867 = vmatpush2.bf16.msra.mxu0 %v5218
        %5868 = vmatprep.subr.bf16.mxu0 %v5212
        %5869 = vmatpush2.bf16.msra.mxu0 %v5211
        %5870 = vmatprep.mubr.bf16.mxu0 %v2861
        %5871 = vmatmul.mubr.bf16.gmra.mxu0 %v2860
        %v5872 = vpop.f32.mrf.mxu0
        %v5873 = vadd.f32 %v5832, %v5872
        %v5874 = vpop.f32.mrf.mxu0
        %v5875 = vadd.f32 %v5834, %v5874
        %v5876 = vpop.f32.mrf.mxu0
        %v5877 = vpop.f32.mrf.mxu0
        %5878 = vdwg.mxu0
        %5879 = vmatprep.subr.bf16.mxu0 %v4871
        %5880 = vmatpush1.bf16.msra.mxu0 %v4870
        %5881 = vmatprep.subr.bf16.mxu0 %v4864
        %5882 = vmatpush1.bf16.msra.mxu0 %v4863
        %5883 = vmatprep.subr.bf16.mxu0 %v4857
        %5884 = vmatpush1.bf16.msra.mxu0 %v4856
        %5885 = vmatprep.subr.bf16.mxu0 %v4850
        %5886 = vmatpush1.bf16.msra.mxu0 %v4849
        %5887 = vmatprep.subr.bf16.mxu0 %v4843
        %5888 = vmatpush1.bf16.msra.mxu0 %v4842
        %5889 = vmatprep.subr.bf16.mxu0 %v4836
        %5890 = vmatpush1.bf16.msra.mxu0 %v4835
        %5891 = vmatprep.subr.bf16.mxu0 %v4829
        %5892 = vmatpush1.bf16.msra.mxu0 %v4828
        %5893 = vmatprep.subr.bf16.mxu0 %v4822
        %5894 = vmatpush1.bf16.msra.mxu0 %v4821
        %5895 = vmatprep.subr.bf16.mxu0 %v4927
        %5896 = vmatpush2.bf16.msra.mxu0 %v4926
        %5897 = vmatprep.subr.bf16.mxu0 %v4920
        %5898 = vmatpush2.bf16.msra.mxu0 %v4919
        %5899 = vmatprep.subr.bf16.mxu0 %v4913
        %5900 = vmatpush2.bf16.msra.mxu0 %v4912
        %5901 = vmatprep.subr.bf16.mxu0 %v4906
        %5902 = vmatpush2.bf16.msra.mxu0 %v4905
        %5903 = vmatprep.subr.bf16.mxu0 %v4899
        %5904 = vmatpush2.bf16.msra.mxu0 %v4898
        %5905 = vmatprep.subr.bf16.mxu0 %v4892
        %5906 = vmatpush2.bf16.msra.mxu0 %v4891
        %5907 = vmatprep.subr.bf16.mxu0 %v4885
        %5908 = vmatpush2.bf16.msra.mxu0 %v4884
        %5909 = vmatprep.subr.bf16.mxu0 %v4878
        %5910 = vmatpush2.bf16.msra.mxu0 %v4877
        %5911 = vmatprep.mubr.bf16.mxu0 %v2855
        %5912 = vmatmul.mubr.bf16.gmra.mxu0 %v2854
        %v5913 = vpop.f32.mrf.mxu0
        %v5914 = vadd.f32 %v3387, %v5913
        %v5915 = vpop.f32.mrf.mxu0
        %v5916 = vadd.f32 %v3391, %v5915
        %v5917 = vpop.f32.mrf.mxu0
        %v5918 = vpop.f32.mrf.mxu0
        %5919 = vdwg.mxu0
        %5920 = vmatprep.subr.bf16.mxu0 %v4983
        %5921 = vmatpush1.bf16.msra.mxu0 %v4982
        %5922 = vmatprep.subr.bf16.mxu0 %v4976
        %5923 = vmatpush1.bf16.msra.mxu0 %v4975
        %5924 = vmatprep.subr.bf16.mxu0 %v4969
        %5925 = vmatpush1.bf16.msra.mxu0 %v4968
        %5926 = vmatprep.subr.bf16.mxu0 %v4962
        %5927 = vmatpush1.bf16.msra.mxu0 %v4961
        %5928 = vmatprep.subr.bf16.mxu0 %v4955
        %5929 = vmatpush1.bf16.msra.mxu0 %v4954
        %5930 = vmatprep.subr.bf16.mxu0 %v4948
        %5931 = vmatpush1.bf16.msra.mxu0 %v4947
        %5932 = vmatprep.subr.bf16.mxu0 %v4941
        %5933 = vmatpush1.bf16.msra.mxu0 %v4940
        %5934 = vmatprep.subr.bf16.mxu0 %v4934
        %5935 = vmatpush1.bf16.msra.mxu0 %v4933
        %5936 = vmatprep.subr.bf16.mxu0 %v5039
        %5937 = vmatpush2.bf16.msra.mxu0 %v5038
        %5938 = vmatprep.subr.bf16.mxu0 %v5032
        %5939 = vmatpush2.bf16.msra.mxu0 %v5031
        %5940 = vmatprep.subr.bf16.mxu0 %v5025
        %5941 = vmatpush2.bf16.msra.mxu0 %v5024
        %5942 = vmatprep.subr.bf16.mxu0 %v5018
        %5943 = vmatpush2.bf16.msra.mxu0 %v5017
        %5944 = vmatprep.subr.bf16.mxu0 %v5011
        %5945 = vmatpush2.bf16.msra.mxu0 %v5010
        %5946 = vmatprep.subr.bf16.mxu0 %v5004
        %5947 = vmatpush2.bf16.msra.mxu0 %v5003
        %5948 = vmatprep.subr.bf16.mxu0 %v4997
        %5949 = vmatpush2.bf16.msra.mxu0 %v4996
        %5950 = vmatprep.subr.bf16.mxu0 %v4990
        %5951 = vmatpush2.bf16.msra.mxu0 %v4989
        %5952 = vmatprep.mubr.bf16.mxu0 %v2857
        %5953 = vmatmul.mubr.bf16.gmra.mxu0 %v2856
        %v5954 = vpop.f32.mrf.mxu0
        %v5955 = vadd.f32 %v5914, %v5954
        %v5956 = vpop.f32.mrf.mxu0
        %v5957 = vadd.f32 %v5916, %v5956
        %v5958 = vpop.f32.mrf.mxu0
        %v5959 = vpop.f32.mrf.mxu0
        %5960 = vdwg.mxu0
        %5961 = vmatprep.subr.bf16.mxu0 %v5095
        %5962 = vmatpush1.bf16.msra.mxu0 %v5094
        %5963 = vmatprep.subr.bf16.mxu0 %v5088
        %5964 = vmatpush1.bf16.msra.mxu0 %v5087
        %5965 = vmatprep.subr.bf16.mxu0 %v5081
        %5966 = vmatpush1.bf16.msra.mxu0 %v5080
        %5967 = vmatprep.subr.bf16.mxu0 %v5074
        %5968 = vmatpush1.bf16.msra.mxu0 %v5073
        %5969 = vmatprep.subr.bf16.mxu0 %v5067
        %5970 = vmatpush1.bf16.msra.mxu0 %v5066
        %5971 = vmatprep.subr.bf16.mxu0 %v5060
        %5972 = vmatpush1.bf16.msra.mxu0 %v5059
        %5973 = vmatprep.subr.bf16.mxu0 %v5053
        %5974 = vmatpush1.bf16.msra.mxu0 %v5052
        %5975 = vmatprep.subr.bf16.mxu0 %v5046
        %5976 = vmatpush1.bf16.msra.mxu0 %v5045
        %5977 = vmatprep.subr.bf16.mxu0 %v5151
        %5978 = vmatpush2.bf16.msra.mxu0 %v5150
        %5979 = vmatprep.subr.bf16.mxu0 %v5144
        %5980 = vmatpush2.bf16.msra.mxu0 %v5143
        %5981 = vmatprep.subr.bf16.mxu0 %v5137
        %5982 = vmatpush2.bf16.msra.mxu0 %v5136
        %5983 = vmatprep.subr.bf16.mxu0 %v5130
        %5984 = vmatpush2.bf16.msra.mxu0 %v5129
        %5985 = vmatprep.subr.bf16.mxu0 %v5123
        %5986 = vmatpush2.bf16.msra.mxu0 %v5122
        %5987 = vmatprep.subr.bf16.mxu0 %v5116
        %5988 = vmatpush2.bf16.msra.mxu0 %v5115
        %5989 = vmatprep.subr.bf16.mxu0 %v5109
        %5990 = vmatpush2.bf16.msra.mxu0 %v5108
        %5991 = vmatprep.subr.bf16.mxu0 %v5102
        %5992 = vmatpush2.bf16.msra.mxu0 %v5101
        %5993 = vmatprep.mubr.bf16.mxu0 %v2859
        %5994 = vmatmul.mubr.bf16.gmra.mxu0 %v2858
        %v5995 = vpop.f32.mrf.mxu0
        %v5996 = vadd.f32 %v5955, %v5995
        %v5997 = vpop.f32.mrf.mxu0
        %v5998 = vadd.f32 %v5957, %v5997
        %v5999 = vpop.f32.mrf.mxu0
        %v6000 = vpop.f32.mrf.mxu0
        %6001 = vdwg.mxu0
        %6002 = vmatprep.subr.bf16.mxu0 %v5207
        %6003 = vmatpush1.bf16.msra.mxu0 %v5206
        %6004 = vmatprep.subr.bf16.mxu0 %v5200
        %6005 = vmatpush1.bf16.msra.mxu0 %v5199
        %6006 = vmatprep.subr.bf16.mxu0 %v5193
        %6007 = vmatpush1.bf16.msra.mxu0 %v5192
        %6008 = vmatprep.subr.bf16.mxu0 %v5186
        %6009 = vmatpush1.bf16.msra.mxu0 %v5185
        %6010 = vmatprep.subr.bf16.mxu0 %v5179
        %6011 = vmatpush1.bf16.msra.mxu0 %v5178
        %6012 = vmatprep.subr.bf16.mxu0 %v5172
        %6013 = vmatpush1.bf16.msra.mxu0 %v5171
        %6014 = vmatprep.subr.bf16.mxu0 %v5165
        %6015 = vmatpush1.bf16.msra.mxu0 %v5164
        %6016 = vmatprep.subr.bf16.mxu0 %v5158
        %6017 = vmatpush1.bf16.msra.mxu0 %v5157
        %6018 = vmatprep.subr.bf16.mxu0 %v5263
        %6019 = vmatpush2.bf16.msra.mxu0 %v5262
        %6020 = vmatprep.subr.bf16.mxu0 %v5256
        %6021 = vmatpush2.bf16.msra.mxu0 %v5255
        %6022 = vmatprep.subr.bf16.mxu0 %v5249
        %6023 = vmatpush2.bf16.msra.mxu0 %v5248
        %6024 = vmatprep.subr.bf16.mxu0 %v5242
        %6025 = vmatpush2.bf16.msra.mxu0 %v5241
        %6026 = vmatprep.subr.bf16.mxu0 %v5235
        %6027 = vmatpush2.bf16.msra.mxu0 %v5234
        %6028 = vmatprep.subr.bf16.mxu0 %v5228
        %6029 = vmatpush2.bf16.msra.mxu0 %v5227
        %6030 = vmatprep.subr.bf16.mxu0 %v5221
        %6031 = vmatpush2.bf16.msra.mxu0 %v5220
        %6032 = vmatprep.subr.bf16.mxu0 %v5214
        %6033 = vmatpush2.bf16.msra.mxu0 %v5213
        %6034 = vmatprep.mubr.bf16.mxu0 %v2861
        %6035 = vmatmul.mubr.bf16.gmra.mxu0 %v2860
        %v6036 = vpop.f32.mrf.mxu0
        %v6037 = vadd.f32 %v5996, %v6036
        %v6038 = vpop.f32.mrf.mxu0
        %v6039 = vadd.f32 %v5998, %v6038
        %v6040 = vpop.f32.mrf.mxu0
        %v6041 = vpop.f32.mrf.mxu0
        %6042 = vdwg.mxu0
        %6043 = vmatprep.subr.bf16.mxu0 %v4873
        %6044 = vmatpush1.bf16.msra.mxu0 %v4872
        %6045 = vmatprep.subr.bf16.mxu0 %v4866
        %6046 = vmatpush1.bf16.msra.mxu0 %v4865
        %6047 = vmatprep.subr.bf16.mxu0 %v4859
        %6048 = vmatpush1.bf16.msra.mxu0 %v4858
        %6049 = vmatprep.subr.bf16.mxu0 %v4852
        %6050 = vmatpush1.bf16.msra.mxu0 %v4851
        %6051 = vmatprep.subr.bf16.mxu0 %v4845
        %6052 = vmatpush1.bf16.msra.mxu0 %v4844
        %6053 = vmatprep.subr.bf16.mxu0 %v4838
        %6054 = vmatpush1.bf16.msra.mxu0 %v4837
        %6055 = vmatprep.subr.bf16.mxu0 %v4831
        %6056 = vmatpush1.bf16.msra.mxu0 %v4830
        %6057 = vmatprep.subr.bf16.mxu0 %v4824
        %6058 = vmatpush1.bf16.msra.mxu0 %v4823
        %6059 = vmatprep.subr.bf16.mxu0 %v4929
        %6060 = vmatpush2.bf16.msra.mxu0 %v4928
        %6061 = vmatprep.subr.bf16.mxu0 %v4922
        %6062 = vmatpush2.bf16.msra.mxu0 %v4921
        %6063 = vmatprep.subr.bf16.mxu0 %v4915
        %6064 = vmatpush2.bf16.msra.mxu0 %v4914
        %6065 = vmatprep.subr.bf16.mxu0 %v4908
        %6066 = vmatpush2.bf16.msra.mxu0 %v4907
        %6067 = vmatprep.subr.bf16.mxu0 %v4901
        %6068 = vmatpush2.bf16.msra.mxu0 %v4900
        %6069 = vmatprep.subr.bf16.mxu0 %v4894
        %6070 = vmatpush2.bf16.msra.mxu0 %v4893
        %6071 = vmatprep.subr.bf16.mxu0 %v4887
        %6072 = vmatpush2.bf16.msra.mxu0 %v4886
        %6073 = vmatprep.subr.bf16.mxu0 %v4880
        %6074 = vmatpush2.bf16.msra.mxu0 %v4879
        %6075 = vmatprep.mubr.bf16.mxu0 %v2855
        %6076 = vmatmul.mubr.bf16.gmra.mxu0 %v2854
        %v6077 = vpop.f32.mrf.mxu0
        %v6078 = vadd.f32 %v3395, %v6077
        %v6079 = vpop.f32.mrf.mxu0
        %v6080 = vadd.f32 %v3399, %v6079
        %v6081 = vpop.f32.mrf.mxu0
        %v6082 = vpop.f32.mrf.mxu0
        %6083 = vdwg.mxu0
        %6084 = vmatprep.subr.bf16.mxu0 %v4985
        %6085 = vmatpush1.bf16.msra.mxu0 %v4984
        %6086 = vmatprep.subr.bf16.mxu0 %v4978
        %6087 = vmatpush1.bf16.msra.mxu0 %v4977
        %6088 = vmatprep.subr.bf16.mxu0 %v4971
        %6089 = vmatpush1.bf16.msra.mxu0 %v4970
        %6090 = vmatprep.subr.bf16.mxu0 %v4964
        %6091 = vmatpush1.bf16.msra.mxu0 %v4963
        %6092 = vmatprep.subr.bf16.mxu0 %v4957
        %6093 = vmatpush1.bf16.msra.mxu0 %v4956
        %6094 = vmatprep.subr.bf16.mxu0 %v4950
        %6095 = vmatpush1.bf16.msra.mxu0 %v4949
        %6096 = vmatprep.subr.bf16.mxu0 %v4943
        %6097 = vmatpush1.bf16.msra.mxu0 %v4942
        %6098 = vmatprep.subr.bf16.mxu0 %v4936
        %6099 = vmatpush1.bf16.msra.mxu0 %v4935
        %6100 = vmatprep.subr.bf16.mxu0 %v5041
        %6101 = vmatpush2.bf16.msra.mxu0 %v5040
        %6102 = vmatprep.subr.bf16.mxu0 %v5034
        %6103 = vmatpush2.bf16.msra.mxu0 %v5033
        %6104 = vmatprep.subr.bf16.mxu0 %v5027
        %6105 = vmatpush2.bf16.msra.mxu0 %v5026
        %6106 = vmatprep.subr.bf16.mxu0 %v5020
        %6107 = vmatpush2.bf16.msra.mxu0 %v5019
        %6108 = vmatprep.subr.bf16.mxu0 %v5013
        %6109 = vmatpush2.bf16.msra.mxu0 %v5012
        %6110 = vmatprep.subr.bf16.mxu0 %v5006
        %6111 = vmatpush2.bf16.msra.mxu0 %v5005
        %6112 = vmatprep.subr.bf16.mxu0 %v4999
        %6113 = vmatpush2.bf16.msra.mxu0 %v4998
        %6114 = vmatprep.subr.bf16.mxu0 %v4992
        %6115 = vmatpush2.bf16.msra.mxu0 %v4991
        %6116 = vmatprep.mubr.bf16.mxu0 %v2857
        %6117 = vmatmul.mubr.bf16.gmra.mxu0 %v2856
        %v6118 = vpop.f32.mrf.mxu0
        %v6119 = vadd.f32 %v6078, %v6118
        %v6120 = vpop.f32.mrf.mxu0
        %v6121 = vadd.f32 %v6080, %v6120
        %v6122 = vpop.f32.mrf.mxu0
        %v6123 = vpop.f32.mrf.mxu0
        %6124 = vdwg.mxu0
        %6125 = vmatprep.subr.bf16.mxu0 %v5097
        %6126 = vmatpush1.bf16.msra.mxu0 %v5096
        %6127 = vmatprep.subr.bf16.mxu0 %v5090
        %6128 = vmatpush1.bf16.msra.mxu0 %v5089
        %6129 = vmatprep.subr.bf16.mxu0 %v5083
        %6130 = vmatpush1.bf16.msra.mxu0 %v5082
        %6131 = vmatprep.subr.bf16.mxu0 %v5076
        %6132 = vmatpush1.bf16.msra.mxu0 %v5075
        %6133 = vmatprep.subr.bf16.mxu0 %v5069
        %6134 = vmatpush1.bf16.msra.mxu0 %v5068
        %6135 = vmatprep.subr.bf16.mxu0 %v5062
        %6136 = vmatpush1.bf16.msra.mxu0 %v5061
        %6137 = vmatprep.subr.bf16.mxu0 %v5055
        %6138 = vmatpush1.bf16.msra.mxu0 %v5054
        %6139 = vmatprep.subr.bf16.mxu0 %v5048
        %6140 = vmatpush1.bf16.msra.mxu0 %v5047
        %6141 = vmatprep.subr.bf16.mxu0 %v5153
        %6142 = vmatpush2.bf16.msra.mxu0 %v5152
        %6143 = vmatprep.subr.bf16.mxu0 %v5146
        %6144 = vmatpush2.bf16.msra.mxu0 %v5145
        %6145 = vmatprep.subr.bf16.mxu0 %v5139
        %6146 = vmatpush2.bf16.msra.mxu0 %v5138
        %6147 = vmatprep.subr.bf16.mxu0 %v5132
        %6148 = vmatpush2.bf16.msra.mxu0 %v5131
        %6149 = vmatprep.subr.bf16.mxu0 %v5125
        %6150 = vmatpush2.bf16.msra.mxu0 %v5124
        %6151 = vmatprep.subr.bf16.mxu0 %v5118
        %6152 = vmatpush2.bf16.msra.mxu0 %v5117
        %6153 = vmatprep.subr.bf16.mxu0 %v5111
        %6154 = vmatpush2.bf16.msra.mxu0 %v5110
        %6155 = vmatprep.subr.bf16.mxu0 %v5104
        %6156 = vmatpush2.bf16.msra.mxu0 %v5103
        %6157 = vmatprep.mubr.bf16.mxu0 %v2859
        %6158 = vmatmul.mubr.bf16.gmra.mxu0 %v2858
        %v6159 = vpop.f32.mrf.mxu0
        %v6160 = vadd.f32 %v6119, %v6159
        %v6161 = vpop.f32.mrf.mxu0
        %v6162 = vadd.f32 %v6121, %v6161
        %v6163 = vpop.f32.mrf.mxu0
        %v6164 = vpop.f32.mrf.mxu0
        %6165 = vdwg.mxu0
        %6166 = vmatprep.subr.bf16.mxu0 %v5209
        %6167 = vmatpush1.bf16.msra.mxu0 %v5208
        %6168 = vmatprep.subr.bf16.mxu0 %v5202
        %6169 = vmatpush1.bf16.msra.mxu0 %v5201
        %6170 = vmatprep.subr.bf16.mxu0 %v5195
        %6171 = vmatpush1.bf16.msra.mxu0 %v5194
        %6172 = vmatprep.subr.bf16.mxu0 %v5188
        %6173 = vmatpush1.bf16.msra.mxu0 %v5187
        %6174 = vmatprep.subr.bf16.mxu0 %v5181
        %6175 = vmatpush1.bf16.msra.mxu0 %v5180
        %6176 = vmatprep.subr.bf16.mxu0 %v5174
        %6177 = vmatpush1.bf16.msra.mxu0 %v5173
        %6178 = vmatprep.subr.bf16.mxu0 %v5167
        %6179 = vmatpush1.bf16.msra.mxu0 %v5166
        %6180 = vmatprep.subr.bf16.mxu0 %v5160
        %6181 = vmatpush1.bf16.msra.mxu0 %v5159
        %6182 = vmatprep.subr.bf16.mxu0 %v5265
        %6183 = vmatpush2.bf16.msra.mxu0 %v5264
        %6184 = vmatprep.subr.bf16.mxu0 %v5258
        %6185 = vmatpush2.bf16.msra.mxu0 %v5257
        %6186 = vmatprep.subr.bf16.mxu0 %v5251
        %6187 = vmatpush2.bf16.msra.mxu0 %v5250
        %6188 = vmatprep.subr.bf16.mxu0 %v5244
        %6189 = vmatpush2.bf16.msra.mxu0 %v5243
        %6190 = vmatprep.subr.bf16.mxu0 %v5237
        %6191 = vmatpush2.bf16.msra.mxu0 %v5236
        %6192 = vmatprep.subr.bf16.mxu0 %v5230
        %6193 = vmatpush2.bf16.msra.mxu0 %v5229
        %6194 = vmatprep.subr.bf16.mxu0 %v5223
        %6195 = vmatpush2.bf16.msra.mxu0 %v5222
        %6196 = vmatprep.subr.bf16.mxu0 %v5216
        %6197 = vmatpush2.bf16.msra.mxu0 %v5215
        %6198 = vmatprep.mubr.bf16.mxu0 %v2861
        %6199 = vmatmul.mubr.bf16.gmra.mxu0 %v2860
        %v6200 = vpop.f32.mrf.mxu0
        %v6201 = vadd.f32 %v6160, %v6200
        %v6202 = vpop.f32.mrf.mxu0
        %v6203 = vadd.f32 %v6162, %v6202
        %v6204 = vpop.f32.mrf.mxu0
        %v6205 = vpop.f32.mrf.mxu0
        %6206 = vdwg.mxu0
        %6207 = vmatprep.subr.bf16.mxu0 0
        %6208 = vmatpush1.bf16.msra.mxu0 %v4874
        %6209 = vmatprep.subr.bf16.mxu0 0
        %6210 = vmatpush1.bf16.msra.mxu0 %v4867
        %6211 = vmatprep.subr.bf16.mxu0 0
        %6212 = vmatpush1.bf16.msra.mxu0 %v4860
        %6213 = vmatprep.subr.bf16.mxu0 0
        %6214 = vmatpush1.bf16.msra.mxu0 %v4853
        %6215 = vmatprep.subr.bf16.mxu0 0
        %6216 = vmatpush1.bf16.msra.mxu0 %v4846
        %6217 = vmatprep.subr.bf16.mxu0 0
        %6218 = vmatpush1.bf16.msra.mxu0 %v4839
        %6219 = vmatprep.subr.bf16.mxu0 0
        %6220 = vmatpush1.bf16.msra.mxu0 %v4832
        %6221 = vmatprep.subr.bf16.mxu0 0
        %6222 = vmatpush1.bf16.msra.mxu0 %v4825
        %6223 = vmatprep.subr.bf16.mxu0 0
        %6224 = vmatpush2.bf16.msra.mxu0 %v4930
        %6225 = vmatprep.subr.bf16.mxu0 0
        %6226 = vmatpush2.bf16.msra.mxu0 %v4923
        %6227 = vmatprep.subr.bf16.mxu0 0
        %6228 = vmatpush2.bf16.msra.mxu0 %v4916
        %6229 = vmatprep.subr.bf16.mxu0 0
        %6230 = vmatpush2.bf16.msra.mxu0 %v4909
        %6231 = vmatprep.subr.bf16.mxu0 0
        %6232 = vmatpush2.bf16.msra.mxu0 %v4902
        %6233 = vmatprep.subr.bf16.mxu0 0
        %6234 = vmatpush2.bf16.msra.mxu0 %v4895
        %6235 = vmatprep.subr.bf16.mxu0 0
        %6236 = vmatpush2.bf16.msra.mxu0 %v4888
        %6237 = vmatprep.subr.bf16.mxu0 0
        %6238 = vmatpush2.bf16.msra.mxu0 %v4881
        %6239 = vmatprep.mubr.bf16.mxu0 %v2855
        %6240 = vmatmul.mubr.bf16.gmra.mxu0 %v2854
        %v6241 = vpop.f32.mrf.mxu0
        %v6242 = vadd.f32 %v3403, %v6241
        %v6243 = vpop.f32.mrf.mxu0
        %v6244 = vpop.f32.mrf.mxu0
        %v6245 = vpop.f32.mrf.mxu0
        %6246 = vdwg.mxu0
        %6247 = vmatprep.subr.bf16.mxu0 0
        %6248 = vmatpush1.bf16.msra.mxu0 %v4986
        %6249 = vmatprep.subr.bf16.mxu0 0
        %6250 = vmatpush1.bf16.msra.mxu0 %v4979
        %6251 = vmatprep.subr.bf16.mxu0 0
        %6252 = vmatpush1.bf16.msra.mxu0 %v4972
        %6253 = vmatprep.subr.bf16.mxu0 0
        %6254 = vmatpush1.bf16.msra.mxu0 %v4965
        %6255 = vmatprep.subr.bf16.mxu0 0
        %6256 = vmatpush1.bf16.msra.mxu0 %v4958
        %6257 = vmatprep.subr.bf16.mxu0 0
        %6258 = vmatpush1.bf16.msra.mxu0 %v4951
        %6259 = vmatprep.subr.bf16.mxu0 0
        %6260 = vmatpush1.bf16.msra.mxu0 %v4944
        %6261 = vmatprep.subr.bf16.mxu0 0
        %6262 = vmatpush1.bf16.msra.mxu0 %v4937
        %6263 = vmatprep.subr.bf16.mxu0 0
        %6264 = vmatpush2.bf16.msra.mxu0 %v5042
        %6265 = vmatprep.subr.bf16.mxu0 0
        %6266 = vmatpush2.bf16.msra.mxu0 %v5035
        %6267 = vmatprep.subr.bf16.mxu0 0
        %6268 = vmatpush2.bf16.msra.mxu0 %v5028
        %6269 = vmatprep.subr.bf16.mxu0 0
        %6270 = vmatpush2.bf16.msra.mxu0 %v5021
        %6271 = vmatprep.subr.bf16.mxu0 0
        %6272 = vmatpush2.bf16.msra.mxu0 %v5014
        %6273 = vmatprep.subr.bf16.mxu0 0
        %6274 = vmatpush2.bf16.msra.mxu0 %v5007
        %6275 = vmatprep.subr.bf16.mxu0 0
        %6276 = vmatpush2.bf16.msra.mxu0 %v5000
        %6277 = vmatprep.subr.bf16.mxu0 0
        %6278 = vmatpush2.bf16.msra.mxu0 %v4993
        %6279 = vmatprep.mubr.bf16.mxu0 %v2857
        %6280 = vmatmul.mubr.bf16.gmra.mxu0 %v2856
        %v6281 = vpop.f32.mrf.mxu0
        %v6282 = vadd.f32 %v6242, %v6281
        %v6283 = vpop.f32.mrf.mxu0
        %v6284 = vpop.f32.mrf.mxu0
        %v6285 = vpop.f32.mrf.mxu0
        %6286 = vdwg.mxu0
        %6287 = vmatprep.subr.bf16.mxu0 0
        %6288 = vmatpush1.bf16.msra.mxu0 %v5098
        %6289 = vmatprep.subr.bf16.mxu0 0
        %6290 = vmatpush1.bf16.msra.mxu0 %v5091
        %6291 = vmatprep.subr.bf16.mxu0 0
        %6292 = vmatpush1.bf16.msra.mxu0 %v5084
        %6293 = vmatprep.subr.bf16.mxu0 0
        %6294 = vmatpush1.bf16.msra.mxu0 %v5077
        %6295 = vmatprep.subr.bf16.mxu0 0
        %6296 = vmatpush1.bf16.msra.mxu0 %v5070
        %6297 = vmatprep.subr.bf16.mxu0 0
        %6298 = vmatpush1.bf16.msra.mxu0 %v5063
        %6299 = vmatprep.subr.bf16.mxu0 0
        %6300 = vmatpush1.bf16.msra.mxu0 %v5056
        %6301 = vmatprep.subr.bf16.mxu0 0
        %6302 = vmatpush1.bf16.msra.mxu0 %v5049
        %6303 = vmatprep.subr.bf16.mxu0 0
        %6304 = vmatpush2.bf16.msra.mxu0 %v5154
        %6305 = vmatprep.subr.bf16.mxu0 0
        %6306 = vmatpush2.bf16.msra.mxu0 %v5147
        %6307 = vmatprep.subr.bf16.mxu0 0
        %6308 = vmatpush2.bf16.msra.mxu0 %v5140
        %6309 = vmatprep.subr.bf16.mxu0 0
        %6310 = vmatpush2.bf16.msra.mxu0 %v5133
        %6311 = vmatprep.subr.bf16.mxu0 0
        %6312 = vmatpush2.bf16.msra.mxu0 %v5126
        %6313 = vmatprep.subr.bf16.mxu0 0
        %6314 = vmatpush2.bf16.msra.mxu0 %v5119
        %6315 = vmatprep.subr.bf16.mxu0 0
        %6316 = vmatpush2.bf16.msra.mxu0 %v5112
        %6317 = vmatprep.subr.bf16.mxu0 0
        %6318 = vmatpush2.bf16.msra.mxu0 %v5105
        %6319 = vmatprep.mubr.bf16.mxu0 %v2859
        %6320 = vmatmul.mubr.bf16.gmra.mxu0 %v2858
        %v6321 = vpop.f32.mrf.mxu0
        %v6322 = vadd.f32 %v6282, %v6321
        %v6323 = vpop.f32.mrf.mxu0
        %v6324 = vpop.f32.mrf.mxu0
        %v6325 = vpop.f32.mrf.mxu0
        %6326 = vdwg.mxu0
        %6327 = vmatprep.subr.bf16.mxu0 0
        %6328 = vmatpush1.bf16.msra.mxu0 %v5210
        %6329 = vmatprep.subr.bf16.mxu0 0
        %6330 = vmatpush1.bf16.msra.mxu0 %v5203
        %6331 = vmatprep.subr.bf16.mxu0 0
        %6332 = vmatpush1.bf16.msra.mxu0 %v5196
        %6333 = vmatprep.subr.bf16.mxu0 0
        %6334 = vmatpush1.bf16.msra.mxu0 %v5189
        %6335 = vmatprep.subr.bf16.mxu0 0
        %6336 = vmatpush1.bf16.msra.mxu0 %v5182
        %6337 = vmatprep.subr.bf16.mxu0 0
        %6338 = vmatpush1.bf16.msra.mxu0 %v5175
        %6339 = vmatprep.subr.bf16.mxu0 0
        %6340 = vmatpush1.bf16.msra.mxu0 %v5168
        %6341 = vmatprep.subr.bf16.mxu0 0
        %6342 = vmatpush1.bf16.msra.mxu0 %v5161
        %6343 = vmatprep.subr.bf16.mxu0 0
        %6344 = vmatpush2.bf16.msra.mxu0 %v5266
        %6345 = vmatprep.subr.bf16.mxu0 0
        %6346 = vmatpush2.bf16.msra.mxu0 %v5259
        %6347 = vmatprep.subr.bf16.mxu0 0
        %6348 = vmatpush2.bf16.msra.mxu0 %v5252
        %6349 = vmatprep.subr.bf16.mxu0 0
        %6350 = vmatpush2.bf16.msra.mxu0 %v5245
        %6351 = vmatprep.subr.bf16.mxu0 0
        %6352 = vmatpush2.bf16.msra.mxu0 %v5238
        %6353 = vmatprep.subr.bf16.mxu0 0
        %6354 = vmatpush2.bf16.msra.mxu0 %v5231
        %6355 = vmatprep.subr.bf16.mxu0 0
        %6356 = vmatpush2.bf16.msra.mxu0 %v5224
        %6357 = vmatprep.subr.bf16.mxu0 0
        %6358 = vmatpush2.bf16.msra.mxu0 %v5217
        %6359 = vmatprep.mubr.bf16.mxu0 %v2861
        %6360 = vmatmul.mubr.bf16.gmra.mxu0 %v2860
        %v6361 = vpop.f32.mrf.mxu0
        %v6362 = vadd.f32 %v6322, %v6361
        %v6363 = vpop.f32.mrf.mxu0
        %v6364 = vpop.f32.mrf.mxu0
        %v6365 = vpop.f32.mrf.mxu0
        %6366 = vdwg.mxu0
        %v6367 = vtanh.pop %v5873
        %v6368 = vtanh.pop %v5875
        %v6369 = vtanh.pop %v6037
        %v6370 = vtanh.pop %v6039
        %v6371 = vtanh.pop %v6201
        %v6372 = vtanh.pop %v6203
        %v6373 = vtanh.pop %v6362
        %6374 = vst [vmem:[%s323] sm:$0xff] %v6367
        %6375 = vst [vmem:[%s323 + $0x8] sm:$0xff] %v6368
        %6376 = vst [vmem:[%s323 + $0x10] sm:$0xff] %v6369
        %6377 = vst [vmem:[%s323 + $0x18] sm:$0xff] %v6370
        %6378 = vst [vmem:[%s323 + $0x20] sm:$0xff] %v6371
        %6379 = vst [vmem:[%s323 + $0x28] sm:$0xff] %v6372
        %vm6380 = vcmask 130048
        %6381 = vst.msk [vmem:[%s323 + $0x30] sm:$0xff] %vm6380, %v6373
        %s6382 = sand.u32 %s225, 1
        %s6383 = scalar_lea.sflag [#allocation3], %s6382
        %s6384 = sand.u32 %s225, 1
        %s6385 = smul.addr %s6384, 56
        %s6386 = scalar_lea.vmem [#allocation2], %s6385
        // Predicated region
        $region57: #{tpu_custom_call.1} parent=55 // pred_check
          %p6387 = pneg %p235
        $region58: #{tpu_custom_call.1} parent=55 // pred_check_branch
          %6389 = sbr.rel (%p6387) target = $region60
        $region59: #{tpu_custom_call.1} parent=55 // pred_region
          %s6391 = ssub.s32 896, 896
          %6392 = vsyncadd %s6383, %s6391
          %s6393 = smul.addr %s23, 7
          %s6394 = smul.addr %s6393, 128
          %s6395 = scalar_lea.hbm %s9, %s6394
          %s6397 = sshll.u32 %s6386, 4
          %s6398 = int_to_ptr.vmem [resolvable:$true] %s6397
          %6400 = dma.vmem_to_hbm [thread:$0]  %s6398, 896, %s6395, %s6383
        $region60: #{tpu_custom_call.1} parent=55 // pred_fallthru
          _
      $region56: #{tpu_custom_call.1} parent=5 // pred_fallthru
        _
      %p6401 = scmp.le.s32.totalorder 2, %s18
      // Predicated region
      $region61: #{tpu_custom_call.1} parent=5 // pred_check
        %p6402 = pneg %p6401
      $region62: #{tpu_custom_call.1} parent=5 // pred_check_branch
        %6404 = sbr.rel (%p6402) target = $region64
      $region63: #{tpu_custom_call.1} parent=5 // pred_region
        %s6405 = ssub.s32 %s18, 2
        // Predicated region
        $region65: #{tpu_custom_call.1} parent=63 // pred_check
          %p6406 = pneg %p241
        $region66: #{tpu_custom_call.1} parent=63 // pred_check_branch
          %6408 = sbr.rel (%p6406) target = $region68
        $region67: #{tpu_custom_call.1} parent=63 // pred_region
          %s6409 = sand.u32 %s226, 1
          %s6410 = scalar_lea.sflag [#allocation3], %s6409
          %s6411 = sand.u32 %s226, 1
          %s6412 = smul.addr %s6411, 56
          %s6413 = scalar_lea.vmem [#allocation2], %s6412
          %6414 = dma.done %s6410, 896
        $region68: #{tpu_custom_call.1} parent=63 // pred_fallthru
          _
      $region64: #{tpu_custom_call.1} parent=5 // pred_fallthru
        _
    $region6: #{tpu_custom_call.1} parent=1 // loop_footer
      %s22 = sadd.s32 1, %s18
    $region7: #{tpu_custom_call.1} parent=1 // loop_footer_branch
      %17 = sbr.rel target = $region3
    $region8: #{tpu_custom_call.1} parent=1 // loop_exit
      _
    %6415 = vsyncpa [#allocation3], 1
    %s6416 = scalar_lea.sflag [#allocation3], 1
    %6417 = vsyncpa %s6416, 1

</llo_original>
